<compile_context>
chip_gen: v5e
topology: v5e:2x2
jax: 0.10.0
libtpu: 0.0.40
codegen_flags: <defaults>
</compile_context>

<pallas_src>
import functools

import numpy as np

import jax
import jax.numpy as jnp
from jax import lax
from jax.experimental import pallas as pl
from jax.experimental.pallas import tpu as pltpu


# ----------------------------------------------------------------------------
# Single fused forward kernel
# ----------------------------------------------------------------------------
def _net_fused_kernel(x_ref,                      # (N, 28, 28)
                      w1b_ref, b1_ref,            # (5, 28, 240), (1, 240)
                      p1r_ref, p1c_ref,           # (2, 12, 24), (2, 240, 120)
                      w2b_ref, b2_ref,            # (5, 120, 160), (1, 160)
                      p2r_ref, p2c_ref,           # (2, 4, 8),  (2, 160, 80)
                      l1w_ref, l1b_ref,           # (320, 160), (1, 160)
                      l2w_ref, l2b_ref,           # (160, 80),  (1, 80)
                      l3w_ref, l3b_ref,           # (80, 40),   (1, 40)
                      l4w_ref, l4b_ref,           # (40, 20),   (1, 20)
                      l5w_ref, l5b_ref,           # (20, 10),   (1, 10)
                      out_ref,                    # (N, 10)
                      *, batch):
    dot = functools.partial(jnp.dot, preferred_element_type=jnp.float32)

    z_rows = []
    for n in range(batch):
        xn = x_ref[n]                                                    # (28, 28)

        # ---- conv1 (1->10, k5): 5 banded matmuls; lanes = (co, ow1) ----
        acc1 = jnp.zeros((24, 240), jnp.float32)
        for ki in range(5):
            acc1 = acc1 + dot(xn[ki:ki + 24, :], w1b_ref[ki])
        acc1 = acc1 + b1_ref[...]                                        # (24, 240)

        # ---- maxpool(2) + relu (even/odd selector matmuls) ----
        r1 = jnp.maximum(dot(p1r_ref[0], acc1), dot(p1r_ref[1], acc1))   # (12, 240)
        pool1 = jnp.maximum(dot(r1, p1c_ref[0]), dot(r1, p1c_ref[1]))    # (12, 120)
        pool1 = jnp.maximum(pool1, 0.0)                                  # lanes (ci, ow1')

        # ---- conv2 (10->20, k5): 5 banded matmuls; lanes = (co, ow2) ----
        acc2 = jnp.zeros((8, 160), jnp.float32)
        for ki in range(5):
            acc2 = acc2 + dot(pool1[ki:ki + 8, :], w2b_ref[ki])
        acc2 = acc2 + b2_ref[...]                                        # (8, 160)

        # ---- maxpool(2) + relu ----
        r2 = jnp.maximum(dot(p2r_ref[0], acc2), dot(p2r_ref[1], acc2))   # (4, 160)
        pool2 = jnp.maximum(dot(r2, p2c_ref[0]), dot(r2, p2c_ref[1]))    # (4, 80)
        pool2 = jnp.maximum(pool2, 0.0)                                  # [h, co*4 + w]

        # ---- flatten: lane order (h, co, w); the packed l1 weight matches it ----
        z_rows.append(jnp.concatenate([pool2[h:h + 1, :] for h in range(4)], axis=1))

    z = jnp.concatenate(z_rows, axis=0)                                  # (N, 320)

    # ---- fully connected stack ----
    h = jnp.maximum(dot(z, l1w_ref[...]) + l1b_ref[...], 0.0)            # (N, 160)
    h = jnp.maximum(dot(h, l2w_ref[...]) + l2b_ref[...], 0.0)            # (N, 80)
    h = jnp.maximum(dot(h, l3w_ref[...]) + l3b_ref[...], 0.0)            # (N, 40)
    h = jnp.maximum(dot(h, l4w_ref[...]) + l4b_ref[...], 0.0)            # (N, 20)
    out_ref[...] = dot(h, l5w_ref[...]) + l5b_ref[...]                   # (N, 10)


_PACKED_KEYS = ("w1b", "b1", "p1r", "p1c", "w2b", "b2", "p2r", "p2c",
                "l1w", "l1b", "l2w", "l2b", "l3w", "l3b",
                "l4w", "l4b", "l5w", "l5b")


def make_forward(batch):
    """Build a jitted forward(x_nchw, packed) using one fused pallas_call."""
    kernel = functools.partial(_net_fused_kernel, batch=batch)
    call = pl.pallas_call(
        kernel,
        out_shape=jax.ShapeDtypeStruct((batch, 10), jnp.float32),
        in_specs=[pl.BlockSpec(memory_space=pltpu.MemorySpace.VMEM)]
                 * (1 + len(_PACKED_KEYS)),
        out_specs=pl.BlockSpec(memory_space=pltpu.MemorySpace.VMEM),
        cost_estimate=pl.CostEstimate(flops=12_000_000, transcendentals=0,
                                      bytes_accessed=1_300_000),
    )

    @jax.jit
    def forward(x_nchw, packed):
        x = x_nchw.reshape(batch, 28, 28)        # drop Cin=1 (free reshape)
        return call(x, *[packed[k] for k in _PACKED_KEYS])

    return forward


# ----------------------------------------------------------------------------
# One-time host-side parameter packing (no per-forward transposes)
# ----------------------------------------------------------------------------
def pack_params(p):
    f32 = np.float32
    w1 = np.asarray(p["conv1_w"], f32)            # (10, 1, 5, 5)
    b1 = np.asarray(p["conv1_b"], f32)            # (10,)
    w2 = np.asarray(p["conv2_w"], f32)            # (20, 10, 5, 5)
    b2 = np.asarray(p["conv2_b"], f32)            # (20,)

    # conv1 band matrices: sum_ki x[ki:ki+24, :] @ w1b[ki] == conv1 (lanes = co*24+ow).
    w1b = np.zeros((5, 28, 240), f32)
    for ki in range(5):
        for co in range(10):
            for ow in range(24):
                for kj in range(5):
                    w1b[ki, ow + kj, co * 24 + ow] = w1[co, 0, ki, kj]

    # conv2 band matrices: input lanes (ci*12 + ow1'), output lanes (co*8 + ow2).
    w2b = np.zeros((5, 120, 160), f32)
    for ki in range(5):
        for co in range(20):
            for ci in range(10):
                for ow2 in range(8):
                    for kj in range(5):
                        w2b[ki, ci * 12 + ow2 + kj, co * 8 + ow2] = w2[co, ci, ki, kj]

    # Even/odd 0/1 selector matrices for the two 2x2 max-pools.
    p1r = np.zeros((2, 12, 24), f32)
    p2r = np.zeros((2, 4, 8), f32)
    for par in range(2):
        for i in range(12):
            p1r[par, i, 2 * i + par] = 1.0
        for i in range(4):
            p2r[par, i, 2 * i + par] = 1.0
    p1c = np.zeros((2, 240, 120), f32)
    for par in range(2):
        for c in range(10):
            for j in range(12):
                p1c[par, c * 24 + 2 * j + par, c * 12 + j] = 1.0
    p2c = np.zeros((2, 160, 80), f32)
    for par in range(2):
        for c in range(20):
            for j in range(4):
                p2c[par, c * 8 + 2 * j + par, c * 4 + j] = 1.0

    # l1: permute input features from PyTorch NCHW flatten (co,h,w) to the kernel's
    # (h, co, w) lane order, and store as (in, out).
    l1 = np.asarray(p["l1_w"], f32).reshape(160, 20, 4, 4)      # [j, co, h, w]
    l1w = np.ascontiguousarray(l1.transpose(2, 1, 3, 0).reshape(320, 160))

    def row(b):
        return np.asarray(b, f32).reshape(1, -1)

    packed = {
        "w1b": w1b, "b1": np.repeat(b1, 24).reshape(1, 240),
        "p1r": p1r, "p1c": p1c,
        "w2b": w2b, "b2": np.repeat(b2, 8).reshape(1, 160),
        "p2r": p2r, "p2c": p2c,
        "l1w": l1w, "l1b": row(p["l1_b"]),
        "l2w": np.ascontiguousarray(np.asarray(p["l2_w"], f32).T), "l2b": row(p["l2_b"]),
        "l3w": np.ascontiguousarray(np.asarray(p["l3_w"], f32).T), "l3b": row(p["l3_b"]),
        "l4w": np.ascontiguousarray(np.asarray(p["l4_w"], f32).T), "l4b": row(p["l4_b"]),
        "l5w": np.ascontiguousarray(np.asarray(p["l5_w"], f32).T), "l5b": row(p["l5_b"]),
    }
    return {k: jnp.asarray(v) for k, v in packed.items()}


# ----------------------------------------------------------------------------
# Deterministic parameter init (shapes from Net.__init__; synthetic weights)
# ----------------------------------------------------------------------------
def init_params(key):
    def u(k, shape, fan_in):
        bound = 1.0 / jnp.sqrt(jnp.float32(fan_in))
        return jax.random.uniform(k, shape, jnp.float32, -bound, bound)

    ks = jax.random.split(key, 14)
    return {
        "conv1_w": u(ks[0], (10, 1, 5, 5), 25),   "conv1_b": u(ks[1], (10,), 25),
        "conv2_w": u(ks[2], (20, 10, 5, 5), 250), "conv2_b": u(ks[3], (20,), 250),
        "l1_w": u(ks[4], (160, 320), 320),        "l1_b": u(ks[5], (160,), 320),
        "l2_w": u(ks[6], (80, 160), 160),         "l2_b": u(ks[7], (80,), 160),
        "l3_w": u(ks[8], (40, 80), 80),           "l3_b": u(ks[9], (40,), 80),
        "l4_w": u(ks[10], (20, 40), 40),          "l4_b": u(ks[11], (20,), 40),
        "l5_w": u(ks[12], (10, 20), 20),          "l5_b": u(ks[13], (10,), 20),
    }


# ----------------------------------------------------------------------------
# Pure-JAX reference (numerical sanity check)
# ----------------------------------------------------------------------------
def reference_forward(x, p):
    dn = ("NCHW", "OIHW", "NCHW")
    y = lax.conv_general_dilated(x, p["conv1_w"], (1, 1), "VALID",
                                 dimension_numbers=dn)
    y = y + p["conv1_b"][None, :, None, None]
    y = lax.reduce_window(y, -jnp.inf, lax.max, (1, 1, 2, 2), (1, 1, 2, 2), "VALID")
    y = jnp.maximum(y, 0.0)
    y = lax.conv_general_dilated(y, p["conv2_w"], (1, 1), "VALID",
                                 dimension_numbers=dn)
    y = y + p["conv2_b"][None, :, None, None]
    y = lax.reduce_window(y, -jnp.inf, lax.max, (1, 1, 2, 2), (1, 1, 2, 2), "VALID")
    y = jnp.maximum(y, 0.0)
    h = y.reshape(x.shape[0], -1)
    h = jnp.maximum(h @ p["l1_w"].T + p["l1_b"], 0.0)
    h = jnp.maximum(h @ p["l2_w"].T + p["l2_b"], 0.0)
    h = jnp.maximum(h @ p["l3_w"].T + p["l3_b"], 0.0)
    h = jnp.maximum(h @ p["l4_w"].T + p["l4_b"], 0.0)
    return h @ p["l5_w"].T + p["l5_b"]


if __name__ == "__main__":
    key = jax.random.PRNGKey(0)
    x_key, p_key = jax.random.split(key)
    batch = 2
    x = jax.random.normal(x_key, (batch, 1, 28, 28), jnp.float32)   # NCHW
    params = init_params(p_key)
    packed = pack_params(params)           # one-time host-side packing

    forward = make_forward(batch)
    out = jax.block_until_ready(forward(x, packed))
    assert out.shape == (batch, 10) and out.dtype == jnp.float32

    ref = jax.block_until_ready(reference_forward(x, params))
    # loose tolerance: TPU f32 matmuls use bf16-pass MXU arithmetic
    assert jnp.allclose(out, ref, rtol=5e-2, atol=5e-2), "mismatch vs JAX reference"

    print("KERNEL_OK")
</pallas_src>

<mosaic_0001>
module attributes {stable_mosaic.version = 11 : i64} {
  func.func @_net_fused_kernel(%arg0: memref<2x28x28xf32, #tpu.memory_space<vmem>>, %arg1: memref<5x28x240xf32, #tpu.memory_space<vmem>>, %arg2: memref<1x240xf32, #tpu.memory_space<vmem>>, %arg3: memref<2x12x24xf32, #tpu.memory_space<vmem>>, %arg4: memref<2x240x120xf32, #tpu.memory_space<vmem>>, %arg5: memref<5x120x160xf32, #tpu.memory_space<vmem>>, %arg6: memref<1x160xf32, #tpu.memory_space<vmem>>, %arg7: memref<2x4x8xf32, #tpu.memory_space<vmem>>, %arg8: memref<2x160x80xf32, #tpu.memory_space<vmem>>, %arg9: memref<320x160xf32, #tpu.memory_space<vmem>>, %arg10: memref<1x160xf32, #tpu.memory_space<vmem>>, %arg11: memref<160x80xf32, #tpu.memory_space<vmem>>, %arg12: memref<1x80xf32, #tpu.memory_space<vmem>>, %arg13: memref<80x40xf32, #tpu.memory_space<vmem>>, %arg14: memref<1x40xf32, #tpu.memory_space<vmem>>, %arg15: memref<40x20xf32, #tpu.memory_space<vmem>>, %arg16: memref<1x20xf32, #tpu.memory_space<vmem>>, %arg17: memref<20x10xf32, #tpu.memory_space<vmem>>, %arg18: memref<1x10xf32, #tpu.memory_space<vmem>>, %arg19: memref<2x10xf32, #tpu.memory_space<vmem>>) attributes {dimension_semantics = [], scalar_prefetch = 0 : i64, scratch_operands = 0 : i64, tpu.core_type = #tpu.core_type<tc>} {
    %c0 = arith.constant 0 : index
    %c0_0 = arith.constant 0 : index
    %c0_1 = arith.constant 0 : index
    %0 = vector.load %arg0[%c0, %c0_0, %c0_1] : memref<2x28x28xf32, #tpu.memory_space<vmem>>, vector<1x28x28xf32>
    %1 = vector.shape_cast %0 : vector<1x28x28xf32> to vector<28x28xf32>
    %cst = arith.constant 0.000000e+00 : f32
    %2 = vector.broadcast %cst : f32 to vector<24x240xf32>
    %3 = vector.extract_strided_slice %1 {offsets = [0, 0], sizes = [24, 28], strides = [1, 1]} : vector<28x28xf32> to vector<24x28xf32>
    %c0_2 = arith.constant 0 : index
    %c0_3 = arith.constant 0 : index
    %c0_4 = arith.constant 0 : index
    %4 = vector.load %arg1[%c0_2, %c0_3, %c0_4] : memref<5x28x240xf32, #tpu.memory_space<vmem>>, vector<1x28x240xf32>
    %5 = vector.shape_cast %4 : vector<1x28x240xf32> to vector<28x240xf32>
    %cst_5 = arith.constant dense<0.000000e+00> : vector<24x240xf32>
    %6 = tpu.matmul %3, %5, %cst_5 {dimension_numbers = #tpu.dot_dimension_numbers<[1], [0], [0], [1], [0, 0, 1, 1], [], []>} : vector<24x28xf32>, vector<28x240xf32>, vector<24x240xf32> -> vector<24x240xf32>
    %7 = arith.addf %2, %6 : vector<24x240xf32>
    %8 = vector.extract_strided_slice %1 {offsets = [1, 0], sizes = [24, 28], strides = [1, 1]} : vector<28x28xf32> to vector<24x28xf32>
    %c1 = arith.constant 1 : index
    %c0_6 = arith.constant 0 : index
    %c0_7 = arith.constant 0 : index
    %9 = vector.load %arg1[%c1, %c0_6, %c0_7] : memref<5x28x240xf32, #tpu.memory_space<vmem>>, vector<1x28x240xf32>
    %10 = vector.shape_cast %9 : vector<1x28x240xf32> to vector<28x240xf32>
    %cst_8 = arith.constant dense<0.000000e+00> : vector<24x240xf32>
    %11 = tpu.matmul %8, %10, %cst_8 {dimension_numbers = #tpu.dot_dimension_numbers<[1], [0], [0], [1], [0, 0, 1, 1], [], []>} : vector<24x28xf32>, vector<28x240xf32>, vector<24x240xf32> -> vector<24x240xf32>
    %12 = arith.addf %7, %11 : vector<24x240xf32>
    %13 = vector.extract_strided_slice %1 {offsets = [2, 0], sizes = [24, 28], strides = [1, 1]} : vector<28x28xf32> to vector<24x28xf32>
    %c2 = arith.constant 2 : index
    %c0_9 = arith.constant 0 : index
    %c0_10 = arith.constant 0 : index
    %14 = vector.load %arg1[%c2, %c0_9, %c0_10] : memref<5x28x240xf32, #tpu.memory_space<vmem>>, vector<1x28x240xf32>
    %15 = vector.shape_cast %14 : vector<1x28x240xf32> to vector<28x240xf32>
    %cst_11 = arith.constant dense<0.000000e+00> : vector<24x240xf32>
    %16 = tpu.matmul %13, %15, %cst_11 {dimension_numbers = #tpu.dot_dimension_numbers<[1], [0], [0], [1], [0, 0, 1, 1], [], []>} : vector<24x28xf32>, vector<28x240xf32>, vector<24x240xf32> -> vector<24x240xf32>
    %17 = arith.addf %12, %16 : vector<24x240xf32>
    %18 = vector.extract_strided_slice %1 {offsets = [3, 0], sizes = [24, 28], strides = [1, 1]} : vector<28x28xf32> to vector<24x28xf32>
    %c3 = arith.constant 3 : index
    %c0_12 = arith.constant 0 : index
    %c0_13 = arith.constant 0 : index
    %19 = vector.load %arg1[%c3, %c0_12, %c0_13] : memref<5x28x240xf32, #tpu.memory_space<vmem>>, vector<1x28x240xf32>
    %20 = vector.shape_cast %19 : vector<1x28x240xf32> to vector<28x240xf32>
    %cst_14 = arith.constant dense<0.000000e+00> : vector<24x240xf32>
    %21 = tpu.matmul %18, %20, %cst_14 {dimension_numbers = #tpu.dot_dimension_numbers<[1], [0], [0], [1], [0, 0, 1, 1], [], []>} : vector<24x28xf32>, vector<28x240xf32>, vector<24x240xf32> -> vector<24x240xf32>
    %22 = arith.addf %17, %21 : vector<24x240xf32>
    %23 = vector.extract_strided_slice %1 {offsets = [4, 0], sizes = [24, 28], strides = [1, 1]} : vector<28x28xf32> to vector<24x28xf32>
    %c4 = arith.constant 4 : index
    %c0_15 = arith.constant 0 : index
    %c0_16 = arith.constant 0 : index
    %24 = vector.load %arg1[%c4, %c0_15, %c0_16] : memref<5x28x240xf32, #tpu.memory_space<vmem>>, vector<1x28x240xf32>
    %25 = vector.shape_cast %24 : vector<1x28x240xf32> to vector<28x240xf32>
    %cst_17 = arith.constant dense<0.000000e+00> : vector<24x240xf32>
    %26 = tpu.matmul %23, %25, %cst_17 {dimension_numbers = #tpu.dot_dimension_numbers<[1], [0], [0], [1], [0, 0, 1, 1], [], []>} : vector<24x28xf32>, vector<28x240xf32>, vector<24x240xf32> -> vector<24x240xf32>
    %27 = arith.addf %22, %26 : vector<24x240xf32>
    %c0_18 = arith.constant 0 : index
    %c0_19 = arith.constant 0 : index
    %28 = vector.load %arg2[%c0_18, %c0_19] : memref<1x240xf32, #tpu.memory_space<vmem>>, vector<1x240xf32>
    %29 = vector.broadcast %28 : vector<1x240xf32> to vector<24x240xf32>
    %30 = arith.addf %27, %29 : vector<24x240xf32>
    %c0_20 = arith.constant 0 : index
    %c0_21 = arith.constant 0 : index
    %c0_22 = arith.constant 0 : index
    %31 = vector.load %arg3[%c0_20, %c0_21, %c0_22] : memref<2x12x24xf32, #tpu.memory_space<vmem>>, vector<1x12x24xf32>
    %32 = vector.shape_cast %31 : vector<1x12x24xf32> to vector<12x24xf32>
    %cst_23 = arith.constant dense<0.000000e+00> : vector<12x240xf32>
    %33 = tpu.matmul %32, %30, %cst_23 {dimension_numbers = #tpu.dot_dimension_numbers<[1], [0], [0], [1], [0, 0, 1, 1], [], []>} : vector<12x24xf32>, vector<24x240xf32>, vector<12x240xf32> -> vector<12x240xf32>
    %c1_24 = arith.constant 1 : index
    %c0_25 = arith.constant 0 : index
    %c0_26 = arith.constant 0 : index
    %34 = vector.load %arg3[%c1_24, %c0_25, %c0_26] : memref<2x12x24xf32, #tpu.memory_space<vmem>>, vector<1x12x24xf32>
    %35 = vector.shape_cast %34 : vector<1x12x24xf32> to vector<12x24xf32>
    %cst_27 = arith.constant dense<0.000000e+00> : vector<12x240xf32>
    %36 = tpu.matmul %35, %30, %cst_27 {dimension_numbers = #tpu.dot_dimension_numbers<[1], [0], [0], [1], [0, 0, 1, 1], [], []>} : vector<12x24xf32>, vector<24x240xf32>, vector<12x240xf32> -> vector<12x240xf32>
    %37 = arith.maximumf %33, %36 : vector<12x240xf32>
    %c0_28 = arith.constant 0 : index
    %c0_29 = arith.constant 0 : index
    %c0_30 = arith.constant 0 : index
    %38 = vector.load %arg4[%c0_28, %c0_29, %c0_30] : memref<2x240x120xf32, #tpu.memory_space<vmem>>, vector<1x240x120xf32>
    %39 = vector.shape_cast %38 : vector<1x240x120xf32> to vector<240x120xf32>
    %cst_31 = arith.constant dense<0.000000e+00> : vector<12x120xf32>
    %40 = tpu.matmul %37, %39, %cst_31 {dimension_numbers = #tpu.dot_dimension_numbers<[1], [0], [0], [1], [0, 0, 1, 1], [], []>} : vector<12x240xf32>, vector<240x120xf32>, vector<12x120xf32> -> vector<12x120xf32>
    %c1_32 = arith.constant 1 : index
    %c0_33 = arith.constant 0 : index
    %c0_34 = arith.constant 0 : index
    %41 = vector.load %arg4[%c1_32, %c0_33, %c0_34] : memref<2x240x120xf32, #tpu.memory_space<vmem>>, vector<1x240x120xf32>
    %42 = vector.shape_cast %41 : vector<1x240x120xf32> to vector<240x120xf32>
    %cst_35 = arith.constant dense<0.000000e+00> : vector<12x120xf32>
    %43 = tpu.matmul %37, %42, %cst_35 {dimension_numbers = #tpu.dot_dimension_numbers<[1], [0], [0], [1], [0, 0, 1, 1], [], []>} : vector<12x240xf32>, vector<240x120xf32>, vector<12x120xf32> -> vector<12x120xf32>
    %44 = arith.maximumf %40, %43 : vector<12x120xf32>
    %cst_36 = arith.constant 0.000000e+00 : f32
    %45 = vector.broadcast %cst_36 : f32 to vector<12x120xf32>
    %46 = arith.maximumf %44, %45 : vector<12x120xf32>
    %cst_37 = arith.constant 0.000000e+00 : f32
    %47 = vector.broadcast %cst_37 : f32 to vector<8x160xf32>
    %48 = vector.extract_strided_slice %46 {offsets = [0, 0], sizes = [8, 120], strides = [1, 1]} : vector<12x120xf32> to vector<8x120xf32>
    %c0_38 = arith.constant 0 : index
    %c0_39 = arith.constant 0 : index
    %c0_40 = arith.constant 0 : index
    %49 = vector.load %arg5[%c0_38, %c0_39, %c0_40] : memref<5x120x160xf32, #tpu.memory_space<vmem>>, vector<1x120x160xf32>
    %50 = vector.shape_cast %49 : vector<1x120x160xf32> to vector<120x160xf32>
    %cst_41 = arith.constant dense<0.000000e+00> : vector<8x160xf32>
    %51 = tpu.matmul %48, %50, %cst_41 {dimension_numbers = #tpu.dot_dimension_numbers<[1], [0], [0], [1], [0, 0, 1, 1], [], []>} : vector<8x120xf32>, vector<120x160xf32>, vector<8x160xf32> -> vector<8x160xf32>
    %52 = arith.addf %47, %51 : vector<8x160xf32>
    %53 = vector.extract_strided_slice %46 {offsets = [1, 0], sizes = [8, 120], strides = [1, 1]} : vector<12x120xf32> to vector<8x120xf32>
    %c1_42 = arith.constant 1 : index
    %c0_43 = arith.constant 0 : index
    %c0_44 = arith.constant 0 : index
    %54 = vector.load %arg5[%c1_42, %c0_43, %c0_44] : memref<5x120x160xf32, #tpu.memory_space<vmem>>, vector<1x120x160xf32>
    %55 = vector.shape_cast %54 : vector<1x120x160xf32> to vector<120x160xf32>
    %cst_45 = arith.constant dense<0.000000e+00> : vector<8x160xf32>
    %56 = tpu.matmul %53, %55, %cst_45 {dimension_numbers = #tpu.dot_dimension_numbers<[1], [0], [0], [1], [0, 0, 1, 1], [], []>} : vector<8x120xf32>, vector<120x160xf32>, vector<8x160xf32> -> vector<8x160xf32>
    %57 = arith.addf %52, %56 : vector<8x160xf32>
    %58 = vector.extract_strided_slice %46 {offsets = [2, 0], sizes = [8, 120], strides = [1, 1]} : vector<12x120xf32> to vector<8x120xf32>
    %c2_46 = arith.constant 2 : index
    %c0_47 = arith.constant 0 : index
    %c0_48 = arith.constant 0 : index
    %59 = vector.load %arg5[%c2_46, %c0_47, %c0_48] : memref<5x120x160xf32, #tpu.memory_space<vmem>>, vector<1x120x160xf32>
    %60 = vector.shape_cast %59 : vector<1x120x160xf32> to vector<120x160xf32>
    %cst_49 = arith.constant dense<0.000000e+00> : vector<8x160xf32>
    %61 = tpu.matmul %58, %60, %cst_49 {dimension_numbers = #tpu.dot_dimension_numbers<[1], [0], [0], [1], [0, 0, 1, 1], [], []>} : vector<8x120xf32>, vector<120x160xf32>, vector<8x160xf32> -> vector<8x160xf32>
    %62 = arith.addf %57, %61 : vector<8x160xf32>
    %63 = vector.extract_strided_slice %46 {offsets = [3, 0], sizes = [8, 120], strides = [1, 1]} : vector<12x120xf32> to vector<8x120xf32>
    %c3_50 = arith.constant 3 : index
    %c0_51 = arith.constant 0 : index
    %c0_52 = arith.constant 0 : index
    %64 = vector.load %arg5[%c3_50, %c0_51, %c0_52] : memref<5x120x160xf32, #tpu.memory_space<vmem>>, vector<1x120x160xf32>
    %65 = vector.shape_cast %64 : vector<1x120x160xf32> to vector<120x160xf32>
    %cst_53 = arith.constant dense<0.000000e+00> : vector<8x160xf32>
    %66 = tpu.matmul %63, %65, %cst_53 {dimension_numbers = #tpu.dot_dimension_numbers<[1], [0], [0], [1], [0, 0, 1, 1], [], []>} : vector<8x120xf32>, vector<120x160xf32>, vector<8x160xf32> -> vector<8x160xf32>
    %67 = arith.addf %62, %66 : vector<8x160xf32>
    %68 = vector.extract_strided_slice %46 {offsets = [4, 0], sizes = [8, 120], strides = [1, 1]} : vector<12x120xf32> to vector<8x120xf32>
    %c4_54 = arith.constant 4 : index
    %c0_55 = arith.constant 0 : index
    %c0_56 = arith.constant 0 : index
    %69 = vector.load %arg5[%c4_54, %c0_55, %c0_56] : memref<5x120x160xf32, #tpu.memory_space<vmem>>, vector<1x120x160xf32>
    %70 = vector.shape_cast %69 : vector<1x120x160xf32> to vector<120x160xf32>
    %cst_57 = arith.constant dense<0.000000e+00> : vector<8x160xf32>
    %71 = tpu.matmul %68, %70, %cst_57 {dimension_numbers = #tpu.dot_dimension_numbers<[1], [0], [0], [1], [0, 0, 1, 1], [], []>} : vector<8x120xf32>, vector<120x160xf32>, vector<8x160xf32> -> vector<8x160xf32>
    %72 = arith.addf %67, %71 : vector<8x160xf32>
    %c0_58 = arith.constant 0 : index
    %c0_59 = arith.constant 0 : index
    %73 = vector.load %arg6[%c0_58, %c0_59] : memref<1x160xf32, #tpu.memory_space<vmem>>, vector<1x160xf32>
    %74 = vector.broadcast %73 : vector<1x160xf32> to vector<8x160xf32>
    %75 = arith.addf %72, %74 : vector<8x160xf32>
    %c0_60 = arith.constant 0 : index
    %c0_61 = arith.constant 0 : index
    %c0_62 = arith.constant 0 : index
    %76 = vector.load %arg7[%c0_60, %c0_61, %c0_62] : memref<2x4x8xf32, #tpu.memory_space<vmem>>, vector<1x4x8xf32>
    %77 = vector.shape_cast %76 : vector<1x4x8xf32> to vector<4x8xf32>
    %cst_63 = arith.constant dense<0.000000e+00> : vector<4x160xf32>
    %78 = tpu.matmul %77, %75, %cst_63 {dimension_numbers = #tpu.dot_dimension_numbers<[1], [0], [0], [1], [0, 0, 1, 1], [], []>} : vector<4x8xf32>, vector<8x160xf32>, vector<4x160xf32> -> vector<4x160xf32>
    %c1_64 = arith.constant 1 : index
    %c0_65 = arith.constant 0 : index
    %c0_66 = arith.constant 0 : index
    %79 = vector.load %arg7[%c1_64, %c0_65, %c0_66] : memref<2x4x8xf32, #tpu.memory_space<vmem>>, vector<1x4x8xf32>
    %80 = vector.shape_cast %79 : vector<1x4x8xf32> to vector<4x8xf32>
    %cst_67 = arith.constant dense<0.000000e+00> : vector<4x160xf32>
    %81 = tpu.matmul %80, %75, %cst_67 {dimension_numbers = #tpu.dot_dimension_numbers<[1], [0], [0], [1], [0, 0, 1, 1], [], []>} : vector<4x8xf32>, vector<8x160xf32>, vector<4x160xf32> -> vector<4x160xf32>
    %82 = arith.maximumf %78, %81 : vector<4x160xf32>
    %c0_68 = arith.constant 0 : index
    %c0_69 = arith.constant 0 : index
    %c0_70 = arith.constant 0 : index
    %83 = vector.load %arg8[%c0_68, %c0_69, %c0_70] : memref<2x160x80xf32, #tpu.memory_space<vmem>>, vector<1x160x80xf32>
    %84 = vector.shape_cast %83 : vector<1x160x80xf32> to vector<160x80xf32>
    %cst_71 = arith.constant dense<0.000000e+00> : vector<4x80xf32>
    %85 = tpu.matmul %82, %84, %cst_71 {dimension_numbers = #tpu.dot_dimension_numbers<[1], [0], [0], [1], [0, 0, 1, 1], [], []>} : vector<4x160xf32>, vector<160x80xf32>, vector<4x80xf32> -> vector<4x80xf32>
    %c1_72 = arith.constant 1 : index
    %c0_73 = arith.constant 0 : index
    %c0_74 = arith.constant 0 : index
    %86 = vector.load %arg8[%c1_72, %c0_73, %c0_74] : memref<2x160x80xf32, #tpu.memory_space<vmem>>, vector<1x160x80xf32>
    %87 = vector.shape_cast %86 : vector<1x160x80xf32> to vector<160x80xf32>
    %cst_75 = arith.constant dense<0.000000e+00> : vector<4x80xf32>
    %88 = tpu.matmul %82, %87, %cst_75 {dimension_numbers = #tpu.dot_dimension_numbers<[1], [0], [0], [1], [0, 0, 1, 1], [], []>} : vector<4x160xf32>, vector<160x80xf32>, vector<4x80xf32> -> vector<4x80xf32>
    %89 = arith.maximumf %85, %88 : vector<4x80xf32>
    %cst_76 = arith.constant 0.000000e+00 : f32
    %90 = vector.broadcast %cst_76 : f32 to vector<4x80xf32>
    %91 = arith.maximumf %89, %90 : vector<4x80xf32>
    %92 = vector.extract_strided_slice %91 {offsets = [0, 0], sizes = [1, 80], strides = [1, 1]} : vector<4x80xf32> to vector<1x80xf32>
    %93 = vector.extract_strided_slice %91 {offsets = [1, 0], sizes = [1, 80], strides = [1, 1]} : vector<4x80xf32> to vector<1x80xf32>
    %94 = vector.extract_strided_slice %91 {offsets = [2, 0], sizes = [1, 80], strides = [1, 1]} : vector<4x80xf32> to vector<1x80xf32>
    %95 = vector.extract_strided_slice %91 {offsets = [3, 0], sizes = [1, 80], strides = [1, 1]} : vector<4x80xf32> to vector<1x80xf32>
    %96 = tpu.concatenate %92, %93, %94, %95 in 1 : vector<1x80xf32>, vector<1x80xf32>, vector<1x80xf32>, vector<1x80xf32> -> vector<1x320xf32>
    %c1_77 = arith.constant 1 : index
    %c0_78 = arith.constant 0 : index
    %c0_79 = arith.constant 0 : index
    %97 = vector.load %arg0[%c1_77, %c0_78, %c0_79] : memref<2x28x28xf32, #tpu.memory_space<vmem>>, vector<1x28x28xf32>
    %98 = vector.shape_cast %97 : vector<1x28x28xf32> to vector<28x28xf32>
    %cst_80 = arith.constant 0.000000e+00 : f32
    %99 = vector.broadcast %cst_80 : f32 to vector<24x240xf32>
    %100 = vector.extract_strided_slice %98 {offsets = [0, 0], sizes = [24, 28], strides = [1, 1]} : vector<28x28xf32> to vector<24x28xf32>
    %c0_81 = arith.constant 0 : index
    %c0_82 = arith.constant 0 : index
    %c0_83 = arith.constant 0 : index
    %101 = vector.load %arg1[%c0_81, %c0_82, %c0_83] : memref<5x28x240xf32, #tpu.memory_space<vmem>>, vector<1x28x240xf32>
    %102 = vector.shape_cast %101 : vector<1x28x240xf32> to vector<28x240xf32>
    %cst_84 = arith.constant dense<0.000000e+00> : vector<24x240xf32>
    %103 = tpu.matmul %100, %102, %cst_84 {dimension_numbers = #tpu.dot_dimension_numbers<[1], [0], [0], [1], [0, 0, 1, 1], [], []>} : vector<24x28xf32>, vector<28x240xf32>, vector<24x240xf32> -> vector<24x240xf32>
    %104 = arith.addf %99, %103 : vector<24x240xf32>
    %105 = vector.extract_strided_slice %98 {offsets = [1, 0], sizes = [24, 28], strides = [1, 1]} : vector<28x28xf32> to vector<24x28xf32>
    %c1_85 = arith.constant 1 : index
    %c0_86 = arith.constant 0 : index
    %c0_87 = arith.constant 0 : index
    %106 = vector.load %arg1[%c1_85, %c0_86, %c0_87] : memref<5x28x240xf32, #tpu.memory_space<vmem>>, vector<1x28x240xf32>
    %107 = vector.shape_cast %106 : vector<1x28x240xf32> to vector<28x240xf32>
    %cst_88 = arith.constant dense<0.000000e+00> : vector<24x240xf32>
    %108 = tpu.matmul %105, %107, %cst_88 {dimension_numbers = #tpu.dot_dimension_numbers<[1], [0], [0], [1], [0, 0, 1, 1], [], []>} : vector<24x28xf32>, vector<28x240xf32>, vector<24x240xf32> -> vector<24x240xf32>
    %109 = arith.addf %104, %108 : vector<24x240xf32>
    %110 = vector.extract_strided_slice %98 {offsets = [2, 0], sizes = [24, 28], strides = [1, 1]} : vector<28x28xf32> to vector<24x28xf32>
    %c2_89 = arith.constant 2 : index
    %c0_90 = arith.constant 0 : index
    %c0_91 = arith.constant 0 : index
    %111 = vector.load %arg1[%c2_89, %c0_90, %c0_91] : memref<5x28x240xf32, #tpu.memory_space<vmem>>, vector<1x28x240xf32>
    %112 = vector.shape_cast %111 : vector<1x28x240xf32> to vector<28x240xf32>
    %cst_92 = arith.constant dense<0.000000e+00> : vector<24x240xf32>
    %113 = tpu.matmul %110, %112, %cst_92 {dimension_numbers = #tpu.dot_dimension_numbers<[1], [0], [0], [1], [0, 0, 1, 1], [], []>} : vector<24x28xf32>, vector<28x240xf32>, vector<24x240xf32> -> vector<24x240xf32>
    %114 = arith.addf %109, %113 : vector<24x240xf32>
    %115 = vector.extract_strided_slice %98 {offsets = [3, 0], sizes = [24, 28], strides = [1, 1]} : vector<28x28xf32> to vector<24x28xf32>
    %c3_93 = arith.constant 3 : index
    %c0_94 = arith.constant 0 : index
    %c0_95 = arith.constant 0 : index
    %116 = vector.load %arg1[%c3_93, %c0_94, %c0_95] : memref<5x28x240xf32, #tpu.memory_space<vmem>>, vector<1x28x240xf32>
    %117 = vector.shape_cast %116 : vector<1x28x240xf32> to vector<28x240xf32>
    %cst_96 = arith.constant dense<0.000000e+00> : vector<24x240xf32>
    %118 = tpu.matmul %115, %117, %cst_96 {dimension_numbers = #tpu.dot_dimension_numbers<[1], [0], [0], [1], [0, 0, 1, 1], [], []>} : vector<24x28xf32>, vector<28x240xf32>, vector<24x240xf32> -> vector<24x240xf32>
    %119 = arith.addf %114, %118 : vector<24x240xf32>
    %120 = vector.extract_strided_slice %98 {offsets = [4, 0], sizes = [24, 28], strides = [1, 1]} : vector<28x28xf32> to vector<24x28xf32>
    %c4_97 = arith.constant 4 : index
    %c0_98 = arith.constant 0 : index
    %c0_99 = arith.constant 0 : index
    %121 = vector.load %arg1[%c4_97, %c0_98, %c0_99] : memref<5x28x240xf32, #tpu.memory_space<vmem>>, vector<1x28x240xf32>
    %122 = vector.shape_cast %121 : vector<1x28x240xf32> to vector<28x240xf32>
    %cst_100 = arith.constant dense<0.000000e+00> : vector<24x240xf32>
    %123 = tpu.matmul %120, %122, %cst_100 {dimension_numbers = #tpu.dot_dimension_numbers<[1], [0], [0], [1], [0, 0, 1, 1], [], []>} : vector<24x28xf32>, vector<28x240xf32>, vector<24x240xf32> -> vector<24x240xf32>
    %124 = arith.addf %119, %123 : vector<24x240xf32>
    %c0_101 = arith.constant 0 : index
    %c0_102 = arith.constant 0 : index
    %125 = vector.load %arg2[%c0_101, %c0_102] : memref<1x240xf32, #tpu.memory_space<vmem>>, vector<1x240xf32>
    %126 = vector.broadcast %125 : vector<1x240xf32> to vector<24x240xf32>
    %127 = arith.addf %124, %126 : vector<24x240xf32>
    %c0_103 = arith.constant 0 : index
    %c0_104 = arith.constant 0 : index
    %c0_105 = arith.constant 0 : index
    %128 = vector.load %arg3[%c0_103, %c0_104, %c0_105] : memref<2x12x24xf32, #tpu.memory_space<vmem>>, vector<1x12x24xf32>
    %129 = vector.shape_cast %128 : vector<1x12x24xf32> to vector<12x24xf32>
    %cst_106 = arith.constant dense<0.000000e+00> : vector<12x240xf32>
    %130 = tpu.matmul %129, %127, %cst_106 {dimension_numbers = #tpu.dot_dimension_numbers<[1], [0], [0], [1], [0, 0, 1, 1], [], []>} : vector<12x24xf32>, vector<24x240xf32>, vector<12x240xf32> -> vector<12x240xf32>
    %c1_107 = arith.constant 1 : index
    %c0_108 = arith.constant 0 : index
    %c0_109 = arith.constant 0 : index
    %131 = vector.load %arg3[%c1_107, %c0_108, %c0_109] : memref<2x12x24xf32, #tpu.memory_space<vmem>>, vector<1x12x24xf32>
    %132 = vector.shape_cast %131 : vector<1x12x24xf32> to vector<12x24xf32>
    %cst_110 = arith.constant dense<0.000000e+00> : vector<12x240xf32>
    %133 = tpu.matmul %132, %127, %cst_110 {dimension_numbers = #tpu.dot_dimension_numbers<[1], [0], [0], [1], [0, 0, 1, 1], [], []>} : vector<12x24xf32>, vector<24x240xf32>, vector<12x240xf32> -> vector<12x240xf32>
    %134 = arith.maximumf %130, %133 : vector<12x240xf32>
    %c0_111 = arith.constant 0 : index
    %c0_112 = arith.constant 0 : index
    %c0_113 = arith.constant 0 : index
    %135 = vector.load %arg4[%c0_111, %c0_112, %c0_113] : memref<2x240x120xf32, #tpu.memory_space<vmem>>, vector<1x240x120xf32>
    %136 = vector.shape_cast %135 : vector<1x240x120xf32> to vector<240x120xf32>
    %cst_114 = arith.constant dense<0.000000e+00> : vector<12x120xf32>
    %137 = tpu.matmul %134, %136, %cst_114 {dimension_numbers = #tpu.dot_dimension_numbers<[1], [0], [0], [1], [0, 0, 1, 1], [], []>} : vector<12x240xf32>, vector<240x120xf32>, vector<12x120xf32> -> vector<12x120xf32>
    %c1_115 = arith.constant 1 : index
    %c0_116 = arith.constant 0 : index
    %c0_117 = arith.constant 0 : index
    %138 = vector.load %arg4[%c1_115, %c0_116, %c0_117] : memref<2x240x120xf32, #tpu.memory_space<vmem>>, vector<1x240x120xf32>
    %139 = vector.shape_cast %138 : vector<1x240x120xf32> to vector<240x120xf32>
    %cst_118 = arith.constant dense<0.000000e+00> : vector<12x120xf32>
    %140 = tpu.matmul %134, %139, %cst_118 {dimension_numbers = #tpu.dot_dimension_numbers<[1], [0], [0], [1], [0, 0, 1, 1], [], []>} : vector<12x240xf32>, vector<240x120xf32>, vector<12x120xf32> -> vector<12x120xf32>
    %141 = arith.maximumf %137, %140 : vector<12x120xf32>
    %cst_119 = arith.constant 0.000000e+00 : f32
    %142 = vector.broadcast %cst_119 : f32 to vector<12x120xf32>
    %143 = arith.maximumf %141, %142 : vector<12x120xf32>
    %cst_120 = arith.constant 0.000000e+00 : f32
    %144 = vector.broadcast %cst_120 : f32 to vector<8x160xf32>
    %145 = vector.extract_strided_slice %143 {offsets = [0, 0], sizes = [8, 120], strides = [1, 1]} : vector<12x120xf32> to vector<8x120xf32>
    %c0_121 = arith.constant 0 : index
    %c0_122 = arith.constant 0 : index
    %c0_123 = arith.constant 0 : index
    %146 = vector.load %arg5[%c0_121, %c0_122, %c0_123] : memref<5x120x160xf32, #tpu.memory_space<vmem>>, vector<1x120x160xf32>
    %147 = vector.shape_cast %146 : vector<1x120x160xf32> to vector<120x160xf32>
    %cst_124 = arith.constant dense<0.000000e+00> : vector<8x160xf32>
    %148 = tpu.matmul %145, %147, %cst_124 {dimension_numbers = #tpu.dot_dimension_numbers<[1], [0], [0], [1], [0, 0, 1, 1], [], []>} : vector<8x120xf32>, vector<120x160xf32>, vector<8x160xf32> -> vector<8x160xf32>
    %149 = arith.addf %144, %148 : vector<8x160xf32>
    %150 = vector.extract_strided_slice %143 {offsets = [1, 0], sizes = [8, 120], strides = [1, 1]} : vector<12x120xf32> to vector<8x120xf32>
    %c1_125 = arith.constant 1 : index
    %c0_126 = arith.constant 0 : index
    %c0_127 = arith.constant 0 : index
    %151 = vector.load %arg5[%c1_125, %c0_126, %c0_127] : memref<5x120x160xf32, #tpu.memory_space<vmem>>, vector<1x120x160xf32>
    %152 = vector.shape_cast %151 : vector<1x120x160xf32> to vector<120x160xf32>
    %cst_128 = arith.constant dense<0.000000e+00> : vector<8x160xf32>
    %153 = tpu.matmul %150, %152, %cst_128 {dimension_numbers = #tpu.dot_dimension_numbers<[1], [0], [0], [1], [0, 0, 1, 1], [], []>} : vector<8x120xf32>, vector<120x160xf32>, vector<8x160xf32> -> vector<8x160xf32>
    %154 = arith.addf %149, %153 : vector<8x160xf32>
    %155 = vector.extract_strided_slice %143 {offsets = [2, 0], sizes = [8, 120], strides = [1, 1]} : vector<12x120xf32> to vector<8x120xf32>
    %c2_129 = arith.constant 2 : index
    %c0_130 = arith.constant 0 : index
    %c0_131 = arith.constant 0 : index
    %156 = vector.load %arg5[%c2_129, %c0_130, %c0_131] : memref<5x120x160xf32, #tpu.memory_space<vmem>>, vector<1x120x160xf32>
    %157 = vector.shape_cast %156 : vector<1x120x160xf32> to vector<120x160xf32>
    %cst_132 = arith.constant dense<0.000000e+00> : vector<8x160xf32>
    %158 = tpu.matmul %155, %157, %cst_132 {dimension_numbers = #tpu.dot_dimension_numbers<[1], [0], [0], [1], [0, 0, 1, 1], [], []>} : vector<8x120xf32>, vector<120x160xf32>, vector<8x160xf32> -> vector<8x160xf32>
    %159 = arith.addf %154, %158 : vector<8x160xf32>
    %160 = vector.extract_strided_slice %143 {offsets = [3, 0], sizes = [8, 120], strides = [1, 1]} : vector<12x120xf32> to vector<8x120xf32>
    %c3_133 = arith.constant 3 : index
    %c0_134 = arith.constant 0 : index
    %c0_135 = arith.constant 0 : index
    %161 = vector.load %arg5[%c3_133, %c0_134, %c0_135] : memref<5x120x160xf32, #tpu.memory_space<vmem>>, vector<1x120x160xf32>
    %162 = vector.shape_cast %161 : vector<1x120x160xf32> to vector<120x160xf32>
    %cst_136 = arith.constant dense<0.000000e+00> : vector<8x160xf32>
    %163 = tpu.matmul %160, %162, %cst_136 {dimension_numbers = #tpu.dot_dimension_numbers<[1], [0], [0], [1], [0, 0, 1, 1], [], []>} : vector<8x120xf32>, vector<120x160xf32>, vector<8x160xf32> -> vector<8x160xf32>
    %164 = arith.addf %159, %163 : vector<8x160xf32>
    %165 = vector.extract_strided_slice %143 {offsets = [4, 0], sizes = [8, 120], strides = [1, 1]} : vector<12x120xf32> to vector<8x120xf32>
    %c4_137 = arith.constant 4 : index
    %c0_138 = arith.constant 0 : index
    %c0_139 = arith.constant 0 : index
    %166 = vector.load %arg5[%c4_137, %c0_138, %c0_139] : memref<5x120x160xf32, #tpu.memory_space<vmem>>, vector<1x120x160xf32>
    %167 = vector.shape_cast %166 : vector<1x120x160xf32> to vector<120x160xf32>
    %cst_140 = arith.constant dense<0.000000e+00> : vector<8x160xf32>
    %168 = tpu.matmul %165, %167, %cst_140 {dimension_numbers = #tpu.dot_dimension_numbers<[1], [0], [0], [1], [0, 0, 1, 1], [], []>} : vector<8x120xf32>, vector<120x160xf32>, vector<8x160xf32> -> vector<8x160xf32>
    %169 = arith.addf %164, %168 : vector<8x160xf32>
    %c0_141 = arith.constant 0 : index
    %c0_142 = arith.constant 0 : index
    %170 = vector.load %arg6[%c0_141, %c0_142] : memref<1x160xf32, #tpu.memory_space<vmem>>, vector<1x160xf32>
    %171 = vector.broadcast %170 : vector<1x160xf32> to vector<8x160xf32>
    %172 = arith.addf %169, %171 : vector<8x160xf32>
    %c0_143 = arith.constant 0 : index
    %c0_144 = arith.constant 0 : index
    %c0_145 = arith.constant 0 : index
    %173 = vector.load %arg7[%c0_143, %c0_144, %c0_145] : memref<2x4x8xf32, #tpu.memory_space<vmem>>, vector<1x4x8xf32>
    %174 = vector.shape_cast %173 : vector<1x4x8xf32> to vector<4x8xf32>
    %cst_146 = arith.constant dense<0.000000e+00> : vector<4x160xf32>
    %175 = tpu.matmul %174, %172, %cst_146 {dimension_numbers = #tpu.dot_dimension_numbers<[1], [0], [0], [1], [0, 0, 1, 1], [], []>} : vector<4x8xf32>, vector<8x160xf32>, vector<4x160xf32> -> vector<4x160xf32>
    %c1_147 = arith.constant 1 : index
    %c0_148 = arith.constant 0 : index
    %c0_149 = arith.constant 0 : index
    %176 = vector.load %arg7[%c1_147, %c0_148, %c0_149] : memref<2x4x8xf32, #tpu.memory_space<vmem>>, vector<1x4x8xf32>
    %177 = vector.shape_cast %176 : vector<1x4x8xf32> to vector<4x8xf32>
    %cst_150 = arith.constant dense<0.000000e+00> : vector<4x160xf32>
    %178 = tpu.matmul %177, %172, %cst_150 {dimension_numbers = #tpu.dot_dimension_numbers<[1], [0], [0], [1], [0, 0, 1, 1], [], []>} : vector<4x8xf32>, vector<8x160xf32>, vector<4x160xf32> -> vector<4x160xf32>
    %179 = arith.maximumf %175, %178 : vector<4x160xf32>
    %c0_151 = arith.constant 0 : index
    %c0_152 = arith.constant 0 : index
    %c0_153 = arith.constant 0 : index
    %180 = vector.load %arg8[%c0_151, %c0_152, %c0_153] : memref<2x160x80xf32, #tpu.memory_space<vmem>>, vector<1x160x80xf32>
    %181 = vector.shape_cast %180 : vector<1x160x80xf32> to vector<160x80xf32>
    %cst_154 = arith.constant dense<0.000000e+00> : vector<4x80xf32>
    %182 = tpu.matmul %179, %181, %cst_154 {dimension_numbers = #tpu.dot_dimension_numbers<[1], [0], [0], [1], [0, 0, 1, 1], [], []>} : vector<4x160xf32>, vector<160x80xf32>, vector<4x80xf32> -> vector<4x80xf32>
    %c1_155 = arith.constant 1 : index
    %c0_156 = arith.constant 0 : index
    %c0_157 = arith.constant 0 : index
    %183 = vector.load %arg8[%c1_155, %c0_156, %c0_157] : memref<2x160x80xf32, #tpu.memory_space<vmem>>, vector<1x160x80xf32>
    %184 = vector.shape_cast %183 : vector<1x160x80xf32> to vector<160x80xf32>
    %cst_158 = arith.constant dense<0.000000e+00> : vector<4x80xf32>
    %185 = tpu.matmul %179, %184, %cst_158 {dimension_numbers = #tpu.dot_dimension_numbers<[1], [0], [0], [1], [0, 0, 1, 1], [], []>} : vector<4x160xf32>, vector<160x80xf32>, vector<4x80xf32> -> vector<4x80xf32>
    %186 = arith.maximumf %182, %185 : vector<4x80xf32>
    %cst_159 = arith.constant 0.000000e+00 : f32
    %187 = vector.broadcast %cst_159 : f32 to vector<4x80xf32>
    %188 = arith.maximumf %186, %187 : vector<4x80xf32>
    %189 = vector.extract_strided_slice %188 {offsets = [0, 0], sizes = [1, 80], strides = [1, 1]} : vector<4x80xf32> to vector<1x80xf32>
    %190 = vector.extract_strided_slice %188 {offsets = [1, 0], sizes = [1, 80], strides = [1, 1]} : vector<4x80xf32> to vector<1x80xf32>
    %191 = vector.extract_strided_slice %188 {offsets = [2, 0], sizes = [1, 80], strides = [1, 1]} : vector<4x80xf32> to vector<1x80xf32>
    %192 = vector.extract_strided_slice %188 {offsets = [3, 0], sizes = [1, 80], strides = [1, 1]} : vector<4x80xf32> to vector<1x80xf32>
    %193 = tpu.concatenate %189, %190, %191, %192 in 1 : vector<1x80xf32>, vector<1x80xf32>, vector<1x80xf32>, vector<1x80xf32> -> vector<1x320xf32>
    %194 = tpu.concatenate %96, %193 in 0 : vector<1x320xf32>, vector<1x320xf32> -> vector<2x320xf32>
    %c0_160 = arith.constant 0 : index
    %c0_161 = arith.constant 0 : index
    %195 = vector.load %arg9[%c0_160, %c0_161] : memref<320x160xf32, #tpu.memory_space<vmem>>, vector<320x160xf32>
    %cst_162 = arith.constant dense<0.000000e+00> : vector<2x160xf32>
    %196 = tpu.matmul %194, %195, %cst_162 {dimension_numbers = #tpu.dot_dimension_numbers<[1], [0], [0], [1], [0, 0, 1, 1], [], []>} : vector<2x320xf32>, vector<320x160xf32>, vector<2x160xf32> -> vector<2x160xf32>
    %c0_163 = arith.constant 0 : index
    %c0_164 = arith.constant 0 : index
    %197 = vector.load %arg10[%c0_163, %c0_164] : memref<1x160xf32, #tpu.memory_space<vmem>>, vector<1x160xf32>
    %198 = vector.broadcast %197 : vector<1x160xf32> to vector<2x160xf32>
    %199 = arith.addf %196, %198 : vector<2x160xf32>
    %cst_165 = arith.constant 0.000000e+00 : f32
    %200 = vector.broadcast %cst_165 : f32 to vector<2x160xf32>
    %201 = arith.maximumf %199, %200 : vector<2x160xf32>
    %c0_166 = arith.constant 0 : index
    %c0_167 = arith.constant 0 : index
    %202 = vector.load %arg11[%c0_166, %c0_167] : memref<160x80xf32, #tpu.memory_space<vmem>>, vector<160x80xf32>
    %cst_168 = arith.constant dense<0.000000e+00> : vector<2x80xf32>
    %203 = tpu.matmul %201, %202, %cst_168 {dimension_numbers = #tpu.dot_dimension_numbers<[1], [0], [0], [1], [0, 0, 1, 1], [], []>} : vector<2x160xf32>, vector<160x80xf32>, vector<2x80xf32> -> vector<2x80xf32>
    %c0_169 = arith.constant 0 : index
    %c0_170 = arith.constant 0 : index
    %204 = vector.load %arg12[%c0_169, %c0_170] : memref<1x80xf32, #tpu.memory_space<vmem>>, vector<1x80xf32>
    %205 = vector.broadcast %204 : vector<1x80xf32> to vector<2x80xf32>
    %206 = arith.addf %203, %205 : vector<2x80xf32>
    %cst_171 = arith.constant 0.000000e+00 : f32
    %207 = vector.broadcast %cst_171 : f32 to vector<2x80xf32>
    %208 = arith.maximumf %206, %207 : vector<2x80xf32>
    %c0_172 = arith.constant 0 : index
    %c0_173 = arith.constant 0 : index
    %209 = vector.load %arg13[%c0_172, %c0_173] : memref<80x40xf32, #tpu.memory_space<vmem>>, vector<80x40xf32>
    %cst_174 = arith.constant dense<0.000000e+00> : vector<2x40xf32>
    %210 = tpu.matmul %208, %209, %cst_174 {dimension_numbers = #tpu.dot_dimension_numbers<[1], [0], [0], [1], [0, 0, 1, 1], [], []>} : vector<2x80xf32>, vector<80x40xf32>, vector<2x40xf32> -> vector<2x40xf32>
    %c0_175 = arith.constant 0 : index
    %c0_176 = arith.constant 0 : index
    %211 = vector.load %arg14[%c0_175, %c0_176] : memref<1x40xf32, #tpu.memory_space<vmem>>, vector<1x40xf32>
    %212 = vector.broadcast %211 : vector<1x40xf32> to vector<2x40xf32>
    %213 = arith.addf %210, %212 : vector<2x40xf32>
    %cst_177 = arith.constant 0.000000e+00 : f32
    %214 = vector.broadcast %cst_177 : f32 to vector<2x40xf32>
    %215 = arith.maximumf %213, %214 : vector<2x40xf32>
    %c0_178 = arith.constant 0 : index
    %c0_179 = arith.constant 0 : index
    %216 = vector.load %arg15[%c0_178, %c0_179] : memref<40x20xf32, #tpu.memory_space<vmem>>, vector<40x20xf32>
    %cst_180 = arith.constant dense<0.000000e+00> : vector<2x20xf32>
    %217 = tpu.matmul %215, %216, %cst_180 {dimension_numbers = #tpu.dot_dimension_numbers<[1], [0], [0], [1], [0, 0, 1, 1], [], []>} : vector<2x40xf32>, vector<40x20xf32>, vector<2x20xf32> -> vector<2x20xf32>
    %c0_181 = arith.constant 0 : index
    %c0_182 = arith.constant 0 : index
    %218 = vector.load %arg16[%c0_181, %c0_182] : memref<1x20xf32, #tpu.memory_space<vmem>>, vector<1x20xf32>
    %219 = vector.broadcast %218 : vector<1x20xf32> to vector<2x20xf32>
    %220 = arith.addf %217, %219 : vector<2x20xf32>
    %cst_183 = arith.constant 0.000000e+00 : f32
    %221 = vector.broadcast %cst_183 : f32 to vector<2x20xf32>
    %222 = arith.maximumf %220, %221 : vector<2x20xf32>
    %c0_184 = arith.constant 0 : index
    %c0_185 = arith.constant 0 : index
    %223 = vector.load %arg17[%c0_184, %c0_185] : memref<20x10xf32, #tpu.memory_space<vmem>>, vector<20x10xf32>
    %cst_186 = arith.constant dense<0.000000e+00> : vector<2x10xf32>
    %224 = tpu.matmul %222, %223, %cst_186 {dimension_numbers = #tpu.dot_dimension_numbers<[1], [0], [0], [1], [0, 0, 1, 1], [], []>} : vector<2x20xf32>, vector<20x10xf32>, vector<2x10xf32> -> vector<2x10xf32>
    %c0_187 = arith.constant 0 : index
    %c0_188 = arith.constant 0 : index
    %225 = vector.load %arg18[%c0_187, %c0_188] : memref<1x10xf32, #tpu.memory_space<vmem>>, vector<1x10xf32>
    %226 = vector.broadcast %225 : vector<1x10xf32> to vector<2x10xf32>
    %227 = arith.addf %224, %226 : vector<2x10xf32>
    %c0_189 = arith.constant 0 : index
    %c0_190 = arith.constant 0 : index
    %228 = vector.load %arg19[%c0_189, %c0_190] : memref<2x10xf32, #tpu.memory_space<vmem>>, vector<2x10xf32>
    tpu.vector_store %arg19[%c0_189, %c0_190], %227 {strides = array<i32>} : memref<2x10xf32, #tpu.memory_space<vmem>>, vector<2x10xf32>,
    return
  }
}

</mosaic_0001>

<llo_original>
// kernel: forward.1
$region0: #{forward.1}
  #allocation0 [shape = 'u32[]', space=smem, size = 0x4, offset = 0x4, fixed_abs, tag = 'smem constant byte address 0x4 - core index']
  #allocation1 [shape = 'u32[72,128]{1,0:T(1,128)}', space=vmem, size = 0x9000, scoped, tag = 'internal scratch']
  %s0 = inlined_call_operand.vmem [shape: f32[2,28,28], index: 0, kind: input, shape index: {}]
  %s1 = inlined_call_operand.vmem [shape: f32[5,28,240], index: 1, kind: input, shape index: {}]
  %s2 = inlined_call_operand.vmem [shape: f32[1,240], index: 2, kind: input, shape index: {}]
  %s3 = inlined_call_operand.vmem [shape: f32[2,12,24], index: 3, kind: input, shape index: {}]
  %s4 = inlined_call_operand.vmem [shape: f32[2,240,120], index: 4, kind: input, shape index: {}]
  %s5 = inlined_call_operand.vmem [shape: f32[5,120,160], index: 5, kind: input, shape index: {}]
  %s6 = inlined_call_operand.vmem [shape: f32[1,160], index: 6, kind: input, shape index: {}]
  %s7 = inlined_call_operand.vmem [shape: f32[2,4,8], index: 7, kind: input, shape index: {}]
  %s8 = inlined_call_operand.vmem [shape: f32[2,160,80], index: 8, kind: input, shape index: {}]
  %s9 = inlined_call_operand.vmem [shape: f32[320,160], index: 9, kind: input, shape index: {}]
  %s10 = inlined_call_operand.vmem [shape: f32[1,160], index: 10, kind: input, shape index: {}]
  %s11 = inlined_call_operand.vmem [shape: f32[160,80], index: 11, kind: input, shape index: {}]
  %s12 = inlined_call_operand.vmem [shape: f32[1,80], index: 12, kind: input, shape index: {}]
  %s13 = inlined_call_operand.vmem [shape: f32[80,40], index: 13, kind: input, shape index: {}]
  %s14 = inlined_call_operand.vmem [shape: f32[1,40], index: 14, kind: input, shape index: {}]
  %s15 = inlined_call_operand.vmem [shape: f32[40,20], index: 15, kind: input, shape index: {}]
  %s16 = inlined_call_operand.vmem [shape: f32[1,20], index: 16, kind: input, shape index: {}]
  %s17 = inlined_call_operand.vmem [shape: f32[20,10], index: 17, kind: input, shape index: {}]
  %s18 = inlined_call_operand.vmem [shape: f32[1,10], index: 18, kind: input, shape index: {}]
  %s19 = inlined_call_operand.hbm [shape: f32[2,10], index: 19, kind: output, shape index: {}]
  %s20 = sld [smem:[#allocation0]]
  $region86: #{forward.1} parent=0
    _
  %s22 = ssub.s32 1, %s20
  %s23 = scalar_select 0, %s22, %s20
  $region1: #{forward.1} parent=0
    #allocation2 [shape = 'u8[1024]{0}', space=vmem, size = 0x400, scoped, tag = 'output window, operand 0, single buffered']
    #allocation3 [shape = 's32[1]{0}', space=sflag, size = 0x4, scoped, tag = 'scoped memory for forward.1']
    %24 = vsyncpa [#allocation3], 0
    // Predicated region
    $region2: #{forward.1} parent=1 // pred_check
      _
    $region3: #{forward.1} parent=1 // pred_check_branch
      %26 = sbr.rel (0) target = $region5
    $region4: #{forward.1} parent=1 // pred_region
      _
    $region5: #{forward.1} parent=1 // pred_fallthru
      _
    // Predicated region
    $region6: #{forward.1} parent=1 // pred_check
      _
    $region7: #{forward.1} parent=1 // pred_check_branch
      %28 = sbr.rel (0) target = $region9
    $region8: #{forward.1} parent=1 // pred_region
      _
    $region9: #{forward.1} parent=1 // pred_fallthru
      _
    // Predicated region
    $region10: #{forward.1} parent=1 // pred_check
      _
    $region11: #{forward.1} parent=1 // pred_check_branch
      %30 = sbr.rel (0) target = $region13
    $region12: #{forward.1} parent=1 // pred_region
      _
    $region13: #{forward.1} parent=1 // pred_fallthru
      _
    // Predicated region
    $region14: #{forward.1} parent=1 // pred_check
      _
    $region15: #{forward.1} parent=1 // pred_check_branch
      %32 = sbr.rel (0) target = $region17
    $region16: #{forward.1} parent=1 // pred_region
      _
    $region17: #{forward.1} parent=1 // pred_fallthru
      _
    // Predicated region
    $region18: #{forward.1} parent=1 // pred_check
      _
    $region19: #{forward.1} parent=1 // pred_check_branch
      %34 = sbr.rel (0) target = $region21
    $region20: #{forward.1} parent=1 // pred_region
      _
    $region21: #{forward.1} parent=1 // pred_fallthru
      _
    // Predicated region
    $region22: #{forward.1} parent=1 // pred_check
      _
    $region23: #{forward.1} parent=1 // pred_check_branch
      %36 = sbr.rel (0) target = $region25
    $region24: #{forward.1} parent=1 // pred_region
      _
    $region25: #{forward.1} parent=1 // pred_fallthru
      _
    // Predicated region
    $region26: #{forward.1} parent=1 // pred_check
      _
    $region27: #{forward.1} parent=1 // pred_check_branch
      %38 = sbr.rel (0) target = $region29
    $region28: #{forward.1} parent=1 // pred_region
      _
    $region29: #{forward.1} parent=1 // pred_fallthru
      _
    // Predicated region
    $region30: #{forward.1} parent=1 // pred_check
      _
    $region31: #{forward.1} parent=1 // pred_check_branch
      %40 = sbr.rel (0) target = $region33
    $region32: #{forward.1} parent=1 // pred_region
      _
    $region33: #{forward.1} parent=1 // pred_fallthru
      _
    // Predicated region
    $region34: #{forward.1} parent=1 // pred_check
      _
    $region35: #{forward.1} parent=1 // pred_check_branch
      %42 = sbr.rel (0) target = $region37
    $region36: #{forward.1} parent=1 // pred_region
      _
    $region37: #{forward.1} parent=1 // pred_fallthru
      _
    // Predicated region
    $region38: #{forward.1} parent=1 // pred_check
      _
    $region39: #{forward.1} parent=1 // pred_check_branch
      %44 = sbr.rel (0) target = $region41
    $region40: #{forward.1} parent=1 // pred_region
      _
    $region41: #{forward.1} parent=1 // pred_fallthru
      _
    // Predicated region
    $region42: #{forward.1} parent=1 // pred_check
      _
    $region43: #{forward.1} parent=1 // pred_check_branch
      %46 = sbr.rel (0) target = $region45
    $region44: #{forward.1} parent=1 // pred_region
      _
    $region45: #{forward.1} parent=1 // pred_fallthru
      _
    // Predicated region
    $region46: #{forward.1} parent=1 // pred_check
      _
    $region47: #{forward.1} parent=1 // pred_check_branch
      %48 = sbr.rel (0) target = $region49
    $region48: #{forward.1} parent=1 // pred_region
      _
    $region49: #{forward.1} parent=1 // pred_fallthru
      _
    // Predicated region
    $region50: #{forward.1} parent=1 // pred_check
      _
    $region51: #{forward.1} parent=1 // pred_check_branch
      %50 = sbr.rel (0) target = $region53
    $region52: #{forward.1} parent=1 // pred_region
      _
    $region53: #{forward.1} parent=1 // pred_fallthru
      _
    // Predicated region
    $region54: #{forward.1} parent=1 // pred_check
      _
    $region55: #{forward.1} parent=1 // pred_check_branch
      %52 = sbr.rel (0) target = $region57
    $region56: #{forward.1} parent=1 // pred_region
      _
    $region57: #{forward.1} parent=1 // pred_fallthru
      _
    // Predicated region
    $region58: #{forward.1} parent=1 // pred_check
      _
    $region59: #{forward.1} parent=1 // pred_check_branch
      %54 = sbr.rel (0) target = $region61
    $region60: #{forward.1} parent=1 // pred_region
      _
    $region61: #{forward.1} parent=1 // pred_fallthru
      _
    // Predicated region
    $region62: #{forward.1} parent=1 // pred_check
      _
    $region63: #{forward.1} parent=1 // pred_check_branch
      %56 = sbr.rel (0) target = $region65
    $region64: #{forward.1} parent=1 // pred_region
      _
    $region65: #{forward.1} parent=1 // pred_fallthru
      _
    // Predicated region
    $region66: #{forward.1} parent=1 // pred_check
      _
    $region67: #{forward.1} parent=1 // pred_check_branch
      %58 = sbr.rel (0) target = $region69
    $region68: #{forward.1} parent=1 // pred_region
      _
    $region69: #{forward.1} parent=1 // pred_fallthru
      _
    // Predicated region
    $region70: #{forward.1} parent=1 // pred_check
      _
    $region71: #{forward.1} parent=1 // pred_check_branch
      %60 = sbr.rel (0) target = $region73
    $region72: #{forward.1} parent=1 // pred_region
      _
    $region73: #{forward.1} parent=1 // pred_fallthru
      _
    // Predicated region
    $region74: #{forward.1} parent=1 // pred_check
      _
    $region75: #{forward.1} parent=1 // pred_check_branch
      %62 = sbr.rel (0) target = $region77
    $region76: #{forward.1} parent=1 // pred_region
      _
    $region77: #{forward.1} parent=1 // pred_fallthru
      _
    %v63 = vld [vmem:[%s0] sm:$0xff]
    %v64 = vld [vmem:[%s0 + $0x8] sm:$0xff]
    %v65 = vld [vmem:[%s0 + $0x10] sm:$0xff]
    %v66 = vld [vmem:[%s0 + $0x18] sm:$0xf]
    %v67 = vld [vmem:[%s1] sm:$0xff]
    %v68 = vld [vmem:[%s1 + $0x8] sm:$0xff]
    %v69 = vld [vmem:[%s1 + $0x10] sm:$0xff]
    %v70 = vld [vmem:[%s1 + $0x18] sm:$0xff]
    %v71 = vld [vmem:[%s1 + $0x20] sm:$0xff]
    %v72 = vld [vmem:[%s1 + $0x28] sm:$0xff]
    %v73 = vld [vmem:[%s1 + $0x30] sm:$0xf]
    %v74 = vld [vmem:[%s1 + $0x38] sm:$0xf]
    %s75 = scalar_lea.vmem %s1, 64
    %v76 = vld [vmem:[%s75] sm:$0xff]
    %v77 = vld [vmem:[%s75 + $0x8] sm:$0xff]
    %v78 = vld [vmem:[%s75 + $0x10] sm:$0xff]
    %v79 = vld [vmem:[%s75 + $0x18] sm:$0xff]
    %v80 = vld [vmem:[%s75 + $0x20] sm:$0xff]
    %v81 = vld [vmem:[%s75 + $0x28] sm:$0xff]
    %v82 = vld [vmem:[%s75 + $0x30] sm:$0xf]
    %v83 = vld [vmem:[%s75 + $0x38] sm:$0xf]
    %vm88 = vcmask 1046528
    %v89 = vrot.slane %v63, 1
    %v90 = vrot.slane %v64, 1
    %v91 = vsel %vm88, %v89, %v90
    %v92 = vrot.slane %v65, 1
    %v93 = vsel %vm88, %v90, %v92
    %v94 = vrot.slane %v66, 1
    %v95 = vsel %vm88, %v92, %v94
    %vm96 = vcmask 228352
    %v97 = vsel %vm96, %v91, 0
    %v99 = vsel %vm96, %v93, 0
    %v101 = vsel %vm96, %v95, 0
    %vm103 = vcmask 1043456
    %v105 = vsel %vm103, %v82, 0
    %v108 = vsel %vm103, %v83, 0
    %110 = vmatpush.msra.mxu0 0.0
    %111 = vmatpush.msra.mxu0 0.0
    %112 = vmatpush.msra.mxu0 0.0
    %113 = vmatpush.msra.mxu0 0.0
    %114 = vmatpush.msra.mxu0 0.0
    %115 = vmatpush.msra.mxu0 0.0
    %116 = vmatpush.msra.mxu0 0.0
    %117 = vmatpush.msra.mxu0 0.0
    %118 = vmatpush.msra.mxu0 0.0
    %119 = vmatpush.msra.mxu0 0.0
    %120 = vmatpush.msra.mxu0 0.0
    %121 = vmatpush.msra.mxu0 0.0
    %122 = vmatpush.msra.mxu0 %v105
    %123 = vmatpush.msra.mxu0 %v80
    %124 = vmatpush.msra.mxu0 %v78
    %125 = vmatpush.msra.mxu0 %v76
    %126 = vmatmul.f32.gmra.mxu0 %v97
    %v127 = vpop.f32.mrf.mxu0
    %v128 = vadd.f32 0.0, %v127
    %129 = vmatmul.f32.gmra.mxu0 %v99
    %v130 = vpop.f32.mrf.mxu0
    %v131 = vadd.f32 0.0, %v130
    %132 = vmatmul.f32.gmra.mxu0 %v101
    %v133 = vpop.f32.mrf.mxu0
    %v134 = vadd.f32 0.0, %v133
    %135 = vdwg.mxu0
    %136 = vmatpush.msra.mxu0 0.0
    %137 = vmatpush.msra.mxu0 0.0
    %138 = vmatpush.msra.mxu0 0.0
    %139 = vmatpush.msra.mxu0 0.0
    %140 = vmatpush.msra.mxu0 0.0
    %141 = vmatpush.msra.mxu0 0.0
    %142 = vmatpush.msra.mxu0 0.0
    %143 = vmatpush.msra.mxu0 0.0
    %144 = vmatpush.msra.mxu0 0.0
    %145 = vmatpush.msra.mxu0 0.0
    %146 = vmatpush.msra.mxu0 0.0
    %147 = vmatpush.msra.mxu0 0.0
    %148 = vmatpush.msra.mxu0 %v108
    %149 = vmatpush.msra.mxu0 %v81
    %150 = vmatpush.msra.mxu0 %v79
    %151 = vmatpush.msra.mxu0 %v77
    %152 = vmatmul.f32.gmra.mxu0 %v97
    %v153 = vpop.f32.mrf.mxu0
    %v154 = vadd.f32 0.0, %v153
    %155 = vmatmul.f32.gmra.mxu0 %v99
    %v156 = vpop.f32.mrf.mxu0
    %v157 = vadd.f32 0.0, %v156
    %158 = vmatmul.f32.gmra.mxu0 %v101
    %v159 = vpop.f32.mrf.mxu0
    %v160 = vadd.f32 0.0, %v159
    %161 = vdwg.mxu0
    %v162 = vsel %vm96, %v63, 0
    %v164 = vsel %vm96, %v64, 0
    %v166 = vsel %vm96, %v65, 0
    %v169 = vsel %vm103, %v73, 0
    %v172 = vsel %vm103, %v74, 0
    %174 = vmatpush.msra.mxu0 0.0
    %175 = vmatpush.msra.mxu0 0.0
    %176 = vmatpush.msra.mxu0 0.0
    %177 = vmatpush.msra.mxu0 0.0
    %178 = vmatpush.msra.mxu0 0.0
    %179 = vmatpush.msra.mxu0 0.0
    %180 = vmatpush.msra.mxu0 0.0
    %181 = vmatpush.msra.mxu0 0.0
    %182 = vmatpush.msra.mxu0 0.0
    %183 = vmatpush.msra.mxu0 0.0
    %184 = vmatpush.msra.mxu0 0.0
    %185 = vmatpush.msra.mxu0 0.0
    %186 = vmatpush.msra.mxu0 %v169
    %187 = vmatpush.msra.mxu0 %v71
    %188 = vmatpush.msra.mxu0 %v69
    %189 = vmatpush.msra.mxu0 %v67
    %190 = vmatmul.f32.gmra.mxu0 %v162
    %v191 = vpop.f32.mrf.mxu0
    %v192 = vadd.f32 %v128, %v191
    %193 = vmatmul.f32.gmra.mxu0 %v164
    %v194 = vpop.f32.mrf.mxu0
    %v195 = vadd.f32 %v131, %v194
    %196 = vmatmul.f32.gmra.mxu0 %v166
    %v197 = vpop.f32.mrf.mxu0
    %v198 = vadd.f32 %v134, %v197
    %199 = vdwg.mxu0
    %200 = vmatpush.msra.mxu0 0.0
    %201 = vmatpush.msra.mxu0 0.0
    %202 = vmatpush.msra.mxu0 0.0
    %203 = vmatpush.msra.mxu0 0.0
    %204 = vmatpush.msra.mxu0 0.0
    %205 = vmatpush.msra.mxu0 0.0
    %206 = vmatpush.msra.mxu0 0.0
    %207 = vmatpush.msra.mxu0 0.0
    %208 = vmatpush.msra.mxu0 0.0
    %209 = vmatpush.msra.mxu0 0.0
    %210 = vmatpush.msra.mxu0 0.0
    %211 = vmatpush.msra.mxu0 0.0
    %212 = vmatpush.msra.mxu0 %v172
    %213 = vmatpush.msra.mxu0 %v72
    %214 = vmatpush.msra.mxu0 %v70
    %215 = vmatpush.msra.mxu0 %v68
    %216 = vmatmul.f32.gmra.mxu0 %v162
    %v217 = vpop.f32.mrf.mxu0
    %v218 = vadd.f32 %v154, %v217
    %219 = vmatmul.f32.gmra.mxu0 %v164
    %v220 = vpop.f32.mrf.mxu0
    %v221 = vadd.f32 %v157, %v220
    %222 = vmatmul.f32.gmra.mxu0 %v166
    %v223 = vpop.f32.mrf.mxu0
    %v224 = vadd.f32 %v160, %v223
    %225 = vdwg.mxu0
    %s226 = scalar_lea.vmem %s1, 128
    %v227 = vld [vmem:[%s226] sm:$0xff]
    %v228 = vld [vmem:[%s226 + $0x8] sm:$0xff]
    %v229 = vld [vmem:[%s226 + $0x10] sm:$0xff]
    %v230 = vld [vmem:[%s226 + $0x18] sm:$0xff]
    %v231 = vld [vmem:[%s226 + $0x20] sm:$0xff]
    %v232 = vld [vmem:[%s226 + $0x28] sm:$0xff]
    %v233 = vld [vmem:[%s226 + $0x30] sm:$0xf]
    %v234 = vld [vmem:[%s226 + $0x38] sm:$0xf]
    %vm235 = vcmask 1045504
    %v236 = vrot.slane %v63, 2
    %v237 = vrot.slane %v64, 2
    %v238 = vsel %vm235, %v236, %v237
    %v239 = vrot.slane %v65, 2
    %v240 = vsel %vm235, %v237, %v239
    %v241 = vrot.slane %v66, 2
    %v242 = vsel %vm235, %v239, %v241
    %v243 = vsel %vm96, %v238, 0
    %v245 = vsel %vm96, %v240, 0
    %v247 = vsel %vm96, %v242, 0
    %v250 = vsel %vm103, %v233, 0
    %v253 = vsel %vm103, %v234, 0
    %255 = vmatpush.msra.mxu0 0.0
    %256 = vmatpush.msra.mxu0 0.0
    %257 = vmatpush.msra.mxu0 0.0
    %258 = vmatpush.msra.mxu0 0.0
    %259 = vmatpush.msra.mxu0 0.0
    %260 = vmatpush.msra.mxu0 0.0
    %261 = vmatpush.msra.mxu0 0.0
    %262 = vmatpush.msra.mxu0 0.0
    %263 = vmatpush.msra.mxu0 0.0
    %264 = vmatpush.msra.mxu0 0.0
    %265 = vmatpush.msra.mxu0 0.0
    %266 = vmatpush.msra.mxu0 0.0
    %267 = vmatpush.msra.mxu0 %v250
    %268 = vmatpush.msra.mxu0 %v231
    %269 = vmatpush.msra.mxu0 %v229
    %270 = vmatpush.msra.mxu0 %v227
    %271 = vmatmul.f32.gmra.mxu0 %v243
    %v272 = vpop.f32.mrf.mxu0
    %v273 = vadd.f32 0.0, %v272
    %274 = vmatmul.f32.gmra.mxu0 %v245
    %v275 = vpop.f32.mrf.mxu0
    %v276 = vadd.f32 0.0, %v275
    %277 = vmatmul.f32.gmra.mxu0 %v247
    %v278 = vpop.f32.mrf.mxu0
    %v279 = vadd.f32 0.0, %v278
    %280 = vdwg.mxu0
    %281 = vmatpush.msra.mxu0 0.0
    %282 = vmatpush.msra.mxu0 0.0
    %283 = vmatpush.msra.mxu0 0.0
    %284 = vmatpush.msra.mxu0 0.0
    %285 = vmatpush.msra.mxu0 0.0
    %286 = vmatpush.msra.mxu0 0.0
    %287 = vmatpush.msra.mxu0 0.0
    %288 = vmatpush.msra.mxu0 0.0
    %289 = vmatpush.msra.mxu0 0.0
    %290 = vmatpush.msra.mxu0 0.0
    %291 = vmatpush.msra.mxu0 0.0
    %292 = vmatpush.msra.mxu0 0.0
    %293 = vmatpush.msra.mxu0 %v253
    %294 = vmatpush.msra.mxu0 %v232
    %295 = vmatpush.msra.mxu0 %v230
    %296 = vmatpush.msra.mxu0 %v228
    %297 = vmatmul.f32.gmra.mxu0 %v243
    %v298 = vpop.f32.mrf.mxu0
    %v299 = vadd.f32 0.0, %v298
    %300 = vmatmul.f32.gmra.mxu0 %v245
    %v301 = vpop.f32.mrf.mxu0
    %v302 = vadd.f32 0.0, %v301
    %303 = vmatmul.f32.gmra.mxu0 %v247
    %v304 = vpop.f32.mrf.mxu0
    %v305 = vadd.f32 0.0, %v304
    %306 = vdwg.mxu0
    %v307 = vadd.f32 %v192, %v273
    %v308 = vadd.f32 %v218, %v299
    %v309 = vadd.f32 %v195, %v276
    %v310 = vadd.f32 %v221, %v302
    %v311 = vadd.f32 %v198, %v279
    %v312 = vadd.f32 %v224, %v305
    %s313 = scalar_lea.vmem %s1, 192
    %v314 = vld [vmem:[%s313] sm:$0xff]
    %v315 = vld [vmem:[%s313 + $0x8] sm:$0xff]
    %v316 = vld [vmem:[%s313 + $0x10] sm:$0xff]
    %v317 = vld [vmem:[%s313 + $0x18] sm:$0xff]
    %v318 = vld [vmem:[%s313 + $0x20] sm:$0xff]
    %v319 = vld [vmem:[%s313 + $0x28] sm:$0xff]
    %v320 = vld [vmem:[%s313 + $0x30] sm:$0xf]
    %v321 = vld [vmem:[%s313 + $0x38] sm:$0xf]
    %vm322 = vcmask 1044480
    %v323 = vrot.slane %v63, 3
    %v324 = vrot.slane %v64, 3
    %v325 = vsel %vm322, %v323, %v324
    %v326 = vrot.slane %v65, 3
    %v327 = vsel %vm322, %v324, %v326
    %v328 = vrot.slane %v66, 3
    %v329 = vsel %vm322, %v326, %v328
    %v330 = vsel %vm96, %v325, 0
    %v332 = vsel %vm96, %v327, 0
    %v334 = vsel %vm96, %v329, 0
    %v337 = vsel %vm103, %v320, 0
    %v340 = vsel %vm103, %v321, 0
    %342 = vmatpush.msra.mxu0 0.0
    %343 = vmatpush.msra.mxu0 0.0
    %344 = vmatpush.msra.mxu0 0.0
    %345 = vmatpush.msra.mxu0 0.0
    %346 = vmatpush.msra.mxu0 0.0
    %347 = vmatpush.msra.mxu0 0.0
    %348 = vmatpush.msra.mxu0 0.0
    %349 = vmatpush.msra.mxu0 0.0
    %350 = vmatpush.msra.mxu0 0.0
    %351 = vmatpush.msra.mxu0 0.0
    %352 = vmatpush.msra.mxu0 0.0
    %353 = vmatpush.msra.mxu0 0.0
    %354 = vmatpush.msra.mxu0 %v337
    %355 = vmatpush.msra.mxu0 %v318
    %356 = vmatpush.msra.mxu0 %v316
    %357 = vmatpush.msra.mxu0 %v314
    %358 = vmatmul.f32.gmra.mxu0 %v330
    %v359 = vpop.f32.mrf.mxu0
    %v360 = vadd.f32 0.0, %v359
    %361 = vmatmul.f32.gmra.mxu0 %v332
    %v362 = vpop.f32.mrf.mxu0
    %v363 = vadd.f32 0.0, %v362
    %364 = vmatmul.f32.gmra.mxu0 %v334
    %v365 = vpop.f32.mrf.mxu0
    %v366 = vadd.f32 0.0, %v365
    %367 = vdwg.mxu0
    %368 = vmatpush.msra.mxu0 0.0
    %369 = vmatpush.msra.mxu0 0.0
    %370 = vmatpush.msra.mxu0 0.0
    %371 = vmatpush.msra.mxu0 0.0
    %372 = vmatpush.msra.mxu0 0.0
    %373 = vmatpush.msra.mxu0 0.0
    %374 = vmatpush.msra.mxu0 0.0
    %375 = vmatpush.msra.mxu0 0.0
    %376 = vmatpush.msra.mxu0 0.0
    %377 = vmatpush.msra.mxu0 0.0
    %378 = vmatpush.msra.mxu0 0.0
    %379 = vmatpush.msra.mxu0 0.0
    %380 = vmatpush.msra.mxu0 %v340
    %381 = vmatpush.msra.mxu0 %v319
    %382 = vmatpush.msra.mxu0 %v317
    %383 = vmatpush.msra.mxu0 %v315
    %384 = vmatmul.f32.gmra.mxu0 %v330
    %v385 = vpop.f32.mrf.mxu0
    %v386 = vadd.f32 0.0, %v385
    %387 = vmatmul.f32.gmra.mxu0 %v332
    %v388 = vpop.f32.mrf.mxu0
    %v389 = vadd.f32 0.0, %v388
    %390 = vmatmul.f32.gmra.mxu0 %v334
    %v391 = vpop.f32.mrf.mxu0
    %v392 = vadd.f32 0.0, %v391
    %393 = vdwg.mxu0
    %v394 = vadd.f32 %v307, %v360
    %v395 = vadd.f32 %v308, %v386
    %v396 = vadd.f32 %v309, %v363
    %v397 = vadd.f32 %v310, %v389
    %v398 = vadd.f32 %v311, %v366
    %v399 = vadd.f32 %v312, %v392
    %s400 = scalar_lea.vmem %s1, 256
    %v401 = vld [vmem:[%s400] sm:$0xff]
    %v402 = vld [vmem:[%s400 + $0x8] sm:$0xff]
    %v403 = vld [vmem:[%s400 + $0x10] sm:$0xff]
    %v404 = vld [vmem:[%s400 + $0x18] sm:$0xff]
    %v405 = vld [vmem:[%s400 + $0x20] sm:$0xff]
    %v406 = vld [vmem:[%s400 + $0x28] sm:$0xff]
    %v407 = vld [vmem:[%s400 + $0x30] sm:$0xf]
    %v408 = vld [vmem:[%s400 + $0x38] sm:$0xf]
    %v409 = vrot.slane %v63, 4
    %v410 = vrot.slane %v64, 4
    %v411 = vsel %vm103, %v409, %v410
    %v412 = vrot.slane %v65, 4
    %v413 = vsel %vm103, %v410, %v412
    %v414 = vrot.slane %v66, 4
    %v415 = vsel %vm103, %v412, %v414
    %v416 = vsel %vm96, %v411, 0
    %v418 = vsel %vm96, %v413, 0
    %v420 = vsel %vm96, %v415, 0
    %v423 = vsel %vm103, %v407, 0
    %v426 = vsel %vm103, %v408, 0
    %428 = vmatpush.msra.mxu0 0.0
    %429 = vmatpush.msra.mxu0 0.0
    %430 = vmatpush.msra.mxu0 0.0
    %431 = vmatpush.msra.mxu0 0.0
    %432 = vmatpush.msra.mxu0 0.0
    %433 = vmatpush.msra.mxu0 0.0
    %434 = vmatpush.msra.mxu0 0.0
    %435 = vmatpush.msra.mxu0 0.0
    %436 = vmatpush.msra.mxu0 0.0
    %437 = vmatpush.msra.mxu0 0.0
    %438 = vmatpush.msra.mxu0 0.0
    %439 = vmatpush.msra.mxu0 0.0
    %440 = vmatpush.msra.mxu0 %v423
    %441 = vmatpush.msra.mxu0 %v405
    %442 = vmatpush.msra.mxu0 %v403
    %443 = vmatpush.msra.mxu0 %v401
    %444 = vmatmul.f32.gmra.mxu0 %v416
    %v445 = vpop.f32.mrf.mxu0
    %v446 = vadd.f32 0.0, %v445
    %447 = vmatmul.f32.gmra.mxu0 %v418
    %v448 = vpop.f32.mrf.mxu0
    %v449 = vadd.f32 0.0, %v448
    %450 = vmatmul.f32.gmra.mxu0 %v420
    %v451 = vpop.f32.mrf.mxu0
    %v452 = vadd.f32 0.0, %v451
    %453 = vdwg.mxu0
    %454 = vmatpush.msra.mxu0 0.0
    %455 = vmatpush.msra.mxu0 0.0
    %456 = vmatpush.msra.mxu0 0.0
    %457 = vmatpush.msra.mxu0 0.0
    %458 = vmatpush.msra.mxu0 0.0
    %459 = vmatpush.msra.mxu0 0.0
    %460 = vmatpush.msra.mxu0 0.0
    %461 = vmatpush.msra.mxu0 0.0
    %462 = vmatpush.msra.mxu0 0.0
    %463 = vmatpush.msra.mxu0 0.0
    %464 = vmatpush.msra.mxu0 0.0
    %465 = vmatpush.msra.mxu0 0.0
    %466 = vmatpush.msra.mxu0 %v426
    %467 = vmatpush.msra.mxu0 %v406
    %468 = vmatpush.msra.mxu0 %v404
    %469 = vmatpush.msra.mxu0 %v402
    %470 = vmatmul.f32.gmra.mxu0 %v416
    %v471 = vpop.f32.mrf.mxu0
    %v472 = vadd.f32 0.0, %v471
    %473 = vmatmul.f32.gmra.mxu0 %v418
    %v474 = vpop.f32.mrf.mxu0
    %v475 = vadd.f32 0.0, %v474
    %476 = vmatmul.f32.gmra.mxu0 %v420
    %v477 = vpop.f32.mrf.mxu0
    %v478 = vadd.f32 0.0, %v477
    %479 = vdwg.mxu0
    %v480 = vadd.f32 %v394, %v446
    %v481 = vadd.f32 %v395, %v472
    %v482 = vadd.f32 %v396, %v449
    %v483 = vadd.f32 %v397, %v475
    %v484 = vadd.f32 %v398, %v452
    %v485 = vadd.f32 %v399, %v478
    %v486 = vld [vmem:[%s2] sm:$0x3]
    %v488 = vperm.slane %v486, 0
    %v489 = vperm.slane %v486, 1
    %v492 = vadd.f32 %v480, %v488
    %v493 = vadd.f32 %v481, %v489
    %v494 = vadd.f32 %v482, %v488
    %v495 = vadd.f32 %v483, %v489
    %v496 = vadd.f32 %v484, %v488
    %v497 = vadd.f32 %v485, %v489
    %v498 = vld [vmem:[%s3] sm:$0xff]
    %v499 = vld [vmem:[%s3 + $0x8] sm:$0xf]
    %vm500 = vcmask 195584
    %v502 = vsel %vm500, %v498, 0
    %v505 = vsel %vm500, %v499, 0
    %507 = vmatpush.msra.mxu0 0.0
    %508 = vmatpush.msra.mxu0 0.0
    %509 = vmatpush.msra.mxu0 0.0
    %510 = vmatpush.msra.mxu0 0.0
    %511 = vmatpush.msra.mxu0 0.0
    %512 = vmatpush.msra.mxu0 0.0
    %513 = vmatpush.msra.mxu0 0.0
    %514 = vmatpush.msra.mxu0 0.0
    %515 = vmatpush.msra.mxu0 0.0
    %516 = vmatpush.msra.mxu0 0.0
    %517 = vmatpush.msra.mxu0 0.0
    %518 = vmatpush.msra.mxu0 0.0
    %519 = vmatpush.msra.mxu0 0.0
    %520 = vmatpush.msra.mxu0 %v496
    %521 = vmatpush.msra.mxu0 %v494
    %522 = vmatpush.msra.mxu0 %v492
    %523 = vmatmul.f32.gmra.mxu0 %v502
    %v524 = vpop.f32.mrf.mxu0
    %v525 = vadd.f32 0.0, %v524
    %526 = vmatmul.f32.gmra.mxu0 %v505
    %v527 = vpop.f32.mrf.mxu0
    %v528 = vadd.f32 0.0, %v527
    %529 = vdwg.mxu0
    %530 = vmatpush.msra.mxu0 0.0
    %531 = vmatpush.msra.mxu0 0.0
    %532 = vmatpush.msra.mxu0 0.0
    %533 = vmatpush.msra.mxu0 0.0
    %534 = vmatpush.msra.mxu0 0.0
    %535 = vmatpush.msra.mxu0 0.0
    %536 = vmatpush.msra.mxu0 0.0
    %537 = vmatpush.msra.mxu0 0.0
    %538 = vmatpush.msra.mxu0 0.0
    %539 = vmatpush.msra.mxu0 0.0
    %540 = vmatpush.msra.mxu0 0.0
    %541 = vmatpush.msra.mxu0 0.0
    %542 = vmatpush.msra.mxu0 0.0
    %543 = vmatpush.msra.mxu0 %v497
    %544 = vmatpush.msra.mxu0 %v495
    %545 = vmatpush.msra.mxu0 %v493
    %546 = vmatmul.f32.gmra.mxu0 %v502
    %v547 = vpop.f32.mrf.mxu0
    %v548 = vadd.f32 0.0, %v547
    %549 = vmatmul.f32.gmra.mxu0 %v505
    %v550 = vpop.f32.mrf.mxu0
    %v551 = vadd.f32 0.0, %v550
    %552 = vdwg.mxu0
    %s553 = scalar_lea.vmem %s3, 16
    %v554 = vld [vmem:[%s553] sm:$0xff]
    %v555 = vld [vmem:[%s553 + $0x8] sm:$0xf]
    %v557 = vsel %vm500, %v554, 0
    %v560 = vsel %vm500, %v555, 0
    %562 = vmatpush.msra.mxu0 0.0
    %563 = vmatpush.msra.mxu0 0.0
    %564 = vmatpush.msra.mxu0 0.0
    %565 = vmatpush.msra.mxu0 0.0
    %566 = vmatpush.msra.mxu0 0.0
    %567 = vmatpush.msra.mxu0 0.0
    %568 = vmatpush.msra.mxu0 0.0
    %569 = vmatpush.msra.mxu0 0.0
    %570 = vmatpush.msra.mxu0 0.0
    %571 = vmatpush.msra.mxu0 0.0
    %572 = vmatpush.msra.mxu0 0.0
    %573 = vmatpush.msra.mxu0 0.0
    %574 = vmatpush.msra.mxu0 0.0
    %575 = vmatpush.msra.mxu0 %v496
    %576 = vmatpush.msra.mxu0 %v494
    %577 = vmatpush.msra.mxu0 %v492
    %578 = vmatmul.f32.gmra.mxu0 %v557
    %v579 = vpop.f32.mrf.mxu0
    %v580 = vadd.f32 0.0, %v579
    %581 = vmatmul.f32.gmra.mxu0 %v560
    %v582 = vpop.f32.mrf.mxu0
    %v583 = vadd.f32 0.0, %v582
    %584 = vdwg.mxu0
    %585 = vmatpush.msra.mxu0 0.0
    %586 = vmatpush.msra.mxu0 0.0
    %587 = vmatpush.msra.mxu0 0.0
    %588 = vmatpush.msra.mxu0 0.0
    %589 = vmatpush.msra.mxu0 0.0
    %590 = vmatpush.msra.mxu0 0.0
    %591 = vmatpush.msra.mxu0 0.0
    %592 = vmatpush.msra.mxu0 0.0
    %593 = vmatpush.msra.mxu0 0.0
    %594 = vmatpush.msra.mxu0 0.0
    %595 = vmatpush.msra.mxu0 0.0
    %596 = vmatpush.msra.mxu0 0.0
    %597 = vmatpush.msra.mxu0 0.0
    %598 = vmatpush.msra.mxu0 %v497
    %599 = vmatpush.msra.mxu0 %v495
    %600 = vmatpush.msra.mxu0 %v493
    %601 = vmatmul.f32.gmra.mxu0 %v557
    %v602 = vpop.f32.mrf.mxu0
    %v603 = vadd.f32 0.0, %v602
    %604 = vmatmul.f32.gmra.mxu0 %v560
    %v605 = vpop.f32.mrf.mxu0
    %v606 = vadd.f32 0.0, %v605
    %607 = vdwg.mxu0
    %v608 = vmax.f32 %v525, %v580
    %v609 = vmax.f32 %v548, %v603
    %v610 = vmax.f32 %v528, %v583
    %v611 = vmax.f32 %v551, %v606
    %v612 = vld [vmem:[%s4] sm:$0xff]
    %v613 = vld [vmem:[%s4 + $0x8] sm:$0xff]
    %v614 = vld [vmem:[%s4 + $0x10] sm:$0xff]
    %v615 = vld [vmem:[%s4 + $0x18] sm:$0xff]
    %v616 = vld [vmem:[%s4 + $0x20] sm:$0xff]
    %v617 = vld [vmem:[%s4 + $0x28] sm:$0xff]
    %v618 = vld [vmem:[%s4 + $0x30] sm:$0xff]
    %v619 = vld [vmem:[%s4 + $0x38] sm:$0xff]
    %v620 = vld [vmem:[%s4 + $0x40] sm:$0xff]
    %v621 = vld [vmem:[%s4 + $0x48] sm:$0xff]
    %v622 = vld [vmem:[%s4 + $0x50] sm:$0xff]
    %v623 = vld [vmem:[%s4 + $0x58] sm:$0xff]
    %v624 = vld [vmem:[%s4 + $0x60] sm:$0xff]
    %v625 = vld [vmem:[%s4 + $0x68] sm:$0xff]
    %v626 = vld [vmem:[%s4 + $0x70] sm:$0xff]
    %v627 = vld [vmem:[%s4 + $0x78] sm:$0xff]
    %v628 = vld [vmem:[%s4 + $0x80] sm:$0xff]
    %v629 = vld [vmem:[%s4 + $0x88] sm:$0xff]
    %v630 = vld [vmem:[%s4 + $0x90] sm:$0xff]
    %v631 = vld [vmem:[%s4 + $0x98] sm:$0xff]
    %v632 = vld [vmem:[%s4 + $0xa0] sm:$0xff]
    %v633 = vld [vmem:[%s4 + $0xa8] sm:$0xff]
    %v634 = vld [vmem:[%s4 + $0xb0] sm:$0xff]
    %v635 = vld [vmem:[%s4 + $0xb8] sm:$0xff]
    %v636 = vld [vmem:[%s4 + $0xc0] sm:$0xff]
    %v637 = vld [vmem:[%s4 + $0xc8] sm:$0xff]
    %v638 = vld [vmem:[%s4 + $0xd0] sm:$0xff]
    %v639 = vld [vmem:[%s4 + $0xd8] sm:$0xff]
    %v640 = vld [vmem:[%s4 + $0xe0] sm:$0xff]
    %v641 = vld [vmem:[%s4 + $0xe8] sm:$0xff]
    %vm642 = vcmask 916480
    %v644 = vsel %vm642, %v609, 0
    %v647 = vsel %vm642, %v611, 0
    %649 = vmatpush.msra.mxu0 %v627
    %650 = vmatpush.msra.mxu0 %v626
    %651 = vmatpush.msra.mxu0 %v625
    %652 = vmatpush.msra.mxu0 %v624
    %653 = vmatpush.msra.mxu0 %v623
    %654 = vmatpush.msra.mxu0 %v622
    %655 = vmatpush.msra.mxu0 %v621
    %656 = vmatpush.msra.mxu0 %v620
    %657 = vmatpush.msra.mxu0 %v619
    %658 = vmatpush.msra.mxu0 %v618
    %659 = vmatpush.msra.mxu0 %v617
    %660 = vmatpush.msra.mxu0 %v616
    %661 = vmatpush.msra.mxu0 %v615
    %662 = vmatpush.msra.mxu0 %v614
    %663 = vmatpush.msra.mxu0 %v613
    %664 = vmatpush.msra.mxu0 %v612
    %665 = vmatmul.f32.gmra.mxu0 %v608
    %v666 = vpop.f32.mrf.mxu0
    %v667 = vadd.f32 0.0, %v666
    %668 = vmatmul.f32.gmra.mxu0 %v610
    %v669 = vpop.f32.mrf.mxu0
    %v670 = vadd.f32 0.0, %v669
    %671 = vdwg.mxu0
    %672 = vmatpush.msra.mxu0 0.0
    %673 = vmatpush.msra.mxu0 0.0
    %674 = vmatpush.msra.mxu0 %v641
    %675 = vmatpush.msra.mxu0 %v640
    %676 = vmatpush.msra.mxu0 %v639
    %677 = vmatpush.msra.mxu0 %v638
    %678 = vmatpush.msra.mxu0 %v637
    %679 = vmatpush.msra.mxu0 %v636
    %680 = vmatpush.msra.mxu0 %v635
    %681 = vmatpush.msra.mxu0 %v634
    %682 = vmatpush.msra.mxu0 %v633
    %683 = vmatpush.msra.mxu0 %v632
    %684 = vmatpush.msra.mxu0 %v631
    %685 = vmatpush.msra.mxu0 %v630
    %686 = vmatpush.msra.mxu0 %v629
    %687 = vmatpush.msra.mxu0 %v628
    %688 = vmatmul.f32.gmra.mxu0 %v644
    %v689 = vpop.f32.mrf.mxu0
    %v690 = vadd.f32 %v667, %v689
    %691 = vmatmul.f32.gmra.mxu0 %v647
    %v692 = vpop.f32.mrf.mxu0
    %v693 = vadd.f32 %v670, %v692
    %694 = vdwg.mxu0
    %s695 = scalar_lea.vmem %s4, 240
    %v696 = vld [vmem:[%s695] sm:$0xff]
    %v697 = vld [vmem:[%s695 + $0x8] sm:$0xff]
    %v698 = vld [vmem:[%s695 + $0x10] sm:$0xff]
    %v699 = vld [vmem:[%s695 + $0x18] sm:$0xff]
    %v700 = vld [vmem:[%s695 + $0x20] sm:$0xff]
    %v701 = vld [vmem:[%s695 + $0x28] sm:$0xff]
    %v702 = vld [vmem:[%s695 + $0x30] sm:$0xff]
    %v703 = vld [vmem:[%s695 + $0x38] sm:$0xff]
    %v704 = vld [vmem:[%s695 + $0x40] sm:$0xff]
    %v705 = vld [vmem:[%s695 + $0x48] sm:$0xff]
    %v706 = vld [vmem:[%s695 + $0x50] sm:$0xff]
    %v707 = vld [vmem:[%s695 + $0x58] sm:$0xff]
    %v708 = vld [vmem:[%s695 + $0x60] sm:$0xff]
    %v709 = vld [vmem:[%s695 + $0x68] sm:$0xff]
    %v710 = vld [vmem:[%s695 + $0x70] sm:$0xff]
    %v711 = vld [vmem:[%s695 + $0x78] sm:$0xff]
    %v712 = vld [vmem:[%s695 + $0x80] sm:$0xff]
    %v713 = vld [vmem:[%s695 + $0x88] sm:$0xff]
    %v714 = vld [vmem:[%s695 + $0x90] sm:$0xff]
    %v715 = vld [vmem:[%s695 + $0x98] sm:$0xff]
    %v716 = vld [vmem:[%s695 + $0xa0] sm:$0xff]
    %v717 = vld [vmem:[%s695 + $0xa8] sm:$0xff]
    %v718 = vld [vmem:[%s695 + $0xb0] sm:$0xff]
    %v719 = vld [vmem:[%s695 + $0xb8] sm:$0xff]
    %v720 = vld [vmem:[%s695 + $0xc0] sm:$0xff]
    %v721 = vld [vmem:[%s695 + $0xc8] sm:$0xff]
    %v722 = vld [vmem:[%s695 + $0xd0] sm:$0xff]
    %v723 = vld [vmem:[%s695 + $0xd8] sm:$0xff]
    %v724 = vld [vmem:[%s695 + $0xe0] sm:$0xff]
    %v725 = vld [vmem:[%s695 + $0xe8] sm:$0xff]
    %726 = vmatpush.msra.mxu0 %v711
    %727 = vmatpush.msra.mxu0 %v710
    %728 = vmatpush.msra.mxu0 %v709
    %729 = vmatpush.msra.mxu0 %v708
    %730 = vmatpush.msra.mxu0 %v707
    %731 = vmatpush.msra.mxu0 %v706
    %732 = vmatpush.msra.mxu0 %v705
    %733 = vmatpush.msra.mxu0 %v704
    %734 = vmatpush.msra.mxu0 %v703
    %735 = vmatpush.msra.mxu0 %v702
    %736 = vmatpush.msra.mxu0 %v701
    %737 = vmatpush.msra.mxu0 %v700
    %738 = vmatpush.msra.mxu0 %v699
    %739 = vmatpush.msra.mxu0 %v698
    %740 = vmatpush.msra.mxu0 %v697
    %741 = vmatpush.msra.mxu0 %v696
    %742 = vmatmul.f32.gmra.mxu0 %v608
    %v743 = vpop.f32.mrf.mxu0
    %v744 = vadd.f32 0.0, %v743
    %745 = vmatmul.f32.gmra.mxu0 %v610
    %v746 = vpop.f32.mrf.mxu0
    %v747 = vadd.f32 0.0, %v746
    %748 = vdwg.mxu0
    %749 = vmatpush.msra.mxu0 0.0
    %750 = vmatpush.msra.mxu0 0.0
    %751 = vmatpush.msra.mxu0 %v725
    %752 = vmatpush.msra.mxu0 %v724
    %753 = vmatpush.msra.mxu0 %v723
    %754 = vmatpush.msra.mxu0 %v722
    %755 = vmatpush.msra.mxu0 %v721
    %756 = vmatpush.msra.mxu0 %v720
    %757 = vmatpush.msra.mxu0 %v719
    %758 = vmatpush.msra.mxu0 %v718
    %759 = vmatpush.msra.mxu0 %v717
    %760 = vmatpush.msra.mxu0 %v716
    %761 = vmatpush.msra.mxu0 %v715
    %762 = vmatpush.msra.mxu0 %v714
    %763 = vmatpush.msra.mxu0 %v713
    %764 = vmatpush.msra.mxu0 %v712
    %765 = vmatmul.f32.gmra.mxu0 %v644
    %v766 = vpop.f32.mrf.mxu0
    %v767 = vadd.f32 %v744, %v766
    %768 = vmatmul.f32.gmra.mxu0 %v647
    %v769 = vpop.f32.mrf.mxu0
    %v770 = vadd.f32 %v747, %v769
    %771 = vdwg.mxu0
    %v772 = vmax.f32 %v690, %v767
    %v773 = vmax.f32 %v693, %v770
    %v774 = vmax.f32 %v772, 0.0
    %v775 = vmax.f32 %v773, 0.0
    %v776 = vld [vmem:[%s5] sm:$0xff]
    %v777 = vld [vmem:[%s5 + $0x8] sm:$0xff]
    %v778 = vld [vmem:[%s5 + $0x10] sm:$0xff]
    %v779 = vld [vmem:[%s5 + $0x18] sm:$0xff]
    %v780 = vld [vmem:[%s5 + $0x20] sm:$0xff]
    %v781 = vld [vmem:[%s5 + $0x28] sm:$0xff]
    %v782 = vld [vmem:[%s5 + $0x30] sm:$0xff]
    %v783 = vld [vmem:[%s5 + $0x38] sm:$0xff]
    %v784 = vld [vmem:[%s5 + $0x40] sm:$0xff]
    %v785 = vld [vmem:[%s5 + $0x48] sm:$0xff]
    %v786 = vld [vmem:[%s5 + $0x50] sm:$0xff]
    %v787 = vld [vmem:[%s5 + $0x58] sm:$0xff]
    %v788 = vld [vmem:[%s5 + $0x60] sm:$0xff]
    %v789 = vld [vmem:[%s5 + $0x68] sm:$0xff]
    %v790 = vld [vmem:[%s5 + $0x70] sm:$0xff]
    %v791 = vld [vmem:[%s5 + $0x78] sm:$0xff]
    %v792 = vld [vmem:[%s5 + $0x80] sm:$0xff]
    %v793 = vld [vmem:[%s5 + $0x88] sm:$0xff]
    %v794 = vld [vmem:[%s5 + $0x90] sm:$0xff]
    %v795 = vld [vmem:[%s5 + $0x98] sm:$0xff]
    %v796 = vld [vmem:[%s5 + $0xa0] sm:$0xff]
    %v797 = vld [vmem:[%s5 + $0xa8] sm:$0xff]
    %v798 = vld [vmem:[%s5 + $0xb0] sm:$0xff]
    %v799 = vld [vmem:[%s5 + $0xb8] sm:$0xff]
    %v800 = vld [vmem:[%s5 + $0xc0] sm:$0xff]
    %v801 = vld [vmem:[%s5 + $0xc8] sm:$0xff]
    %v802 = vld [vmem:[%s5 + $0xd0] sm:$0xff]
    %v803 = vld [vmem:[%s5 + $0xd8] sm:$0xff]
    %v804 = vld [vmem:[%s5 + $0xe0] sm:$0xff]
    %v805 = vld [vmem:[%s5 + $0xe8] sm:$0xff]
    %s806 = scalar_lea.vmem %s5, 240
    %v807 = vld [vmem:[%s806] sm:$0xff]
    %v808 = vld [vmem:[%s806 + $0x8] sm:$0xff]
    %v809 = vld [vmem:[%s806 + $0x10] sm:$0xff]
    %v810 = vld [vmem:[%s806 + $0x18] sm:$0xff]
    %v811 = vld [vmem:[%s806 + $0x20] sm:$0xff]
    %v812 = vld [vmem:[%s806 + $0x28] sm:$0xff]
    %v813 = vld [vmem:[%s806 + $0x30] sm:$0xff]
    %v814 = vld [vmem:[%s806 + $0x38] sm:$0xff]
    %v815 = vld [vmem:[%s806 + $0x40] sm:$0xff]
    %v816 = vld [vmem:[%s806 + $0x48] sm:$0xff]
    %v817 = vld [vmem:[%s806 + $0x50] sm:$0xff]
    %v818 = vld [vmem:[%s806 + $0x58] sm:$0xff]
    %v819 = vld [vmem:[%s806 + $0x60] sm:$0xff]
    %v820 = vld [vmem:[%s806 + $0x68] sm:$0xff]
    %v821 = vld [vmem:[%s806 + $0x70] sm:$0xff]
    %v822 = vld [vmem:[%s806 + $0x78] sm:$0xff]
    %v823 = vld [vmem:[%s806 + $0x80] sm:$0xff]
    %v824 = vld [vmem:[%s806 + $0x88] sm:$0xff]
    %v825 = vld [vmem:[%s806 + $0x90] sm:$0xff]
    %v826 = vld [vmem:[%s806 + $0x98] sm:$0xff]
    %v827 = vld [vmem:[%s806 + $0xa0] sm:$0xff]
    %v828 = vld [vmem:[%s806 + $0xa8] sm:$0xff]
    %v829 = vld [vmem:[%s806 + $0xb0] sm:$0xff]
    %v830 = vld [vmem:[%s806 + $0xb8] sm:$0xff]
    %v831 = vld [vmem:[%s806 + $0xc0] sm:$0xff]
    %v832 = vld [vmem:[%s806 + $0xc8] sm:$0xff]
    %v833 = vld [vmem:[%s806 + $0xd0] sm:$0xff]
    %v834 = vld [vmem:[%s806 + $0xd8] sm:$0xff]
    %v835 = vld [vmem:[%s806 + $0xe0] sm:$0xff]
    %v836 = vld [vmem:[%s806 + $0xe8] sm:$0xff]
    %v839 = vrot.slane %v774, 1
    %v840 = vrot.slane %v775, 1
    %v841 = vsel %vm88, %v839, %v840
    %vm842 = vcmask 982016
    %v843 = vsel %vm842, %v841, 0
    %845 = vmatpush.msra.mxu0 0.0
    %846 = vmatpush.msra.mxu0 %v835
    %847 = vmatpush.msra.mxu0 %v833
    %848 = vmatpush.msra.mxu0 %v831
    %849 = vmatpush.msra.mxu0 %v829
    %850 = vmatpush.msra.mxu0 %v827
    %851 = vmatpush.msra.mxu0 %v825
    %852 = vmatpush.msra.mxu0 %v823
    %853 = vmatpush.msra.mxu0 %v821
    %854 = vmatpush.msra.mxu0 %v819
    %855 = vmatpush.msra.mxu0 %v817
    %856 = vmatpush.msra.mxu0 %v815
    %857 = vmatpush.msra.mxu0 %v813
    %858 = vmatpush.msra.mxu0 %v811
    %859 = vmatpush.msra.mxu0 %v809
    %860 = vmatpush.msra.mxu0 %v807
    %861 = vmatmul.f32.gmra.mxu0 %v843
    %v862 = vpop.f32.mrf.mxu0
    %v863 = vadd.f32 0.0, %v862
    %864 = vdwg.mxu0
    %865 = vmatpush.msra.mxu0 0.0
    %866 = vmatpush.msra.mxu0 %v836
    %867 = vmatpush.msra.mxu0 %v834
    %868 = vmatpush.msra.mxu0 %v832
    %869 = vmatpush.msra.mxu0 %v830
    %870 = vmatpush.msra.mxu0 %v828
    %871 = vmatpush.msra.mxu0 %v826
    %872 = vmatpush.msra.mxu0 %v824
    %873 = vmatpush.msra.mxu0 %v822
    %874 = vmatpush.msra.mxu0 %v820
    %875 = vmatpush.msra.mxu0 %v818
    %876 = vmatpush.msra.mxu0 %v816
    %877 = vmatpush.msra.mxu0 %v814
    %878 = vmatpush.msra.mxu0 %v812
    %879 = vmatpush.msra.mxu0 %v810
    %880 = vmatpush.msra.mxu0 %v808
    %881 = vmatmul.f32.gmra.mxu0 %v843
    %v882 = vpop.f32.mrf.mxu0
    %v883 = vadd.f32 0.0, %v882
    %884 = vdwg.mxu0
    %v885 = vsel %vm842, %v774, 0
    %887 = vmatpush.msra.mxu0 0.0
    %888 = vmatpush.msra.mxu0 %v804
    %889 = vmatpush.msra.mxu0 %v802
    %890 = vmatpush.msra.mxu0 %v800
    %891 = vmatpush.msra.mxu0 %v798
    %892 = vmatpush.msra.mxu0 %v796
    %893 = vmatpush.msra.mxu0 %v794
    %894 = vmatpush.msra.mxu0 %v792
    %895 = vmatpush.msra.mxu0 %v790
    %896 = vmatpush.msra.mxu0 %v788
    %897 = vmatpush.msra.mxu0 %v786
    %898 = vmatpush.msra.mxu0 %v784
    %899 = vmatpush.msra.mxu0 %v782
    %900 = vmatpush.msra.mxu0 %v780
    %901 = vmatpush.msra.mxu0 %v778
    %902 = vmatpush.msra.mxu0 %v776
    %903 = vmatmul.f32.gmra.mxu0 %v885
    %v904 = vpop.f32.mrf.mxu0
    %v905 = vadd.f32 %v863, %v904
    %906 = vdwg.mxu0
    %907 = vmatpush.msra.mxu0 0.0
    %908 = vmatpush.msra.mxu0 %v805
    %909 = vmatpush.msra.mxu0 %v803
    %910 = vmatpush.msra.mxu0 %v801
    %911 = vmatpush.msra.mxu0 %v799
    %912 = vmatpush.msra.mxu0 %v797
    %913 = vmatpush.msra.mxu0 %v795
    %914 = vmatpush.msra.mxu0 %v793
    %915 = vmatpush.msra.mxu0 %v791
    %916 = vmatpush.msra.mxu0 %v789
    %917 = vmatpush.msra.mxu0 %v787
    %918 = vmatpush.msra.mxu0 %v785
    %919 = vmatpush.msra.mxu0 %v783
    %920 = vmatpush.msra.mxu0 %v781
    %921 = vmatpush.msra.mxu0 %v779
    %922 = vmatpush.msra.mxu0 %v777
    %923 = vmatmul.f32.gmra.mxu0 %v885
    %v924 = vpop.f32.mrf.mxu0
    %v925 = vadd.f32 %v883, %v924
    %926 = vdwg.mxu0
    %s927 = scalar_lea.vmem %s5, 480
    %v928 = vld [vmem:[%s927] sm:$0xff]
    %v929 = vld [vmem:[%s927 + $0x8] sm:$0xff]
    %v930 = vld [vmem:[%s927 + $0x10] sm:$0xff]
    %v931 = vld [vmem:[%s927 + $0x18] sm:$0xff]
    %v932 = vld [vmem:[%s927 + $0x20] sm:$0xff]
    %v933 = vld [vmem:[%s927 + $0x28] sm:$0xff]
    %v934 = vld [vmem:[%s927 + $0x30] sm:$0xff]
    %v935 = vld [vmem:[%s927 + $0x38] sm:$0xff]
    %v936 = vld [vmem:[%s927 + $0x40] sm:$0xff]
    %v937 = vld [vmem:[%s927 + $0x48] sm:$0xff]
    %v938 = vld [vmem:[%s927 + $0x50] sm:$0xff]
    %v939 = vld [vmem:[%s927 + $0x58] sm:$0xff]
    %v940 = vld [vmem:[%s927 + $0x60] sm:$0xff]
    %v941 = vld [vmem:[%s927 + $0x68] sm:$0xff]
    %v942 = vld [vmem:[%s927 + $0x70] sm:$0xff]
    %v943 = vld [vmem:[%s927 + $0x78] sm:$0xff]
    %v944 = vld [vmem:[%s927 + $0x80] sm:$0xff]
    %v945 = vld [vmem:[%s927 + $0x88] sm:$0xff]
    %v946 = vld [vmem:[%s927 + $0x90] sm:$0xff]
    %v947 = vld [vmem:[%s927 + $0x98] sm:$0xff]
    %v948 = vld [vmem:[%s927 + $0xa0] sm:$0xff]
    %v949 = vld [vmem:[%s927 + $0xa8] sm:$0xff]
    %v950 = vld [vmem:[%s927 + $0xb0] sm:$0xff]
    %v951 = vld [vmem:[%s927 + $0xb8] sm:$0xff]
    %v952 = vld [vmem:[%s927 + $0xc0] sm:$0xff]
    %v953 = vld [vmem:[%s927 + $0xc8] sm:$0xff]
    %v954 = vld [vmem:[%s927 + $0xd0] sm:$0xff]
    %v955 = vld [vmem:[%s927 + $0xd8] sm:$0xff]
    %v956 = vld [vmem:[%s927 + $0xe0] sm:$0xff]
    %v957 = vld [vmem:[%s927 + $0xe8] sm:$0xff]
    %v958 = vrot.slane %v774, 2
    %v959 = vrot.slane %v775, 2
    %v960 = vsel %vm235, %v958, %v959
    %v961 = vsel %vm842, %v960, 0
    %963 = vmatpush.msra.mxu0 0.0
    %964 = vmatpush.msra.mxu0 %v956
    %965 = vmatpush.msra.mxu0 %v954
    %966 = vmatpush.msra.mxu0 %v952
    %967 = vmatpush.msra.mxu0 %v950
    %968 = vmatpush.msra.mxu0 %v948
    %969 = vmatpush.msra.mxu0 %v946
    %970 = vmatpush.msra.mxu0 %v944
    %971 = vmatpush.msra.mxu0 %v942
    %972 = vmatpush.msra.mxu0 %v940
    %973 = vmatpush.msra.mxu0 %v938
    %974 = vmatpush.msra.mxu0 %v936
    %975 = vmatpush.msra.mxu0 %v934
    %976 = vmatpush.msra.mxu0 %v932
    %977 = vmatpush.msra.mxu0 %v930
    %978 = vmatpush.msra.mxu0 %v928
    %979 = vmatmul.f32.gmra.mxu0 %v961
    %v980 = vpop.f32.mrf.mxu0
    %v981 = vadd.f32 0.0, %v980
    %982 = vdwg.mxu0
    %983 = vmatpush.msra.mxu0 0.0
    %984 = vmatpush.msra.mxu0 %v957
    %985 = vmatpush.msra.mxu0 %v955
    %986 = vmatpush.msra.mxu0 %v953
    %987 = vmatpush.msra.mxu0 %v951
    %988 = vmatpush.msra.mxu0 %v949
    %989 = vmatpush.msra.mxu0 %v947
    %990 = vmatpush.msra.mxu0 %v945
    %991 = vmatpush.msra.mxu0 %v943
    %992 = vmatpush.msra.mxu0 %v941
    %993 = vmatpush.msra.mxu0 %v939
    %994 = vmatpush.msra.mxu0 %v937
    %995 = vmatpush.msra.mxu0 %v935
    %996 = vmatpush.msra.mxu0 %v933
    %997 = vmatpush.msra.mxu0 %v931
    %998 = vmatpush.msra.mxu0 %v929
    %999 = vmatmul.f32.gmra.mxu0 %v961
    %v1000 = vpop.f32.mrf.mxu0
    %v1001 = vadd.f32 0.0, %v1000
    %1002 = vdwg.mxu0
    %v1003 = vadd.f32 %v905, %v981
    %v1004 = vadd.f32 %v925, %v1001
    %s1005 = scalar_lea.vmem %s5, 720
    %v1006 = vld [vmem:[%s1005] sm:$0xff]
    %v1007 = vld [vmem:[%s1005 + $0x8] sm:$0xff]
    %v1008 = vld [vmem:[%s1005 + $0x10] sm:$0xff]
    %v1009 = vld [vmem:[%s1005 + $0x18] sm:$0xff]
    %v1010 = vld [vmem:[%s1005 + $0x20] sm:$0xff]
    %v1011 = vld [vmem:[%s1005 + $0x28] sm:$0xff]
    %v1012 = vld [vmem:[%s1005 + $0x30] sm:$0xff]
    %v1013 = vld [vmem:[%s1005 + $0x38] sm:$0xff]
    %v1014 = vld [vmem:[%s1005 + $0x40] sm:$0xff]
    %v1015 = vld [vmem:[%s1005 + $0x48] sm:$0xff]
    %v1016 = vld [vmem:[%s1005 + $0x50] sm:$0xff]
    %v1017 = vld [vmem:[%s1005 + $0x58] sm:$0xff]
    %v1018 = vld [vmem:[%s1005 + $0x60] sm:$0xff]
    %v1019 = vld [vmem:[%s1005 + $0x68] sm:$0xff]
    %v1020 = vld [vmem:[%s1005 + $0x70] sm:$0xff]
    %v1021 = vld [vmem:[%s1005 + $0x78] sm:$0xff]
    %v1022 = vld [vmem:[%s1005 + $0x80] sm:$0xff]
    %v1023 = vld [vmem:[%s1005 + $0x88] sm:$0xff]
    %v1024 = vld [vmem:[%s1005 + $0x90] sm:$0xff]
    %v1025 = vld [vmem:[%s1005 + $0x98] sm:$0xff]
    %v1026 = vld [vmem:[%s1005 + $0xa0] sm:$0xff]
    %v1027 = vld [vmem:[%s1005 + $0xa8] sm:$0xff]
    %v1028 = vld [vmem:[%s1005 + $0xb0] sm:$0xff]
    %v1029 = vld [vmem:[%s1005 + $0xb8] sm:$0xff]
    %v1030 = vld [vmem:[%s1005 + $0xc0] sm:$0xff]
    %v1031 = vld [vmem:[%s1005 + $0xc8] sm:$0xff]
    %v1032 = vld [vmem:[%s1005 + $0xd0] sm:$0xff]
    %v1033 = vld [vmem:[%s1005 + $0xd8] sm:$0xff]
    %v1034 = vld [vmem:[%s1005 + $0xe0] sm:$0xff]
    %v1035 = vld [vmem:[%s1005 + $0xe8] sm:$0xff]
    %v1036 = vrot.slane %v774, 3
    %v1037 = vrot.slane %v775, 3
    %v1038 = vsel %vm322, %v1036, %v1037
    %v1039 = vsel %vm842, %v1038, 0
    %1041 = vmatpush.msra.mxu0 0.0
    %1042 = vmatpush.msra.mxu0 %v1034
    %1043 = vmatpush.msra.mxu0 %v1032
    %1044 = vmatpush.msra.mxu0 %v1030
    %1045 = vmatpush.msra.mxu0 %v1028
    %1046 = vmatpush.msra.mxu0 %v1026
    %1047 = vmatpush.msra.mxu0 %v1024
    %1048 = vmatpush.msra.mxu0 %v1022
    %1049 = vmatpush.msra.mxu0 %v1020
    %1050 = vmatpush.msra.mxu0 %v1018
    %1051 = vmatpush.msra.mxu0 %v1016
    %1052 = vmatpush.msra.mxu0 %v1014
    %1053 = vmatpush.msra.mxu0 %v1012
    %1054 = vmatpush.msra.mxu0 %v1010
    %1055 = vmatpush.msra.mxu0 %v1008
    %1056 = vmatpush.msra.mxu0 %v1006
    %1057 = vmatmul.f32.gmra.mxu0 %v1039
    %v1058 = vpop.f32.mrf.mxu0
    %v1059 = vadd.f32 0.0, %v1058
    %1060 = vdwg.mxu0
    %1061 = vmatpush.msra.mxu0 0.0
    %1062 = vmatpush.msra.mxu0 %v1035
    %1063 = vmatpush.msra.mxu0 %v1033
    %1064 = vmatpush.msra.mxu0 %v1031
    %1065 = vmatpush.msra.mxu0 %v1029
    %1066 = vmatpush.msra.mxu0 %v1027
    %1067 = vmatpush.msra.mxu0 %v1025
    %1068 = vmatpush.msra.mxu0 %v1023
    %1069 = vmatpush.msra.mxu0 %v1021
    %1070 = vmatpush.msra.mxu0 %v1019
    %1071 = vmatpush.msra.mxu0 %v1017
    %1072 = vmatpush.msra.mxu0 %v1015
    %1073 = vmatpush.msra.mxu0 %v1013
    %1074 = vmatpush.msra.mxu0 %v1011
    %1075 = vmatpush.msra.mxu0 %v1009
    %1076 = vmatpush.msra.mxu0 %v1007
    %1077 = vmatmul.f32.gmra.mxu0 %v1039
    %v1078 = vpop.f32.mrf.mxu0
    %v1079 = vadd.f32 0.0, %v1078
    %1080 = vdwg.mxu0
    %v1081 = vadd.f32 %v1003, %v1059
    %v1082 = vadd.f32 %v1004, %v1079
    %s1083 = scalar_lea.vmem %s5, 960
    %v1084 = vld [vmem:[%s1083] sm:$0xff]
    %v1085 = vld [vmem:[%s1083 + $0x8] sm:$0xff]
    %v1086 = vld [vmem:[%s1083 + $0x10] sm:$0xff]
    %v1087 = vld [vmem:[%s1083 + $0x18] sm:$0xff]
    %v1088 = vld [vmem:[%s1083 + $0x20] sm:$0xff]
    %v1089 = vld [vmem:[%s1083 + $0x28] sm:$0xff]
    %v1090 = vld [vmem:[%s1083 + $0x30] sm:$0xff]
    %v1091 = vld [vmem:[%s1083 + $0x38] sm:$0xff]
    %v1092 = vld [vmem:[%s1083 + $0x40] sm:$0xff]
    %v1093 = vld [vmem:[%s1083 + $0x48] sm:$0xff]
    %v1094 = vld [vmem:[%s1083 + $0x50] sm:$0xff]
    %v1095 = vld [vmem:[%s1083 + $0x58] sm:$0xff]
    %v1096 = vld [vmem:[%s1083 + $0x60] sm:$0xff]
    %v1097 = vld [vmem:[%s1083 + $0x68] sm:$0xff]
    %v1098 = vld [vmem:[%s1083 + $0x70] sm:$0xff]
    %v1099 = vld [vmem:[%s1083 + $0x78] sm:$0xff]
    %v1100 = vld [vmem:[%s1083 + $0x80] sm:$0xff]
    %v1101 = vld [vmem:[%s1083 + $0x88] sm:$0xff]
    %v1102 = vld [vmem:[%s1083 + $0x90] sm:$0xff]
    %v1103 = vld [vmem:[%s1083 + $0x98] sm:$0xff]
    %v1104 = vld [vmem:[%s1083 + $0xa0] sm:$0xff]
    %v1105 = vld [vmem:[%s1083 + $0xa8] sm:$0xff]
    %v1106 = vld [vmem:[%s1083 + $0xb0] sm:$0xff]
    %v1107 = vld [vmem:[%s1083 + $0xb8] sm:$0xff]
    %v1108 = vld [vmem:[%s1083 + $0xc0] sm:$0xff]
    %v1109 = vld [vmem:[%s1083 + $0xc8] sm:$0xff]
    %v1110 = vld [vmem:[%s1083 + $0xd0] sm:$0xff]
    %v1111 = vld [vmem:[%s1083 + $0xd8] sm:$0xff]
    %v1112 = vld [vmem:[%s1083 + $0xe0] sm:$0xff]
    %v1113 = vld [vmem:[%s1083 + $0xe8] sm:$0xff]
    %v1114 = vrot.slane %v774, 4
    %v1115 = vrot.slane %v775, 4
    %v1116 = vsel %vm103, %v1114, %v1115
    %v1117 = vsel %vm842, %v1116, 0
    %1119 = vmatpush.msra.mxu0 0.0
    %1120 = vmatpush.msra.mxu0 %v1112
    %1121 = vmatpush.msra.mxu0 %v1110
    %1122 = vmatpush.msra.mxu0 %v1108
    %1123 = vmatpush.msra.mxu0 %v1106
    %1124 = vmatpush.msra.mxu0 %v1104
    %1125 = vmatpush.msra.mxu0 %v1102
    %1126 = vmatpush.msra.mxu0 %v1100
    %1127 = vmatpush.msra.mxu0 %v1098
    %1128 = vmatpush.msra.mxu0 %v1096
    %1129 = vmatpush.msra.mxu0 %v1094
    %1130 = vmatpush.msra.mxu0 %v1092
    %1131 = vmatpush.msra.mxu0 %v1090
    %1132 = vmatpush.msra.mxu0 %v1088
    %1133 = vmatpush.msra.mxu0 %v1086
    %1134 = vmatpush.msra.mxu0 %v1084
    %1135 = vmatmul.f32.gmra.mxu0 %v1117
    %v1136 = vpop.f32.mrf.mxu0
    %v1137 = vadd.f32 0.0, %v1136
    %1138 = vdwg.mxu0
    %1139 = vmatpush.msra.mxu0 0.0
    %1140 = vmatpush.msra.mxu0 %v1113
    %1141 = vmatpush.msra.mxu0 %v1111
    %1142 = vmatpush.msra.mxu0 %v1109
    %1143 = vmatpush.msra.mxu0 %v1107
    %1144 = vmatpush.msra.mxu0 %v1105
    %1145 = vmatpush.msra.mxu0 %v1103
    %1146 = vmatpush.msra.mxu0 %v1101
    %1147 = vmatpush.msra.mxu0 %v1099
    %1148 = vmatpush.msra.mxu0 %v1097
    %1149 = vmatpush.msra.mxu0 %v1095
    %1150 = vmatpush.msra.mxu0 %v1093
    %1151 = vmatpush.msra.mxu0 %v1091
    %1152 = vmatpush.msra.mxu0 %v1089
    %1153 = vmatpush.msra.mxu0 %v1087
    %1154 = vmatpush.msra.mxu0 %v1085
    %1155 = vmatmul.f32.gmra.mxu0 %v1117
    %v1156 = vpop.f32.mrf.mxu0
    %v1157 = vadd.f32 0.0, %v1156
    %1158 = vdwg.mxu0
    %v1159 = vadd.f32 %v1081, %v1137
    %v1160 = vadd.f32 %v1082, %v1157
    %v1161 = vld [vmem:[%s6] sm:$0x3]
    %v1163 = vperm.slane %v1161, 0
    %v1164 = vperm.slane %v1161, 1
    %v1167 = vadd.f32 %v1159, %v1163
    %v1168 = vadd.f32 %v1160, %v1164
    %v1169 = vld [vmem:[%s7] sm:$0xf]
    %vm1170 = vcmask 64512
    %v1172 = vsel %vm1170, %v1169, 0
    %1174 = vmatpush.msra.mxu0 0.0
    %1175 = vmatpush.msra.mxu0 0.0
    %1176 = vmatpush.msra.mxu0 0.0
    %1177 = vmatpush.msra.mxu0 0.0
    %1178 = vmatpush.msra.mxu0 0.0
    %1179 = vmatpush.msra.mxu0 0.0
    %1180 = vmatpush.msra.mxu0 0.0
    %1181 = vmatpush.msra.mxu0 0.0
    %1182 = vmatpush.msra.mxu0 0.0
    %1183 = vmatpush.msra.mxu0 0.0
    %1184 = vmatpush.msra.mxu0 0.0
    %1185 = vmatpush.msra.mxu0 0.0
    %1186 = vmatpush.msra.mxu0 0.0
    %1187 = vmatpush.msra.mxu0 0.0
    %1188 = vmatpush.msra.mxu0 0.0
    %1189 = vmatpush.msra.mxu0 %v1167
    %1190 = vmatmul.f32.gmra.mxu0 %v1172
    %v1191 = vpop.f32.mrf.mxu0
    %v1192 = vadd.f32 0.0, %v1191
    %1193 = vdwg.mxu0
    %1194 = vmatpush.msra.mxu0 0.0
    %1195 = vmatpush.msra.mxu0 0.0
    %1196 = vmatpush.msra.mxu0 0.0
    %1197 = vmatpush.msra.mxu0 0.0
    %1198 = vmatpush.msra.mxu0 0.0
    %1199 = vmatpush.msra.mxu0 0.0
    %1200 = vmatpush.msra.mxu0 0.0
    %1201 = vmatpush.msra.mxu0 0.0
    %1202 = vmatpush.msra.mxu0 0.0
    %1203 = vmatpush.msra.mxu0 0.0
    %1204 = vmatpush.msra.mxu0 0.0
    %1205 = vmatpush.msra.mxu0 0.0
    %1206 = vmatpush.msra.mxu0 0.0
    %1207 = vmatpush.msra.mxu0 0.0
    %1208 = vmatpush.msra.mxu0 0.0
    %1209 = vmatpush.msra.mxu0 %v1168
    %1210 = vmatmul.f32.gmra.mxu0 %v1172
    %v1211 = vpop.f32.mrf.mxu0
    %v1212 = vadd.f32 0.0, %v1211
    %1213 = vdwg.mxu0
    %s1214 = scalar_lea.vmem %s7, 4
    %v1215 = vld [vmem:[%s1214] sm:$0xf]
    %v1217 = vsel %vm1170, %v1215, 0
    %1219 = vmatpush.msra.mxu0 0.0
    %1220 = vmatpush.msra.mxu0 0.0
    %1221 = vmatpush.msra.mxu0 0.0
    %1222 = vmatpush.msra.mxu0 0.0
    %1223 = vmatpush.msra.mxu0 0.0
    %1224 = vmatpush.msra.mxu0 0.0
    %1225 = vmatpush.msra.mxu0 0.0
    %1226 = vmatpush.msra.mxu0 0.0
    %1227 = vmatpush.msra.mxu0 0.0
    %1228 = vmatpush.msra.mxu0 0.0
    %1229 = vmatpush.msra.mxu0 0.0
    %1230 = vmatpush.msra.mxu0 0.0
    %1231 = vmatpush.msra.mxu0 0.0
    %1232 = vmatpush.msra.mxu0 0.0
    %1233 = vmatpush.msra.mxu0 0.0
    %1234 = vmatpush.msra.mxu0 %v1167
    %1235 = vmatmul.f32.gmra.mxu0 %v1217
    %v1236 = vpop.f32.mrf.mxu0
    %v1237 = vadd.f32 0.0, %v1236
    %1238 = vdwg.mxu0
    %1239 = vmatpush.msra.mxu0 0.0
    %1240 = vmatpush.msra.mxu0 0.0
    %1241 = vmatpush.msra.mxu0 0.0
    %1242 = vmatpush.msra.mxu0 0.0
    %1243 = vmatpush.msra.mxu0 0.0
    %1244 = vmatpush.msra.mxu0 0.0
    %1245 = vmatpush.msra.mxu0 0.0
    %1246 = vmatpush.msra.mxu0 0.0
    %1247 = vmatpush.msra.mxu0 0.0
    %1248 = vmatpush.msra.mxu0 0.0
    %1249 = vmatpush.msra.mxu0 0.0
    %1250 = vmatpush.msra.mxu0 0.0
    %1251 = vmatpush.msra.mxu0 0.0
    %1252 = vmatpush.msra.mxu0 0.0
    %1253 = vmatpush.msra.mxu0 0.0
    %1254 = vmatpush.msra.mxu0 %v1168
    %1255 = vmatmul.f32.gmra.mxu0 %v1217
    %v1256 = vpop.f32.mrf.mxu0
    %v1257 = vadd.f32 0.0, %v1256
    %1258 = vdwg.mxu0
    %v1259 = vmax.f32 %v1192, %v1237
    %v1260 = vmax.f32 %v1212, %v1257
    %v1261 = vld [vmem:[%s8] sm:$0xff]
    %v1262 = vld [vmem:[%s8 + $0x8] sm:$0xff]
    %v1263 = vld [vmem:[%s8 + $0x10] sm:$0xff]
    %v1264 = vld [vmem:[%s8 + $0x18] sm:$0xff]
    %v1265 = vld [vmem:[%s8 + $0x20] sm:$0xff]
    %v1266 = vld [vmem:[%s8 + $0x28] sm:$0xff]
    %v1267 = vld [vmem:[%s8 + $0x30] sm:$0xff]
    %v1268 = vld [vmem:[%s8 + $0x38] sm:$0xff]
    %v1269 = vld [vmem:[%s8 + $0x40] sm:$0xff]
    %v1270 = vld [vmem:[%s8 + $0x48] sm:$0xff]
    %v1271 = vld [vmem:[%s8 + $0x50] sm:$0xff]
    %v1272 = vld [vmem:[%s8 + $0x58] sm:$0xff]
    %v1273 = vld [vmem:[%s8 + $0x60] sm:$0xff]
    %v1274 = vld [vmem:[%s8 + $0x68] sm:$0xff]
    %v1275 = vld [vmem:[%s8 + $0x70] sm:$0xff]
    %v1276 = vld [vmem:[%s8 + $0x78] sm:$0xff]
    %v1277 = vld [vmem:[%s8 + $0x80] sm:$0xff]
    %v1278 = vld [vmem:[%s8 + $0x88] sm:$0xff]
    %v1279 = vld [vmem:[%s8 + $0x90] sm:$0xff]
    %v1280 = vld [vmem:[%s8 + $0x98] sm:$0xff]
    %vm1281 = vcmask 261120
    %v1283 = vsel %vm1281, %v1260, 0
    %1285 = vmatpush.msra.mxu0 %v1276
    %1286 = vmatpush.msra.mxu0 %v1275
    %1287 = vmatpush.msra.mxu0 %v1274
    %1288 = vmatpush.msra.mxu0 %v1273
    %1289 = vmatpush.msra.mxu0 %v1272
    %1290 = vmatpush.msra.mxu0 %v1271
    %1291 = vmatpush.msra.mxu0 %v1270
    %1292 = vmatpush.msra.mxu0 %v1269
    %1293 = vmatpush.msra.mxu0 %v1268
    %1294 = vmatpush.msra.mxu0 %v1267
    %1295 = vmatpush.msra.mxu0 %v1266
    %1296 = vmatpush.msra.mxu0 %v1265
    %1297 = vmatpush.msra.mxu0 %v1264
    %1298 = vmatpush.msra.mxu0 %v1263
    %1299 = vmatpush.msra.mxu0 %v1262
    %1300 = vmatpush.msra.mxu0 %v1261
    %1301 = vmatmul.f32.gmra.mxu0 %v1259
    %v1302 = vpop.f32.mrf.mxu0
    %v1303 = vadd.f32 0.0, %v1302
    %1304 = vdwg.mxu0
    %1305 = vmatpush.msra.mxu0 0.0
    %1306 = vmatpush.msra.mxu0 0.0
    %1307 = vmatpush.msra.mxu0 0.0
    %1308 = vmatpush.msra.mxu0 0.0
    %1309 = vmatpush.msra.mxu0 0.0
    %1310 = vmatpush.msra.mxu0 0.0
    %1311 = vmatpush.msra.mxu0 0.0
    %1312 = vmatpush.msra.mxu0 0.0
    %1313 = vmatpush.msra.mxu0 0.0
    %1314 = vmatpush.msra.mxu0 0.0
    %1315 = vmatpush.msra.mxu0 0.0
    %1316 = vmatpush.msra.mxu0 0.0
    %1317 = vmatpush.msra.mxu0 %v1280
    %1318 = vmatpush.msra.mxu0 %v1279
    %1319 = vmatpush.msra.mxu0 %v1278
    %1320 = vmatpush.msra.mxu0 %v1277
    %1321 = vmatmul.f32.gmra.mxu0 %v1283
    %v1322 = vpop.f32.mrf.mxu0
    %v1323 = vadd.f32 %v1303, %v1322
    %1324 = vdwg.mxu0
    %s1325 = scalar_lea.vmem %s8, 160
    %v1326 = vld [vmem:[%s1325] sm:$0xff]
    %v1327 = vld [vmem:[%s1325 + $0x8] sm:$0xff]
    %v1328 = vld [vmem:[%s1325 + $0x10] sm:$0xff]
    %v1329 = vld [vmem:[%s1325 + $0x18] sm:$0xff]
    %v1330 = vld [vmem:[%s1325 + $0x20] sm:$0xff]
    %v1331 = vld [vmem:[%s1325 + $0x28] sm:$0xff]
    %v1332 = vld [vmem:[%s1325 + $0x30] sm:$0xff]
    %v1333 = vld [vmem:[%s1325 + $0x38] sm:$0xff]
    %v1334 = vld [vmem:[%s1325 + $0x40] sm:$0xff]
    %v1335 = vld [vmem:[%s1325 + $0x48] sm:$0xff]
    %v1336 = vld [vmem:[%s1325 + $0x50] sm:$0xff]
    %v1337 = vld [vmem:[%s1325 + $0x58] sm:$0xff]
    %v1338 = vld [vmem:[%s1325 + $0x60] sm:$0xff]
    %v1339 = vld [vmem:[%s1325 + $0x68] sm:$0xff]
    %v1340 = vld [vmem:[%s1325 + $0x70] sm:$0xff]
    %v1341 = vld [vmem:[%s1325 + $0x78] sm:$0xff]
    %v1342 = vld [vmem:[%s1325 + $0x80] sm:$0xff]
    %v1343 = vld [vmem:[%s1325 + $0x88] sm:$0xff]
    %v1344 = vld [vmem:[%s1325 + $0x90] sm:$0xff]
    %v1345 = vld [vmem:[%s1325 + $0x98] sm:$0xff]
    %1346 = vmatpush.msra.mxu0 %v1341
    %1347 = vmatpush.msra.mxu0 %v1340
    %1348 = vmatpush.msra.mxu0 %v1339
    %1349 = vmatpush.msra.mxu0 %v1338
    %1350 = vmatpush.msra.mxu0 %v1337
    %1351 = vmatpush.msra.mxu0 %v1336
    %1352 = vmatpush.msra.mxu0 %v1335
    %1353 = vmatpush.msra.mxu0 %v1334
    %1354 = vmatpush.msra.mxu0 %v1333
    %1355 = vmatpush.msra.mxu0 %v1332
    %1356 = vmatpush.msra.mxu0 %v1331
    %1357 = vmatpush.msra.mxu0 %v1330
    %1358 = vmatpush.msra.mxu0 %v1329
    %1359 = vmatpush.msra.mxu0 %v1328
    %1360 = vmatpush.msra.mxu0 %v1327
    %1361 = vmatpush.msra.mxu0 %v1326
    %1362 = vmatmul.f32.gmra.mxu0 %v1259
    %v1363 = vpop.f32.mrf.mxu0
    %v1364 = vadd.f32 0.0, %v1363
    %1365 = vdwg.mxu0
    %1366 = vmatpush.msra.mxu0 0.0
    %1367 = vmatpush.msra.mxu0 0.0
    %1368 = vmatpush.msra.mxu0 0.0
    %1369 = vmatpush.msra.mxu0 0.0
    %1370 = vmatpush.msra.mxu0 0.0
    %1371 = vmatpush.msra.mxu0 0.0
    %1372 = vmatpush.msra.mxu0 0.0
    %1373 = vmatpush.msra.mxu0 0.0
    %1374 = vmatpush.msra.mxu0 0.0
    %1375 = vmatpush.msra.mxu0 0.0
    %1376 = vmatpush.msra.mxu0 0.0
    %1377 = vmatpush.msra.mxu0 0.0
    %1378 = vmatpush.msra.mxu0 %v1345
    %1379 = vmatpush.msra.mxu0 %v1344
    %1380 = vmatpush.msra.mxu0 %v1343
    %1381 = vmatpush.msra.mxu0 %v1342
    %1382 = vmatmul.f32.gmra.mxu0 %v1283
    %v1383 = vpop.f32.mrf.mxu0
    %v1384 = vadd.f32 %v1364, %v1383
    %1385 = vdwg.mxu0
    %v1386 = vmax.f32 %v1323, %v1384
    %v1387 = vmax.f32 %v1386, 0.0
    %v1389 = vrot.slane %v1387, 1
    %1390 = vrot.lane.b32.xlu0 %v1389, 80
    %v1391 = vpop.permute.xlu0 %1390
    %v1393 = vrot.slane %v1387, 2
    %1394 = vrot.lane.b32.xlu0 %v1393, 32
    %v1395 = vpop.permute.xlu0 %1394
    %v1397 = vrot.slane %v1387, 3
    %1398 = vrot.lane.b32.xlu0 %v1397, 112
    %v1399 = vpop.permute.xlu0 %1398
    %vm1401 = vcmask 654336
    %v1402 = vsel %vm1401, %v1387, %v1391
    %v1403 = vsel %vm1281, %v1391, %v1395
    %v1404 = vsel %vm642, %v1403, %v1399
    %s1405 = scalar_lea.vmem %s0, 32
    %v1406 = vld [vmem:[%s1405] sm:$0xff]
    %v1407 = vld [vmem:[%s1405 + $0x8] sm:$0xff]
    %v1408 = vld [vmem:[%s1405 + $0x10] sm:$0xff]
    %v1409 = vld [vmem:[%s1405 + $0x18] sm:$0xf]
    %v1414 = vrot.slane %v1406, 1
    %v1415 = vrot.slane %v1407, 1
    %v1416 = vsel %vm88, %v1414, %v1415
    %v1417 = vrot.slane %v1408, 1
    %v1418 = vsel %vm88, %v1415, %v1417
    %v1419 = vrot.slane %v1409, 1
    %v1420 = vsel %vm88, %v1417, %v1419
    %v1421 = vsel %vm96, %v1416, 0
    %v1423 = vsel %vm96, %v1418, 0
    %v1425 = vsel %vm96, %v1420, 0
    %1427 = vmatpush.msra.mxu0 0.0
    %1428 = vmatpush.msra.mxu0 0.0
    %1429 = vmatpush.msra.mxu0 0.0
    %1430 = vmatpush.msra.mxu0 0.0
    %1431 = vmatpush.msra.mxu0 0.0
    %1432 = vmatpush.msra.mxu0 0.0
    %1433 = vmatpush.msra.mxu0 0.0
    %1434 = vmatpush.msra.mxu0 0.0
    %1435 = vmatpush.msra.mxu0 0.0
    %1436 = vmatpush.msra.mxu0 0.0
    %1437 = vmatpush.msra.mxu0 0.0
    %1438 = vmatpush.msra.mxu0 0.0
    %1439 = vmatpush.msra.mxu0 %v105
    %1440 = vmatpush.msra.mxu0 %v80
    %1441 = vmatpush.msra.mxu0 %v78
    %1442 = vmatpush.msra.mxu0 %v76
    %1443 = vmatmul.f32.gmra.mxu0 %v1421
    %v1444 = vpop.f32.mrf.mxu0
    %v1445 = vadd.f32 0.0, %v1444
    %1446 = vmatmul.f32.gmra.mxu0 %v1423
    %v1447 = vpop.f32.mrf.mxu0
    %v1448 = vadd.f32 0.0, %v1447
    %1449 = vmatmul.f32.gmra.mxu0 %v1425
    %v1450 = vpop.f32.mrf.mxu0
    %v1451 = vadd.f32 0.0, %v1450
    %1452 = vdwg.mxu0
    %1453 = vmatpush.msra.mxu0 0.0
    %1454 = vmatpush.msra.mxu0 0.0
    %1455 = vmatpush.msra.mxu0 0.0
    %1456 = vmatpush.msra.mxu0 0.0
    %1457 = vmatpush.msra.mxu0 0.0
    %1458 = vmatpush.msra.mxu0 0.0
    %1459 = vmatpush.msra.mxu0 0.0
    %1460 = vmatpush.msra.mxu0 0.0
    %1461 = vmatpush.msra.mxu0 0.0
    %1462 = vmatpush.msra.mxu0 0.0
    %1463 = vmatpush.msra.mxu0 0.0
    %1464 = vmatpush.msra.mxu0 0.0
    %1465 = vmatpush.msra.mxu0 %v108
    %1466 = vmatpush.msra.mxu0 %v81
    %1467 = vmatpush.msra.mxu0 %v79
    %1468 = vmatpush.msra.mxu0 %v77
    %1469 = vmatmul.f32.gmra.mxu0 %v1421
    %v1470 = vpop.f32.mrf.mxu0
    %v1471 = vadd.f32 0.0, %v1470
    %1472 = vmatmul.f32.gmra.mxu0 %v1423
    %v1473 = vpop.f32.mrf.mxu0
    %v1474 = vadd.f32 0.0, %v1473
    %1475 = vmatmul.f32.gmra.mxu0 %v1425
    %v1476 = vpop.f32.mrf.mxu0
    %v1477 = vadd.f32 0.0, %v1476
    %1478 = vdwg.mxu0
    %v1479 = vsel %vm96, %v1406, 0
    %v1481 = vsel %vm96, %v1407, 0
    %v1483 = vsel %vm96, %v1408, 0
    %1485 = vmatpush.msra.mxu0 0.0
    %1486 = vmatpush.msra.mxu0 0.0
    %1487 = vmatpush.msra.mxu0 0.0
    %1488 = vmatpush.msra.mxu0 0.0
    %1489 = vmatpush.msra.mxu0 0.0
    %1490 = vmatpush.msra.mxu0 0.0
    %1491 = vmatpush.msra.mxu0 0.0
    %1492 = vmatpush.msra.mxu0 0.0
    %1493 = vmatpush.msra.mxu0 0.0
    %1494 = vmatpush.msra.mxu0 0.0
    %1495 = vmatpush.msra.mxu0 0.0
    %1496 = vmatpush.msra.mxu0 0.0
    %1497 = vmatpush.msra.mxu0 %v169
    %1498 = vmatpush.msra.mxu0 %v71
    %1499 = vmatpush.msra.mxu0 %v69
    %1500 = vmatpush.msra.mxu0 %v67
    %1501 = vmatmul.f32.gmra.mxu0 %v1479
    %v1502 = vpop.f32.mrf.mxu0
    %v1503 = vadd.f32 %v1445, %v1502
    %1504 = vmatmul.f32.gmra.mxu0 %v1481
    %v1505 = vpop.f32.mrf.mxu0
    %v1506 = vadd.f32 %v1448, %v1505
    %1507 = vmatmul.f32.gmra.mxu0 %v1483
    %v1508 = vpop.f32.mrf.mxu0
    %v1509 = vadd.f32 %v1451, %v1508
    %1510 = vdwg.mxu0
    %1511 = vmatpush.msra.mxu0 0.0
    %1512 = vmatpush.msra.mxu0 0.0
    %1513 = vmatpush.msra.mxu0 0.0
    %1514 = vmatpush.msra.mxu0 0.0
    %1515 = vmatpush.msra.mxu0 0.0
    %1516 = vmatpush.msra.mxu0 0.0
    %1517 = vmatpush.msra.mxu0 0.0
    %1518 = vmatpush.msra.mxu0 0.0
    %1519 = vmatpush.msra.mxu0 0.0
    %1520 = vmatpush.msra.mxu0 0.0
    %1521 = vmatpush.msra.mxu0 0.0
    %1522 = vmatpush.msra.mxu0 0.0
    %1523 = vmatpush.msra.mxu0 %v172
    %1524 = vmatpush.msra.mxu0 %v72
    %1525 = vmatpush.msra.mxu0 %v70
    %1526 = vmatpush.msra.mxu0 %v68
    %1527 = vmatmul.f32.gmra.mxu0 %v1479
    %v1528 = vpop.f32.mrf.mxu0
    %v1529 = vadd.f32 %v1471, %v1528
    %1530 = vmatmul.f32.gmra.mxu0 %v1481
    %v1531 = vpop.f32.mrf.mxu0
    %v1532 = vadd.f32 %v1474, %v1531
    %1533 = vmatmul.f32.gmra.mxu0 %v1483
    %v1534 = vpop.f32.mrf.mxu0
    %v1535 = vadd.f32 %v1477, %v1534
    %1536 = vdwg.mxu0
    %v1537 = vrot.slane %v1406, 2
    %v1538 = vrot.slane %v1407, 2
    %v1539 = vsel %vm235, %v1537, %v1538
    %v1540 = vrot.slane %v1408, 2
    %v1541 = vsel %vm235, %v1538, %v1540
    %v1542 = vrot.slane %v1409, 2
    %v1543 = vsel %vm235, %v1540, %v1542
    %v1544 = vsel %vm96, %v1539, 0
    %v1546 = vsel %vm96, %v1541, 0
    %v1548 = vsel %vm96, %v1543, 0
    %1550 = vmatpush.msra.mxu0 0.0
    %1551 = vmatpush.msra.mxu0 0.0
    %1552 = vmatpush.msra.mxu0 0.0
    %1553 = vmatpush.msra.mxu0 0.0
    %1554 = vmatpush.msra.mxu0 0.0
    %1555 = vmatpush.msra.mxu0 0.0
    %1556 = vmatpush.msra.mxu0 0.0
    %1557 = vmatpush.msra.mxu0 0.0
    %1558 = vmatpush.msra.mxu0 0.0
    %1559 = vmatpush.msra.mxu0 0.0
    %1560 = vmatpush.msra.mxu0 0.0
    %1561 = vmatpush.msra.mxu0 0.0
    %1562 = vmatpush.msra.mxu0 %v250
    %1563 = vmatpush.msra.mxu0 %v231
    %1564 = vmatpush.msra.mxu0 %v229
    %1565 = vmatpush.msra.mxu0 %v227
    %1566 = vmatmul.f32.gmra.mxu0 %v1544
    %v1567 = vpop.f32.mrf.mxu0
    %v1568 = vadd.f32 0.0, %v1567
    %1569 = vmatmul.f32.gmra.mxu0 %v1546
    %v1570 = vpop.f32.mrf.mxu0
    %v1571 = vadd.f32 0.0, %v1570
    %1572 = vmatmul.f32.gmra.mxu0 %v1548
    %v1573 = vpop.f32.mrf.mxu0
    %v1574 = vadd.f32 0.0, %v1573
    %1575 = vdwg.mxu0
    %1576 = vmatpush.msra.mxu0 0.0
    %1577 = vmatpush.msra.mxu0 0.0
    %1578 = vmatpush.msra.mxu0 0.0
    %1579 = vmatpush.msra.mxu0 0.0
    %1580 = vmatpush.msra.mxu0 0.0
    %1581 = vmatpush.msra.mxu0 0.0
    %1582 = vmatpush.msra.mxu0 0.0
    %1583 = vmatpush.msra.mxu0 0.0
    %1584 = vmatpush.msra.mxu0 0.0
    %1585 = vmatpush.msra.mxu0 0.0
    %1586 = vmatpush.msra.mxu0 0.0
    %1587 = vmatpush.msra.mxu0 0.0
    %1588 = vmatpush.msra.mxu0 %v253
    %1589 = vmatpush.msra.mxu0 %v232
    %1590 = vmatpush.msra.mxu0 %v230
    %1591 = vmatpush.msra.mxu0 %v228
    %1592 = vmatmul.f32.gmra.mxu0 %v1544
    %v1593 = vpop.f32.mrf.mxu0
    %v1594 = vadd.f32 0.0, %v1593
    %1595 = vmatmul.f32.gmra.mxu0 %v1546
    %v1596 = vpop.f32.mrf.mxu0
    %v1597 = vadd.f32 0.0, %v1596
    %1598 = vmatmul.f32.gmra.mxu0 %v1548
    %v1599 = vpop.f32.mrf.mxu0
    %v1600 = vadd.f32 0.0, %v1599
    %1601 = vdwg.mxu0
    %v1602 = vadd.f32 %v1503, %v1568
    %v1603 = vadd.f32 %v1529, %v1594
    %v1604 = vadd.f32 %v1506, %v1571
    %v1605 = vadd.f32 %v1532, %v1597
    %v1606 = vadd.f32 %v1509, %v1574
    %v1607 = vadd.f32 %v1535, %v1600
    %v1608 = vrot.slane %v1406, 3
    %v1609 = vrot.slane %v1407, 3
    %v1610 = vsel %vm322, %v1608, %v1609
    %v1611 = vrot.slane %v1408, 3
    %v1612 = vsel %vm322, %v1609, %v1611
    %v1613 = vrot.slane %v1409, 3
    %v1614 = vsel %vm322, %v1611, %v1613
    %v1615 = vsel %vm96, %v1610, 0
    %v1617 = vsel %vm96, %v1612, 0
    %v1619 = vsel %vm96, %v1614, 0
    %1621 = vmatpush.msra.mxu0 0.0
    %1622 = vmatpush.msra.mxu0 0.0
    %1623 = vmatpush.msra.mxu0 0.0
    %1624 = vmatpush.msra.mxu0 0.0
    %1625 = vmatpush.msra.mxu0 0.0
    %1626 = vmatpush.msra.mxu0 0.0
    %1627 = vmatpush.msra.mxu0 0.0
    %1628 = vmatpush.msra.mxu0 0.0
    %1629 = vmatpush.msra.mxu0 0.0
    %1630 = vmatpush.msra.mxu0 0.0
    %1631 = vmatpush.msra.mxu0 0.0
    %1632 = vmatpush.msra.mxu0 0.0
    %1633 = vmatpush.msra.mxu0 %v337
    %1634 = vmatpush.msra.mxu0 %v318
    %1635 = vmatpush.msra.mxu0 %v316
    %1636 = vmatpush.msra.mxu0 %v314
    %1637 = vmatmul.f32.gmra.mxu0 %v1615
    %v1638 = vpop.f32.mrf.mxu0
    %v1639 = vadd.f32 0.0, %v1638
    %1640 = vmatmul.f32.gmra.mxu0 %v1617
    %v1641 = vpop.f32.mrf.mxu0
    %v1642 = vadd.f32 0.0, %v1641
    %1643 = vmatmul.f32.gmra.mxu0 %v1619
    %v1644 = vpop.f32.mrf.mxu0
    %v1645 = vadd.f32 0.0, %v1644
    %1646 = vdwg.mxu0
    %1647 = vmatpush.msra.mxu0 0.0
    %1648 = vmatpush.msra.mxu0 0.0
    %1649 = vmatpush.msra.mxu0 0.0
    %1650 = vmatpush.msra.mxu0 0.0
    %1651 = vmatpush.msra.mxu0 0.0
    %1652 = vmatpush.msra.mxu0 0.0
    %1653 = vmatpush.msra.mxu0 0.0
    %1654 = vmatpush.msra.mxu0 0.0
    %1655 = vmatpush.msra.mxu0 0.0
    %1656 = vmatpush.msra.mxu0 0.0
    %1657 = vmatpush.msra.mxu0 0.0
    %1658 = vmatpush.msra.mxu0 0.0
    %1659 = vmatpush.msra.mxu0 %v340
    %1660 = vmatpush.msra.mxu0 %v319
    %1661 = vmatpush.msra.mxu0 %v317
    %1662 = vmatpush.msra.mxu0 %v315
    %1663 = vmatmul.f32.gmra.mxu0 %v1615
    %v1664 = vpop.f32.mrf.mxu0
    %v1665 = vadd.f32 0.0, %v1664
    %1666 = vmatmul.f32.gmra.mxu0 %v1617
    %v1667 = vpop.f32.mrf.mxu0
    %v1668 = vadd.f32 0.0, %v1667
    %1669 = vmatmul.f32.gmra.mxu0 %v1619
    %v1670 = vpop.f32.mrf.mxu0
    %v1671 = vadd.f32 0.0, %v1670
    %1672 = vdwg.mxu0
    %v1673 = vadd.f32 %v1602, %v1639
    %v1674 = vadd.f32 %v1603, %v1665
    %v1675 = vadd.f32 %v1604, %v1642
    %v1676 = vadd.f32 %v1605, %v1668
    %v1677 = vadd.f32 %v1606, %v1645
    %v1678 = vadd.f32 %v1607, %v1671
    %v1679 = vrot.slane %v1406, 4
    %v1680 = vrot.slane %v1407, 4
    %v1681 = vsel %vm103, %v1679, %v1680
    %v1682 = vrot.slane %v1408, 4
    %v1683 = vsel %vm103, %v1680, %v1682
    %v1684 = vrot.slane %v1409, 4
    %v1685 = vsel %vm103, %v1682, %v1684
    %v1686 = vsel %vm96, %v1681, 0
    %v1688 = vsel %vm96, %v1683, 0
    %v1690 = vsel %vm96, %v1685, 0
    %1692 = vmatpush.msra.mxu0 0.0
    %1693 = vmatpush.msra.mxu0 0.0
    %1694 = vmatpush.msra.mxu0 0.0
    %1695 = vmatpush.msra.mxu0 0.0
    %1696 = vmatpush.msra.mxu0 0.0
    %1697 = vmatpush.msra.mxu0 0.0
    %1698 = vmatpush.msra.mxu0 0.0
    %1699 = vmatpush.msra.mxu0 0.0
    %1700 = vmatpush.msra.mxu0 0.0
    %1701 = vmatpush.msra.mxu0 0.0
    %1702 = vmatpush.msra.mxu0 0.0
    %1703 = vmatpush.msra.mxu0 0.0
    %1704 = vmatpush.msra.mxu0 %v423
    %1705 = vmatpush.msra.mxu0 %v405
    %1706 = vmatpush.msra.mxu0 %v403
    %1707 = vmatpush.msra.mxu0 %v401
    %1708 = vmatmul.f32.gmra.mxu0 %v1686
    %v1709 = vpop.f32.mrf.mxu0
    %v1710 = vadd.f32 0.0, %v1709
    %1711 = vmatmul.f32.gmra.mxu0 %v1688
    %v1712 = vpop.f32.mrf.mxu0
    %v1713 = vadd.f32 0.0, %v1712
    %1714 = vmatmul.f32.gmra.mxu0 %v1690
    %v1715 = vpop.f32.mrf.mxu0
    %v1716 = vadd.f32 0.0, %v1715
    %1717 = vdwg.mxu0
    %1718 = vmatpush.msra.mxu0 0.0
    %1719 = vmatpush.msra.mxu0 0.0
    %1720 = vmatpush.msra.mxu0 0.0
    %1721 = vmatpush.msra.mxu0 0.0
    %1722 = vmatpush.msra.mxu0 0.0
    %1723 = vmatpush.msra.mxu0 0.0
    %1724 = vmatpush.msra.mxu0 0.0
    %1725 = vmatpush.msra.mxu0 0.0
    %1726 = vmatpush.msra.mxu0 0.0
    %1727 = vmatpush.msra.mxu0 0.0
    %1728 = vmatpush.msra.mxu0 0.0
    %1729 = vmatpush.msra.mxu0 0.0
    %1730 = vmatpush.msra.mxu0 %v426
    %1731 = vmatpush.msra.mxu0 %v406
    %1732 = vmatpush.msra.mxu0 %v404
    %1733 = vmatpush.msra.mxu0 %v402
    %1734 = vmatmul.f32.gmra.mxu0 %v1686
    %v1735 = vpop.f32.mrf.mxu0
    %v1736 = vadd.f32 0.0, %v1735
    %1737 = vmatmul.f32.gmra.mxu0 %v1688
    %v1738 = vpop.f32.mrf.mxu0
    %v1739 = vadd.f32 0.0, %v1738
    %1740 = vmatmul.f32.gmra.mxu0 %v1690
    %v1741 = vpop.f32.mrf.mxu0
    %v1742 = vadd.f32 0.0, %v1741
    %1743 = vdwg.mxu0
    %v1744 = vadd.f32 %v1673, %v1710
    %v1745 = vadd.f32 %v1674, %v1736
    %v1746 = vadd.f32 %v1675, %v1713
    %v1747 = vadd.f32 %v1676, %v1739
    %v1748 = vadd.f32 %v1677, %v1716
    %v1749 = vadd.f32 %v1678, %v1742
    %v1750 = vadd.f32 %v1744, %v488
    %v1751 = vadd.f32 %v1745, %v489
    %v1752 = vadd.f32 %v1746, %v488
    %v1753 = vadd.f32 %v1747, %v489
    %v1754 = vadd.f32 %v1748, %v488
    %v1755 = vadd.f32 %v1749, %v489
    %1756 = vmatpush.msra.mxu0 0.0
    %1757 = vmatpush.msra.mxu0 0.0
    %1758 = vmatpush.msra.mxu0 0.0
    %1759 = vmatpush.msra.mxu0 0.0
    %1760 = vmatpush.msra.mxu0 0.0
    %1761 = vmatpush.msra.mxu0 0.0
    %1762 = vmatpush.msra.mxu0 0.0
    %1763 = vmatpush.msra.mxu0 0.0
    %1764 = vmatpush.msra.mxu0 0.0
    %1765 = vmatpush.msra.mxu0 0.0
    %1766 = vmatpush.msra.mxu0 0.0
    %1767 = vmatpush.msra.mxu0 0.0
    %1768 = vmatpush.msra.mxu0 0.0
    %1769 = vmatpush.msra.mxu0 %v1754
    %1770 = vmatpush.msra.mxu0 %v1752
    %1771 = vmatpush.msra.mxu0 %v1750
    %1772 = vmatmul.f32.gmra.mxu0 %v502
    %v1773 = vpop.f32.mrf.mxu0
    %v1774 = vadd.f32 0.0, %v1773
    %1775 = vmatmul.f32.gmra.mxu0 %v505
    %v1776 = vpop.f32.mrf.mxu0
    %v1777 = vadd.f32 0.0, %v1776
    %1778 = vdwg.mxu0
    %1779 = vmatpush.msra.mxu0 0.0
    %1780 = vmatpush.msra.mxu0 0.0
    %1781 = vmatpush.msra.mxu0 0.0
    %1782 = vmatpush.msra.mxu0 0.0
    %1783 = vmatpush.msra.mxu0 0.0
    %1784 = vmatpush.msra.mxu0 0.0
    %1785 = vmatpush.msra.mxu0 0.0
    %1786 = vmatpush.msra.mxu0 0.0
    %1787 = vmatpush.msra.mxu0 0.0
    %1788 = vmatpush.msra.mxu0 0.0
    %1789 = vmatpush.msra.mxu0 0.0
    %1790 = vmatpush.msra.mxu0 0.0
    %1791 = vmatpush.msra.mxu0 0.0
    %1792 = vmatpush.msra.mxu0 %v1755
    %1793 = vmatpush.msra.mxu0 %v1753
    %1794 = vmatpush.msra.mxu0 %v1751
    %1795 = vmatmul.f32.gmra.mxu0 %v502
    %v1796 = vpop.f32.mrf.mxu0
    %v1797 = vadd.f32 0.0, %v1796
    %1798 = vmatmul.f32.gmra.mxu0 %v505
    %v1799 = vpop.f32.mrf.mxu0
    %v1800 = vadd.f32 0.0, %v1799
    %1801 = vdwg.mxu0
    %1802 = vmatpush.msra.mxu0 0.0
    %1803 = vmatpush.msra.mxu0 0.0
    %1804 = vmatpush.msra.mxu0 0.0
    %1805 = vmatpush.msra.mxu0 0.0
    %1806 = vmatpush.msra.mxu0 0.0
    %1807 = vmatpush.msra.mxu0 0.0
    %1808 = vmatpush.msra.mxu0 0.0
    %1809 = vmatpush.msra.mxu0 0.0
    %1810 = vmatpush.msra.mxu0 0.0
    %1811 = vmatpush.msra.mxu0 0.0
    %1812 = vmatpush.msra.mxu0 0.0
    %1813 = vmatpush.msra.mxu0 0.0
    %1814 = vmatpush.msra.mxu0 0.0
    %1815 = vmatpush.msra.mxu0 %v1754
    %1816 = vmatpush.msra.mxu0 %v1752
    %1817 = vmatpush.msra.mxu0 %v1750
    %1818 = vmatmul.f32.gmra.mxu0 %v557
    %v1819 = vpop.f32.mrf.mxu0
    %v1820 = vadd.f32 0.0, %v1819
    %1821 = vmatmul.f32.gmra.mxu0 %v560
    %v1822 = vpop.f32.mrf.mxu0
    %v1823 = vadd.f32 0.0, %v1822
    %1824 = vdwg.mxu0
    %1825 = vmatpush.msra.mxu0 0.0
    %1826 = vmatpush.msra.mxu0 0.0
    %1827 = vmatpush.msra.mxu0 0.0
    %1828 = vmatpush.msra.mxu0 0.0
    %1829 = vmatpush.msra.mxu0 0.0
    %1830 = vmatpush.msra.mxu0 0.0
    %1831 = vmatpush.msra.mxu0 0.0
    %1832 = vmatpush.msra.mxu0 0.0
    %1833 = vmatpush.msra.mxu0 0.0
    %1834 = vmatpush.msra.mxu0 0.0
    %1835 = vmatpush.msra.mxu0 0.0
    %1836 = vmatpush.msra.mxu0 0.0
    %1837 = vmatpush.msra.mxu0 0.0
    %1838 = vmatpush.msra.mxu0 %v1755
    %1839 = vmatpush.msra.mxu0 %v1753
    %1840 = vmatpush.msra.mxu0 %v1751
    %1841 = vmatmul.f32.gmra.mxu0 %v557
    %v1842 = vpop.f32.mrf.mxu0
    %v1843 = vadd.f32 0.0, %v1842
    %1844 = vmatmul.f32.gmra.mxu0 %v560
    %v1845 = vpop.f32.mrf.mxu0
    %v1846 = vadd.f32 0.0, %v1845
    %1847 = vdwg.mxu0
    %v1848 = vmax.f32 %v1774, %v1820
    %v1849 = vmax.f32 %v1797, %v1843
    %v1850 = vmax.f32 %v1777, %v1823
    %v1851 = vmax.f32 %v1800, %v1846
    %v1853 = vsel %vm642, %v1849, 0
    %v1856 = vsel %vm642, %v1851, 0
    %1858 = vmatpush.msra.mxu0 %v627
    %1859 = vmatpush.msra.mxu0 %v626
    %1860 = vmatpush.msra.mxu0 %v625
    %1861 = vmatpush.msra.mxu0 %v624
    %1862 = vmatpush.msra.mxu0 %v623
    %1863 = vmatpush.msra.mxu0 %v622
    %1864 = vmatpush.msra.mxu0 %v621
    %1865 = vmatpush.msra.mxu0 %v620
    %1866 = vmatpush.msra.mxu0 %v619
    %1867 = vmatpush.msra.mxu0 %v618
    %1868 = vmatpush.msra.mxu0 %v617
    %1869 = vmatpush.msra.mxu0 %v616
    %1870 = vmatpush.msra.mxu0 %v615
    %1871 = vmatpush.msra.mxu0 %v614
    %1872 = vmatpush.msra.mxu0 %v613
    %1873 = vmatpush.msra.mxu0 %v612
    %1874 = vmatmul.f32.gmra.mxu0 %v1848
    %v1875 = vpop.f32.mrf.mxu0
    %v1876 = vadd.f32 0.0, %v1875
    %1877 = vmatmul.f32.gmra.mxu0 %v1850
    %v1878 = vpop.f32.mrf.mxu0
    %v1879 = vadd.f32 0.0, %v1878
    %1880 = vdwg.mxu0
    %1881 = vmatpush.msra.mxu0 0.0
    %1882 = vmatpush.msra.mxu0 0.0
    %1883 = vmatpush.msra.mxu0 %v641
    %1884 = vmatpush.msra.mxu0 %v640
    %1885 = vmatpush.msra.mxu0 %v639
    %1886 = vmatpush.msra.mxu0 %v638
    %1887 = vmatpush.msra.mxu0 %v637
    %1888 = vmatpush.msra.mxu0 %v636
    %1889 = vmatpush.msra.mxu0 %v635
    %1890 = vmatpush.msra.mxu0 %v634
    %1891 = vmatpush.msra.mxu0 %v633
    %1892 = vmatpush.msra.mxu0 %v632
    %1893 = vmatpush.msra.mxu0 %v631
    %1894 = vmatpush.msra.mxu0 %v630
    %1895 = vmatpush.msra.mxu0 %v629
    %1896 = vmatpush.msra.mxu0 %v628
    %1897 = vmatmul.f32.gmra.mxu0 %v1853
    %v1898 = vpop.f32.mrf.mxu0
    %v1899 = vadd.f32 %v1876, %v1898
    %1900 = vmatmul.f32.gmra.mxu0 %v1856
    %v1901 = vpop.f32.mrf.mxu0
    %v1902 = vadd.f32 %v1879, %v1901
    %1903 = vdwg.mxu0
    %1904 = vmatpush.msra.mxu0 %v711
    %1905 = vmatpush.msra.mxu0 %v710
    %1906 = vmatpush.msra.mxu0 %v709
    %1907 = vmatpush.msra.mxu0 %v708
    %1908 = vmatpush.msra.mxu0 %v707
    %1909 = vmatpush.msra.mxu0 %v706
    %1910 = vmatpush.msra.mxu0 %v705
    %1911 = vmatpush.msra.mxu0 %v704
    %1912 = vmatpush.msra.mxu0 %v703
    %1913 = vmatpush.msra.mxu0 %v702
    %1914 = vmatpush.msra.mxu0 %v701
    %1915 = vmatpush.msra.mxu0 %v700
    %1916 = vmatpush.msra.mxu0 %v699
    %1917 = vmatpush.msra.mxu0 %v698
    %1918 = vmatpush.msra.mxu0 %v697
    %1919 = vmatpush.msra.mxu0 %v696
    %1920 = vmatmul.f32.gmra.mxu0 %v1848
    %v1921 = vpop.f32.mrf.mxu0
    %v1922 = vadd.f32 0.0, %v1921
    %1923 = vmatmul.f32.gmra.mxu0 %v1850
    %v1924 = vpop.f32.mrf.mxu0
    %v1925 = vadd.f32 0.0, %v1924
    %1926 = vdwg.mxu0
    %1927 = vmatpush.msra.mxu0 0.0
    %1928 = vmatpush.msra.mxu0 0.0
    %1929 = vmatpush.msra.mxu0 %v725
    %1930 = vmatpush.msra.mxu0 %v724
    %1931 = vmatpush.msra.mxu0 %v723
    %1932 = vmatpush.msra.mxu0 %v722
    %1933 = vmatpush.msra.mxu0 %v721
    %1934 = vmatpush.msra.mxu0 %v720
    %1935 = vmatpush.msra.mxu0 %v719
    %1936 = vmatpush.msra.mxu0 %v718
    %1937 = vmatpush.msra.mxu0 %v717
    %1938 = vmatpush.msra.mxu0 %v716
    %1939 = vmatpush.msra.mxu0 %v715
    %1940 = vmatpush.msra.mxu0 %v714
    %1941 = vmatpush.msra.mxu0 %v713
    %1942 = vmatpush.msra.mxu0 %v712
    %1943 = vmatmul.f32.gmra.mxu0 %v1853
    %v1944 = vpop.f32.mrf.mxu0
    %v1945 = vadd.f32 %v1922, %v1944
    %1946 = vmatmul.f32.gmra.mxu0 %v1856
    %v1947 = vpop.f32.mrf.mxu0
    %v1948 = vadd.f32 %v1925, %v1947
    %1949 = vdwg.mxu0
    %v1950 = vmax.f32 %v1899, %v1945
    %v1951 = vmax.f32 %v1902, %v1948
    %v1952 = vmax.f32 %v1950, 0.0
    %v1953 = vmax.f32 %v1951, 0.0
    %v1956 = vrot.slane %v1952, 1
    %v1957 = vrot.slane %v1953, 1
    %v1958 = vsel %vm88, %v1956, %v1957
    %v1959 = vsel %vm842, %v1958, 0
    %1961 = vmatpush.msra.mxu0 0.0
    %1962 = vmatpush.msra.mxu0 %v835
    %1963 = vmatpush.msra.mxu0 %v833
    %1964 = vmatpush.msra.mxu0 %v831
    %1965 = vmatpush.msra.mxu0 %v829
    %1966 = vmatpush.msra.mxu0 %v827
    %1967 = vmatpush.msra.mxu0 %v825
    %1968 = vmatpush.msra.mxu0 %v823
    %1969 = vmatpush.msra.mxu0 %v821
    %1970 = vmatpush.msra.mxu0 %v819
    %1971 = vmatpush.msra.mxu0 %v817
    %1972 = vmatpush.msra.mxu0 %v815
    %1973 = vmatpush.msra.mxu0 %v813
    %1974 = vmatpush.msra.mxu0 %v811
    %1975 = vmatpush.msra.mxu0 %v809
    %1976 = vmatpush.msra.mxu0 %v807
    %1977 = vmatmul.f32.gmra.mxu0 %v1959
    %v1978 = vpop.f32.mrf.mxu0
    %v1979 = vadd.f32 0.0, %v1978
    %1980 = vdwg.mxu0
    %1981 = vmatpush.msra.mxu0 0.0
    %1982 = vmatpush.msra.mxu0 %v836
    %1983 = vmatpush.msra.mxu0 %v834
    %1984 = vmatpush.msra.mxu0 %v832
    %1985 = vmatpush.msra.mxu0 %v830
    %1986 = vmatpush.msra.mxu0 %v828
    %1987 = vmatpush.msra.mxu0 %v826
    %1988 = vmatpush.msra.mxu0 %v824
    %1989 = vmatpush.msra.mxu0 %v822
    %1990 = vmatpush.msra.mxu0 %v820
    %1991 = vmatpush.msra.mxu0 %v818
    %1992 = vmatpush.msra.mxu0 %v816
    %1993 = vmatpush.msra.mxu0 %v814
    %1994 = vmatpush.msra.mxu0 %v812
    %1995 = vmatpush.msra.mxu0 %v810
    %1996 = vmatpush.msra.mxu0 %v808
    %1997 = vmatmul.f32.gmra.mxu0 %v1959
    %v1998 = vpop.f32.mrf.mxu0
    %v1999 = vadd.f32 0.0, %v1998
    %2000 = vdwg.mxu0
    %v2001 = vsel %vm842, %v1952, 0
    %2003 = vmatpush.msra.mxu0 0.0
    %2004 = vmatpush.msra.mxu0 %v804
    %2005 = vmatpush.msra.mxu0 %v802
    %2006 = vmatpush.msra.mxu0 %v800
    %2007 = vmatpush.msra.mxu0 %v798
    %2008 = vmatpush.msra.mxu0 %v796
    %2009 = vmatpush.msra.mxu0 %v794
    %2010 = vmatpush.msra.mxu0 %v792
    %2011 = vmatpush.msra.mxu0 %v790
    %2012 = vmatpush.msra.mxu0 %v788
    %2013 = vmatpush.msra.mxu0 %v786
    %2014 = vmatpush.msra.mxu0 %v784
    %2015 = vmatpush.msra.mxu0 %v782
    %2016 = vmatpush.msra.mxu0 %v780
    %2017 = vmatpush.msra.mxu0 %v778
    %2018 = vmatpush.msra.mxu0 %v776
    %2019 = vmatmul.f32.gmra.mxu0 %v2001
    %v2020 = vpop.f32.mrf.mxu0
    %v2021 = vadd.f32 %v1979, %v2020
    %2022 = vdwg.mxu0
    %2023 = vmatpush.msra.mxu0 0.0
    %2024 = vmatpush.msra.mxu0 %v805
    %2025 = vmatpush.msra.mxu0 %v803
    %2026 = vmatpush.msra.mxu0 %v801
    %2027 = vmatpush.msra.mxu0 %v799
    %2028 = vmatpush.msra.mxu0 %v797
    %2029 = vmatpush.msra.mxu0 %v795
    %2030 = vmatpush.msra.mxu0 %v793
    %2031 = vmatpush.msra.mxu0 %v791
    %2032 = vmatpush.msra.mxu0 %v789
    %2033 = vmatpush.msra.mxu0 %v787
    %2034 = vmatpush.msra.mxu0 %v785
    %2035 = vmatpush.msra.mxu0 %v783
    %2036 = vmatpush.msra.mxu0 %v781
    %2037 = vmatpush.msra.mxu0 %v779
    %2038 = vmatpush.msra.mxu0 %v777
    %2039 = vmatmul.f32.gmra.mxu0 %v2001
    %v2040 = vpop.f32.mrf.mxu0
    %v2041 = vadd.f32 %v1999, %v2040
    %2042 = vdwg.mxu0
    %v2043 = vrot.slane %v1952, 2
    %v2044 = vrot.slane %v1953, 2
    %v2045 = vsel %vm235, %v2043, %v2044
    %v2046 = vsel %vm842, %v2045, 0
    %2048 = vmatpush.msra.mxu0 0.0
    %2049 = vmatpush.msra.mxu0 %v956
    %2050 = vmatpush.msra.mxu0 %v954
    %2051 = vmatpush.msra.mxu0 %v952
    %2052 = vmatpush.msra.mxu0 %v950
    %2053 = vmatpush.msra.mxu0 %v948
    %2054 = vmatpush.msra.mxu0 %v946
    %2055 = vmatpush.msra.mxu0 %v944
    %2056 = vmatpush.msra.mxu0 %v942
    %2057 = vmatpush.msra.mxu0 %v940
    %2058 = vmatpush.msra.mxu0 %v938
    %2059 = vmatpush.msra.mxu0 %v936
    %2060 = vmatpush.msra.mxu0 %v934
    %2061 = vmatpush.msra.mxu0 %v932
    %2062 = vmatpush.msra.mxu0 %v930
    %2063 = vmatpush.msra.mxu0 %v928
    %2064 = vmatmul.f32.gmra.mxu0 %v2046
    %v2065 = vpop.f32.mrf.mxu0
    %v2066 = vadd.f32 0.0, %v2065
    %2067 = vdwg.mxu0
    %2068 = vmatpush.msra.mxu0 0.0
    %2069 = vmatpush.msra.mxu0 %v957
    %2070 = vmatpush.msra.mxu0 %v955
    %2071 = vmatpush.msra.mxu0 %v953
    %2072 = vmatpush.msra.mxu0 %v951
    %2073 = vmatpush.msra.mxu0 %v949
    %2074 = vmatpush.msra.mxu0 %v947
    %2075 = vmatpush.msra.mxu0 %v945
    %2076 = vmatpush.msra.mxu0 %v943
    %2077 = vmatpush.msra.mxu0 %v941
    %2078 = vmatpush.msra.mxu0 %v939
    %2079 = vmatpush.msra.mxu0 %v937
    %2080 = vmatpush.msra.mxu0 %v935
    %2081 = vmatpush.msra.mxu0 %v933
    %2082 = vmatpush.msra.mxu0 %v931
    %2083 = vmatpush.msra.mxu0 %v929
    %2084 = vmatmul.f32.gmra.mxu0 %v2046
    %v2085 = vpop.f32.mrf.mxu0
    %v2086 = vadd.f32 0.0, %v2085
    %2087 = vdwg.mxu0
    %v2088 = vadd.f32 %v2021, %v2066
    %v2089 = vadd.f32 %v2041, %v2086
    %v2090 = vrot.slane %v1952, 3
    %v2091 = vrot.slane %v1953, 3
    %v2092 = vsel %vm322, %v2090, %v2091
    %v2093 = vsel %vm842, %v2092, 0
    %2095 = vmatpush.msra.mxu0 0.0
    %2096 = vmatpush.msra.mxu0 %v1034
    %2097 = vmatpush.msra.mxu0 %v1032
    %2098 = vmatpush.msra.mxu0 %v1030
    %2099 = vmatpush.msra.mxu0 %v1028
    %2100 = vmatpush.msra.mxu0 %v1026
    %2101 = vmatpush.msra.mxu0 %v1024
    %2102 = vmatpush.msra.mxu0 %v1022
    %2103 = vmatpush.msra.mxu0 %v1020
    %2104 = vmatpush.msra.mxu0 %v1018
    %2105 = vmatpush.msra.mxu0 %v1016
    %2106 = vmatpush.msra.mxu0 %v1014
    %2107 = vmatpush.msra.mxu0 %v1012
    %2108 = vmatpush.msra.mxu0 %v1010
    %2109 = vmatpush.msra.mxu0 %v1008
    %2110 = vmatpush.msra.mxu0 %v1006
    %2111 = vmatmul.f32.gmra.mxu0 %v2093
    %v2112 = vpop.f32.mrf.mxu0
    %v2113 = vadd.f32 0.0, %v2112
    %2114 = vdwg.mxu0
    %2115 = vmatpush.msra.mxu0 0.0
    %2116 = vmatpush.msra.mxu0 %v1035
    %2117 = vmatpush.msra.mxu0 %v1033
    %2118 = vmatpush.msra.mxu0 %v1031
    %2119 = vmatpush.msra.mxu0 %v1029
    %2120 = vmatpush.msra.mxu0 %v1027
    %2121 = vmatpush.msra.mxu0 %v1025
    %2122 = vmatpush.msra.mxu0 %v1023
    %2123 = vmatpush.msra.mxu0 %v1021
    %2124 = vmatpush.msra.mxu0 %v1019
    %2125 = vmatpush.msra.mxu0 %v1017
    %2126 = vmatpush.msra.mxu0 %v1015
    %2127 = vmatpush.msra.mxu0 %v1013
    %2128 = vmatpush.msra.mxu0 %v1011
    %2129 = vmatpush.msra.mxu0 %v1009
    %2130 = vmatpush.msra.mxu0 %v1007
    %2131 = vmatmul.f32.gmra.mxu0 %v2093
    %v2132 = vpop.f32.mrf.mxu0
    %v2133 = vadd.f32 0.0, %v2132
    %2134 = vdwg.mxu0
    %v2135 = vadd.f32 %v2088, %v2113
    %v2136 = vadd.f32 %v2089, %v2133
    %v2137 = vrot.slane %v1952, 4
    %v2138 = vrot.slane %v1953, 4
    %v2139 = vsel %vm103, %v2137, %v2138
    %v2140 = vsel %vm842, %v2139, 0
    %2142 = vmatpush.msra.mxu0 0.0
    %2143 = vmatpush.msra.mxu0 %v1112
    %2144 = vmatpush.msra.mxu0 %v1110
    %2145 = vmatpush.msra.mxu0 %v1108
    %2146 = vmatpush.msra.mxu0 %v1106
    %2147 = vmatpush.msra.mxu0 %v1104
    %2148 = vmatpush.msra.mxu0 %v1102
    %2149 = vmatpush.msra.mxu0 %v1100
    %2150 = vmatpush.msra.mxu0 %v1098
    %2151 = vmatpush.msra.mxu0 %v1096
    %2152 = vmatpush.msra.mxu0 %v1094
    %2153 = vmatpush.msra.mxu0 %v1092
    %2154 = vmatpush.msra.mxu0 %v1090
    %2155 = vmatpush.msra.mxu0 %v1088
    %2156 = vmatpush.msra.mxu0 %v1086
    %2157 = vmatpush.msra.mxu0 %v1084
    %2158 = vmatmul.f32.gmra.mxu0 %v2140
    %v2159 = vpop.f32.mrf.mxu0
    %v2160 = vadd.f32 0.0, %v2159
    %2161 = vdwg.mxu0
    %2162 = vmatpush.msra.mxu0 0.0
    %2163 = vmatpush.msra.mxu0 %v1113
    %2164 = vmatpush.msra.mxu0 %v1111
    %2165 = vmatpush.msra.mxu0 %v1109
    %2166 = vmatpush.msra.mxu0 %v1107
    %2167 = vmatpush.msra.mxu0 %v1105
    %2168 = vmatpush.msra.mxu0 %v1103
    %2169 = vmatpush.msra.mxu0 %v1101
    %2170 = vmatpush.msra.mxu0 %v1099
    %2171 = vmatpush.msra.mxu0 %v1097
    %2172 = vmatpush.msra.mxu0 %v1095
    %2173 = vmatpush.msra.mxu0 %v1093
    %2174 = vmatpush.msra.mxu0 %v1091
    %2175 = vmatpush.msra.mxu0 %v1089
    %2176 = vmatpush.msra.mxu0 %v1087
    %2177 = vmatpush.msra.mxu0 %v1085
    %2178 = vmatmul.f32.gmra.mxu0 %v2140
    %v2179 = vpop.f32.mrf.mxu0
    %v2180 = vadd.f32 0.0, %v2179
    %2181 = vdwg.mxu0
    %v2182 = vadd.f32 %v2135, %v2160
    %v2183 = vadd.f32 %v2136, %v2180
    %v2184 = vadd.f32 %v2182, %v1163
    %v2185 = vadd.f32 %v2183, %v1164
    %2186 = vmatpush.msra.mxu0 0.0
    %2187 = vmatpush.msra.mxu0 0.0
    %2188 = vmatpush.msra.mxu0 0.0
    %2189 = vmatpush.msra.mxu0 0.0
    %2190 = vmatpush.msra.mxu0 0.0
    %2191 = vmatpush.msra.mxu0 0.0
    %2192 = vmatpush.msra.mxu0 0.0
    %2193 = vmatpush.msra.mxu0 0.0
    %2194 = vmatpush.msra.mxu0 0.0
    %2195 = vmatpush.msra.mxu0 0.0
    %2196 = vmatpush.msra.mxu0 0.0
    %2197 = vmatpush.msra.mxu0 0.0
    %2198 = vmatpush.msra.mxu0 0.0
    %2199 = vmatpush.msra.mxu0 0.0
    %2200 = vmatpush.msra.mxu0 0.0
    %2201 = vmatpush.msra.mxu0 %v2184
    %2202 = vmatmul.f32.gmra.mxu0 %v1172
    %v2203 = vpop.f32.mrf.mxu0
    %v2204 = vadd.f32 0.0, %v2203
    %2205 = vdwg.mxu0
    %2206 = vmatpush.msra.mxu0 0.0
    %2207 = vmatpush.msra.mxu0 0.0
    %2208 = vmatpush.msra.mxu0 0.0
    %2209 = vmatpush.msra.mxu0 0.0
    %2210 = vmatpush.msra.mxu0 0.0
    %2211 = vmatpush.msra.mxu0 0.0
    %2212 = vmatpush.msra.mxu0 0.0
    %2213 = vmatpush.msra.mxu0 0.0
    %2214 = vmatpush.msra.mxu0 0.0
    %2215 = vmatpush.msra.mxu0 0.0
    %2216 = vmatpush.msra.mxu0 0.0
    %2217 = vmatpush.msra.mxu0 0.0
    %2218 = vmatpush.msra.mxu0 0.0
    %2219 = vmatpush.msra.mxu0 0.0
    %2220 = vmatpush.msra.mxu0 0.0
    %2221 = vmatpush.msra.mxu0 %v2185
    %2222 = vmatmul.f32.gmra.mxu0 %v1172
    %v2223 = vpop.f32.mrf.mxu0
    %v2224 = vadd.f32 0.0, %v2223
    %2225 = vdwg.mxu0
    %2226 = vmatpush.msra.mxu0 0.0
    %2227 = vmatpush.msra.mxu0 0.0
    %2228 = vmatpush.msra.mxu0 0.0
    %2229 = vmatpush.msra.mxu0 0.0
    %2230 = vmatpush.msra.mxu0 0.0
    %2231 = vmatpush.msra.mxu0 0.0
    %2232 = vmatpush.msra.mxu0 0.0
    %2233 = vmatpush.msra.mxu0 0.0
    %2234 = vmatpush.msra.mxu0 0.0
    %2235 = vmatpush.msra.mxu0 0.0
    %2236 = vmatpush.msra.mxu0 0.0
    %2237 = vmatpush.msra.mxu0 0.0
    %2238 = vmatpush.msra.mxu0 0.0
    %2239 = vmatpush.msra.mxu0 0.0
    %2240 = vmatpush.msra.mxu0 0.0
    %2241 = vmatpush.msra.mxu0 %v2184
    %2242 = vmatmul.f32.gmra.mxu0 %v1217
    %v2243 = vpop.f32.mrf.mxu0
    %v2244 = vadd.f32 0.0, %v2243
    %2245 = vdwg.mxu0
    %2246 = vmatpush.msra.mxu0 0.0
    %2247 = vmatpush.msra.mxu0 0.0
    %2248 = vmatpush.msra.mxu0 0.0
    %2249 = vmatpush.msra.mxu0 0.0
    %2250 = vmatpush.msra.mxu0 0.0
    %2251 = vmatpush.msra.mxu0 0.0
    %2252 = vmatpush.msra.mxu0 0.0
    %2253 = vmatpush.msra.mxu0 0.0
    %2254 = vmatpush.msra.mxu0 0.0
    %2255 = vmatpush.msra.mxu0 0.0
    %2256 = vmatpush.msra.mxu0 0.0
    %2257 = vmatpush.msra.mxu0 0.0
    %2258 = vmatpush.msra.mxu0 0.0
    %2259 = vmatpush.msra.mxu0 0.0
    %2260 = vmatpush.msra.mxu0 0.0
    %2261 = vmatpush.msra.mxu0 %v2185
    %2262 = vmatmul.f32.gmra.mxu0 %v1217
    %v2263 = vpop.f32.mrf.mxu0
    %v2264 = vadd.f32 0.0, %v2263
    %2265 = vdwg.mxu0
    %v2266 = vmax.f32 %v2204, %v2244
    %v2267 = vmax.f32 %v2224, %v2264
    %v2269 = vsel %vm1281, %v2267, 0
    %2271 = vmatpush.msra.mxu0 %v1276
    %2272 = vmatpush.msra.mxu0 %v1275
    %2273 = vmatpush.msra.mxu0 %v1274
    %2274 = vmatpush.msra.mxu0 %v1273
    %2275 = vmatpush.msra.mxu0 %v1272
    %2276 = vmatpush.msra.mxu0 %v1271
    %2277 = vmatpush.msra.mxu0 %v1270
    %2278 = vmatpush.msra.mxu0 %v1269
    %2279 = vmatpush.msra.mxu0 %v1268
    %2280 = vmatpush.msra.mxu0 %v1267
    %2281 = vmatpush.msra.mxu0 %v1266
    %2282 = vmatpush.msra.mxu0 %v1265
    %2283 = vmatpush.msra.mxu0 %v1264
    %2284 = vmatpush.msra.mxu0 %v1263
    %2285 = vmatpush.msra.mxu0 %v1262
    %2286 = vmatpush.msra.mxu0 %v1261
    %2287 = vmatmul.f32.gmra.mxu0 %v2266
    %v2288 = vpop.f32.mrf.mxu0
    %v2289 = vadd.f32 0.0, %v2288
    %2290 = vdwg.mxu0
    %2291 = vmatpush.msra.mxu0 0.0
    %2292 = vmatpush.msra.mxu0 0.0
    %2293 = vmatpush.msra.mxu0 0.0
    %2294 = vmatpush.msra.mxu0 0.0
    %2295 = vmatpush.msra.mxu0 0.0
    %2296 = vmatpush.msra.mxu0 0.0
    %2297 = vmatpush.msra.mxu0 0.0
    %2298 = vmatpush.msra.mxu0 0.0
    %2299 = vmatpush.msra.mxu0 0.0
    %2300 = vmatpush.msra.mxu0 0.0
    %2301 = vmatpush.msra.mxu0 0.0
    %2302 = vmatpush.msra.mxu0 0.0
    %2303 = vmatpush.msra.mxu0 %v1280
    %2304 = vmatpush.msra.mxu0 %v1279
    %2305 = vmatpush.msra.mxu0 %v1278
    %2306 = vmatpush.msra.mxu0 %v1277
    %2307 = vmatmul.f32.gmra.mxu0 %v2269
    %v2308 = vpop.f32.mrf.mxu0
    %v2309 = vadd.f32 %v2289, %v2308
    %2310 = vdwg.mxu0
    %2311 = vmatpush.msra.mxu0 %v1341
    %2312 = vmatpush.msra.mxu0 %v1340
    %2313 = vmatpush.msra.mxu0 %v1339
    %2314 = vmatpush.msra.mxu0 %v1338
    %2315 = vmatpush.msra.mxu0 %v1337
    %2316 = vmatpush.msra.mxu0 %v1336
    %2317 = vmatpush.msra.mxu0 %v1335
    %2318 = vmatpush.msra.mxu0 %v1334
    %2319 = vmatpush.msra.mxu0 %v1333
    %2320 = vmatpush.msra.mxu0 %v1332
    %2321 = vmatpush.msra.mxu0 %v1331
    %2322 = vmatpush.msra.mxu0 %v1330
    %2323 = vmatpush.msra.mxu0 %v1329
    %2324 = vmatpush.msra.mxu0 %v1328
    %2325 = vmatpush.msra.mxu0 %v1327
    %2326 = vmatpush.msra.mxu0 %v1326
    %2327 = vmatmul.f32.gmra.mxu0 %v2266
    %v2328 = vpop.f32.mrf.mxu0
    %v2329 = vadd.f32 0.0, %v2328
    %2330 = vdwg.mxu0
    %2331 = vmatpush.msra.mxu0 0.0
    %2332 = vmatpush.msra.mxu0 0.0
    %2333 = vmatpush.msra.mxu0 0.0
    %2334 = vmatpush.msra.mxu0 0.0
    %2335 = vmatpush.msra.mxu0 0.0
    %2336 = vmatpush.msra.mxu0 0.0
    %2337 = vmatpush.msra.mxu0 0.0
    %2338 = vmatpush.msra.mxu0 0.0
    %2339 = vmatpush.msra.mxu0 0.0
    %2340 = vmatpush.msra.mxu0 0.0
    %2341 = vmatpush.msra.mxu0 0.0
    %2342 = vmatpush.msra.mxu0 0.0
    %2343 = vmatpush.msra.mxu0 %v1345
    %2344 = vmatpush.msra.mxu0 %v1344
    %2345 = vmatpush.msra.mxu0 %v1343
    %2346 = vmatpush.msra.mxu0 %v1342
    %2347 = vmatmul.f32.gmra.mxu0 %v2269
    %v2348 = vpop.f32.mrf.mxu0
    %v2349 = vadd.f32 %v2329, %v2348
    %2350 = vdwg.mxu0
    %v2351 = vmax.f32 %v2309, %v2349
    %v2352 = vmax.f32 %v2351, 0.0
    %v2354 = vrot.slane %v2352, 1
    %2355 = vrot.lane.b32.xlu0 %v2354, 80
    %v2356 = vpop.permute.xlu0 %2355
    %v2358 = vrot.slane %v2352, 2
    %2359 = vrot.lane.b32.xlu0 %v2358, 32
    %v2360 = vpop.permute.xlu0 %2359
    %v2362 = vrot.slane %v2352, 3
    %2363 = vrot.lane.b32.xlu0 %v2362, 112
    %v2364 = vpop.permute.xlu0 %2363
    %v2366 = vsel %vm1401, %v2352, %v2356
    %v2367 = vsel %vm1281, %v2356, %v2360
    %v2368 = vsel %vm642, %v2367, %v2364
    %v2371 = vrot.slane %v2366, 7
    %v2372 = vrot.slane %v2368, 7
    %v2373 = vrot.slane %v2364, 7
    %vm2377 = vcmask 1040384
    %v2378 = vsel %vm2377, %v1402, %v2371
    %v2379 = vsel %vm2377, %v1404, %v2372
    %v2380 = vsel %vm2377, %v1399, %v2373
    %v2381 = vld [vmem:[%s9] sm:$0xff]
    %v2382 = vld [vmem:[%s9 + $0x8] sm:$0xff]
    %v2383 = vld [vmem:[%s9 + $0x10] sm:$0xff]
    %v2384 = vld [vmem:[%s9 + $0x18] sm:$0xff]
    %v2385 = vld [vmem:[%s9 + $0x20] sm:$0xff]
    %v2386 = vld [vmem:[%s9 + $0x28] sm:$0xff]
    %v2387 = vld [vmem:[%s9 + $0x30] sm:$0xff]
    %v2388 = vld [vmem:[%s9 + $0x38] sm:$0xff]
    %v2389 = vld [vmem:[%s9 + $0x40] sm:$0xff]
    %v2390 = vld [vmem:[%s9 + $0x48] sm:$0xff]
    %v2391 = vld [vmem:[%s9 + $0x50] sm:$0xff]
    %v2392 = vld [vmem:[%s9 + $0x58] sm:$0xff]
    %v2393 = vld [vmem:[%s9 + $0x60] sm:$0xff]
    %v2394 = vld [vmem:[%s9 + $0x68] sm:$0xff]
    %v2395 = vld [vmem:[%s9 + $0x70] sm:$0xff]
    %v2396 = vld [vmem:[%s9 + $0x78] sm:$0xff]
    %v2397 = vld [vmem:[%s9 + $0x80] sm:$0xff]
    %v2398 = vld [vmem:[%s9 + $0x88] sm:$0xff]
    %v2399 = vld [vmem:[%s9 + $0x90] sm:$0xff]
    %v2400 = vld [vmem:[%s9 + $0x98] sm:$0xff]
    %v2401 = vld [vmem:[%s9 + $0xa0] sm:$0xff]
    %v2402 = vld [vmem:[%s9 + $0xa8] sm:$0xff]
    %v2403 = vld [vmem:[%s9 + $0xb0] sm:$0xff]
    %v2404 = vld [vmem:[%s9 + $0xb8] sm:$0xff]
    %v2405 = vld [vmem:[%s9 + $0xc0] sm:$0xff]
    %v2406 = vld [vmem:[%s9 + $0xc8] sm:$0xff]
    %v2407 = vld [vmem:[%s9 + $0xd0] sm:$0xff]
    %v2408 = vld [vmem:[%s9 + $0xd8] sm:$0xff]
    %v2409 = vld [vmem:[%s9 + $0xe0] sm:$0xff]
    %v2410 = vld [vmem:[%s9 + $0xe8] sm:$0xff]
    %v2411 = vld [vmem:[%s9 + $0xf0] sm:$0xff]
    %v2412 = vld [vmem:[%s9 + $0xf8] sm:$0xff]
    %v2413 = vld [vmem:[%s9 + $0x100] sm:$0xff]
    %v2414 = vld [vmem:[%s9 + $0x108] sm:$0xff]
    %v2415 = vld [vmem:[%s9 + $0x110] sm:$0xff]
    %v2416 = vld [vmem:[%s9 + $0x118] sm:$0xff]
    %v2417 = vld [vmem:[%s9 + $0x120] sm:$0xff]
    %v2418 = vld [vmem:[%s9 + $0x128] sm:$0xff]
    %v2419 = vld [vmem:[%s9 + $0x130] sm:$0xff]
    %v2420 = vld [vmem:[%s9 + $0x138] sm:$0xff]
    %v2421 = vld [vmem:[%s9 + $0x140] sm:$0xff]
    %v2422 = vld [vmem:[%s9 + $0x148] sm:$0xff]
    %v2423 = vld [vmem:[%s9 + $0x150] sm:$0xff]
    %v2424 = vld [vmem:[%s9 + $0x158] sm:$0xff]
    %v2425 = vld [vmem:[%s9 + $0x160] sm:$0xff]
    %v2426 = vld [vmem:[%s9 + $0x168] sm:$0xff]
    %v2427 = vld [vmem:[%s9 + $0x170] sm:$0xff]
    %v2428 = vld [vmem:[%s9 + $0x178] sm:$0xff]
    %v2429 = vld [vmem:[%s9 + $0x180] sm:$0xff]
    %v2430 = vld [vmem:[%s9 + $0x188] sm:$0xff]
    %v2431 = vld [vmem:[%s9 + $0x190] sm:$0xff]
    %v2432 = vld [vmem:[%s9 + $0x198] sm:$0xff]
    %v2433 = vld [vmem:[%s9 + $0x1a0] sm:$0xff]
    %v2434 = vld [vmem:[%s9 + $0x1a8] sm:$0xff]
    %v2435 = vld [vmem:[%s9 + $0x1b0] sm:$0xff]
    %v2436 = vld [vmem:[%s9 + $0x1b8] sm:$0xff]
    %v2437 = vld [vmem:[%s9 + $0x1c0] sm:$0xff]
    %v2438 = vld [vmem:[%s9 + $0x1c8] sm:$0xff]
    %v2439 = vld [vmem:[%s9 + $0x1d0] sm:$0xff]
    %v2440 = vld [vmem:[%s9 + $0x1d8] sm:$0xff]
    %v2441 = vld [vmem:[%s9 + $0x1e0] sm:$0xff]
    %v2442 = vld [vmem:[%s9 + $0x1e8] sm:$0xff]
    %v2443 = vld [vmem:[%s9 + $0x1f0] sm:$0xff]
    %v2444 = vld [vmem:[%s9 + $0x1f8] sm:$0xff]
    %v2445 = vld [vmem:[%s9 + $0x200] sm:$0xff]
    %v2446 = vld [vmem:[%s9 + $0x208] sm:$0xff]
    %v2447 = vld [vmem:[%s9 + $0x210] sm:$0xff]
    %v2448 = vld [vmem:[%s9 + $0x218] sm:$0xff]
    %v2449 = vld [vmem:[%s9 + $0x220] sm:$0xff]
    %v2450 = vld [vmem:[%s9 + $0x228] sm:$0xff]
    %v2451 = vld [vmem:[%s9 + $0x230] sm:$0xff]
    %v2452 = vld [vmem:[%s9 + $0x238] sm:$0xff]
    %v2453 = vld [vmem:[%s9 + $0x240] sm:$0xff]
    %v2454 = vld [vmem:[%s9 + $0x248] sm:$0xff]
    %v2455 = vld [vmem:[%s9 + $0x250] sm:$0xff]
    %v2456 = vld [vmem:[%s9 + $0x258] sm:$0xff]
    %v2457 = vld [vmem:[%s9 + $0x260] sm:$0xff]
    %v2458 = vld [vmem:[%s9 + $0x268] sm:$0xff]
    %v2459 = vld [vmem:[%s9 + $0x270] sm:$0xff]
    %v2460 = vld [vmem:[%s9 + $0x278] sm:$0xff]
    %v2461 = vld [vmem:[%s10] sm:$0x3]
    %v2463 = vperm.slane %v2461, 0
    %v2464 = vperm.slane %v2461, 1
    %vm2467 = vcmask 523264
    %v2469 = vsel %vm2467, %v2380, 0
    %2471 = vmatpush.msra.mxu0 %v2411
    %2472 = vmatpush.msra.mxu0 %v2409
    %2473 = vmatpush.msra.mxu0 %v2407
    %2474 = vmatpush.msra.mxu0 %v2405
    %2475 = vmatpush.msra.mxu0 %v2403
    %2476 = vmatpush.msra.mxu0 %v2401
    %2477 = vmatpush.msra.mxu0 %v2399
    %2478 = vmatpush.msra.mxu0 %v2397
    %2479 = vmatpush.msra.mxu0 %v2395
    %2480 = vmatpush.msra.mxu0 %v2393
    %2481 = vmatpush.msra.mxu0 %v2391
    %2482 = vmatpush.msra.mxu0 %v2389
    %2483 = vmatpush.msra.mxu0 %v2387
    %2484 = vmatpush.msra.mxu0 %v2385
    %2485 = vmatpush.msra.mxu0 %v2383
    %2486 = vmatpush.msra.mxu0 %v2381
    %2487 = vmatmul.f32.gmra.mxu0 %v2378
    %v2488 = vpop.f32.mrf.mxu0
    %v2489 = vadd.f32 %v2463, %v2488
    %2490 = vdwg.mxu0
    %2491 = vmatpush.msra.mxu0 %v2443
    %2492 = vmatpush.msra.mxu0 %v2441
    %2493 = vmatpush.msra.mxu0 %v2439
    %2494 = vmatpush.msra.mxu0 %v2437
    %2495 = vmatpush.msra.mxu0 %v2435
    %2496 = vmatpush.msra.mxu0 %v2433
    %2497 = vmatpush.msra.mxu0 %v2431
    %2498 = vmatpush.msra.mxu0 %v2429
    %2499 = vmatpush.msra.mxu0 %v2427
    %2500 = vmatpush.msra.mxu0 %v2425
    %2501 = vmatpush.msra.mxu0 %v2423
    %2502 = vmatpush.msra.mxu0 %v2421
    %2503 = vmatpush.msra.mxu0 %v2419
    %2504 = vmatpush.msra.mxu0 %v2417
    %2505 = vmatpush.msra.mxu0 %v2415
    %2506 = vmatpush.msra.mxu0 %v2413
    %2507 = vmatmul.f32.gmra.mxu0 %v2379
    %v2508 = vpop.f32.mrf.mxu0
    %v2509 = vadd.f32 %v2489, %v2508
    %2510 = vdwg.mxu0
    %2511 = vmatpush.msra.mxu0 0.0
    %2512 = vmatpush.msra.mxu0 0.0
    %2513 = vmatpush.msra.mxu0 0.0
    %2514 = vmatpush.msra.mxu0 0.0
    %2515 = vmatpush.msra.mxu0 0.0
    %2516 = vmatpush.msra.mxu0 0.0
    %2517 = vmatpush.msra.mxu0 0.0
    %2518 = vmatpush.msra.mxu0 0.0
    %2519 = vmatpush.msra.mxu0 %v2459
    %2520 = vmatpush.msra.mxu0 %v2457
    %2521 = vmatpush.msra.mxu0 %v2455
    %2522 = vmatpush.msra.mxu0 %v2453
    %2523 = vmatpush.msra.mxu0 %v2451
    %2524 = vmatpush.msra.mxu0 %v2449
    %2525 = vmatpush.msra.mxu0 %v2447
    %2526 = vmatpush.msra.mxu0 %v2445
    %2527 = vmatmul.f32.gmra.mxu0 %v2469
    %v2528 = vpop.f32.mrf.mxu0
    %v2529 = vadd.f32 %v2509, %v2528
    %2530 = vdwg.mxu0
    %2531 = vmatpush.msra.mxu0 %v2412
    %2532 = vmatpush.msra.mxu0 %v2410
    %2533 = vmatpush.msra.mxu0 %v2408
    %2534 = vmatpush.msra.mxu0 %v2406
    %2535 = vmatpush.msra.mxu0 %v2404
    %2536 = vmatpush.msra.mxu0 %v2402
    %2537 = vmatpush.msra.mxu0 %v2400
    %2538 = vmatpush.msra.mxu0 %v2398
    %2539 = vmatpush.msra.mxu0 %v2396
    %2540 = vmatpush.msra.mxu0 %v2394
    %2541 = vmatpush.msra.mxu0 %v2392
    %2542 = vmatpush.msra.mxu0 %v2390
    %2543 = vmatpush.msra.mxu0 %v2388
    %2544 = vmatpush.msra.mxu0 %v2386
    %2545 = vmatpush.msra.mxu0 %v2384
    %2546 = vmatpush.msra.mxu0 %v2382
    %2547 = vmatmul.f32.gmra.mxu0 %v2378
    %v2548 = vpop.f32.mrf.mxu0
    %v2549 = vadd.f32 %v2464, %v2548
    %2550 = vdwg.mxu0
    %2551 = vmatpush.msra.mxu0 %v2444
    %2552 = vmatpush.msra.mxu0 %v2442
    %2553 = vmatpush.msra.mxu0 %v2440
    %2554 = vmatpush.msra.mxu0 %v2438
    %2555 = vmatpush.msra.mxu0 %v2436
    %2556 = vmatpush.msra.mxu0 %v2434
    %2557 = vmatpush.msra.mxu0 %v2432
    %2558 = vmatpush.msra.mxu0 %v2430
    %2559 = vmatpush.msra.mxu0 %v2428
    %2560 = vmatpush.msra.mxu0 %v2426
    %2561 = vmatpush.msra.mxu0 %v2424
    %2562 = vmatpush.msra.mxu0 %v2422
    %2563 = vmatpush.msra.mxu0 %v2420
    %2564 = vmatpush.msra.mxu0 %v2418
    %2565 = vmatpush.msra.mxu0 %v2416
    %2566 = vmatpush.msra.mxu0 %v2414
    %2567 = vmatmul.f32.gmra.mxu0 %v2379
    %v2568 = vpop.f32.mrf.mxu0
    %v2569 = vadd.f32 %v2549, %v2568
    %2570 = vdwg.mxu0
    %2571 = vmatpush.msra.mxu0 0.0
    %2572 = vmatpush.msra.mxu0 0.0
    %2573 = vmatpush.msra.mxu0 0.0
    %2574 = vmatpush.msra.mxu0 0.0
    %2575 = vmatpush.msra.mxu0 0.0
    %2576 = vmatpush.msra.mxu0 0.0
    %2577 = vmatpush.msra.mxu0 0.0
    %2578 = vmatpush.msra.mxu0 0.0
    %2579 = vmatpush.msra.mxu0 %v2460
    %2580 = vmatpush.msra.mxu0 %v2458
    %2581 = vmatpush.msra.mxu0 %v2456
    %2582 = vmatpush.msra.mxu0 %v2454
    %2583 = vmatpush.msra.mxu0 %v2452
    %2584 = vmatpush.msra.mxu0 %v2450
    %2585 = vmatpush.msra.mxu0 %v2448
    %2586 = vmatpush.msra.mxu0 %v2446
    %2587 = vmatmul.f32.gmra.mxu0 %v2469
    %v2588 = vpop.f32.mrf.mxu0
    %v2589 = vadd.f32 %v2569, %v2588
    %2590 = vdwg.mxu0
    %v2591 = vmax.f32 %v2529, 0.0
    %v2592 = vmax.f32 %v2589, 0.0
    %v2593 = vld [vmem:[%s11] sm:$0xff]
    %v2594 = vld [vmem:[%s11 + $0x8] sm:$0xff]
    %v2595 = vld [vmem:[%s11 + $0x10] sm:$0xff]
    %v2596 = vld [vmem:[%s11 + $0x18] sm:$0xff]
    %v2597 = vld [vmem:[%s11 + $0x20] sm:$0xff]
    %v2598 = vld [vmem:[%s11 + $0x28] sm:$0xff]
    %v2599 = vld [vmem:[%s11 + $0x30] sm:$0xff]
    %v2600 = vld [vmem:[%s11 + $0x38] sm:$0xff]
    %v2601 = vld [vmem:[%s11 + $0x40] sm:$0xff]
    %v2602 = vld [vmem:[%s11 + $0x48] sm:$0xff]
    %v2603 = vld [vmem:[%s11 + $0x50] sm:$0xff]
    %v2604 = vld [vmem:[%s11 + $0x58] sm:$0xff]
    %v2605 = vld [vmem:[%s11 + $0x60] sm:$0xff]
    %v2606 = vld [vmem:[%s11 + $0x68] sm:$0xff]
    %v2607 = vld [vmem:[%s11 + $0x70] sm:$0xff]
    %v2608 = vld [vmem:[%s11 + $0x78] sm:$0xff]
    %v2609 = vld [vmem:[%s11 + $0x80] sm:$0xff]
    %v2610 = vld [vmem:[%s11 + $0x88] sm:$0xff]
    %v2611 = vld [vmem:[%s11 + $0x90] sm:$0xff]
    %v2612 = vld [vmem:[%s11 + $0x98] sm:$0xff]
    %v2613 = vld [vmem:[%s12] sm:$0x1]
    %v2615 = vperm.slane %v2613, 0
    %v2618 = vsel %vm1281, %v2592, 0
    %2620 = vmatpush.msra.mxu0 %v2608
    %2621 = vmatpush.msra.mxu0 %v2607
    %2622 = vmatpush.msra.mxu0 %v2606
    %2623 = vmatpush.msra.mxu0 %v2605
    %2624 = vmatpush.msra.mxu0 %v2604
    %2625 = vmatpush.msra.mxu0 %v2603
    %2626 = vmatpush.msra.mxu0 %v2602
    %2627 = vmatpush.msra.mxu0 %v2601
    %2628 = vmatpush.msra.mxu0 %v2600
    %2629 = vmatpush.msra.mxu0 %v2599
    %2630 = vmatpush.msra.mxu0 %v2598
    %2631 = vmatpush.msra.mxu0 %v2597
    %2632 = vmatpush.msra.mxu0 %v2596
    %2633 = vmatpush.msra.mxu0 %v2595
    %2634 = vmatpush.msra.mxu0 %v2594
    %2635 = vmatpush.msra.mxu0 %v2593
    %2636 = vmatmul.f32.gmra.mxu0 %v2591
    %v2637 = vpop.f32.mrf.mxu0
    %v2638 = vadd.f32 %v2615, %v2637
    %2639 = vdwg.mxu0
    %2640 = vmatpush.msra.mxu0 0.0
    %2641 = vmatpush.msra.mxu0 0.0
    %2642 = vmatpush.msra.mxu0 0.0
    %2643 = vmatpush.msra.mxu0 0.0
    %2644 = vmatpush.msra.mxu0 0.0
    %2645 = vmatpush.msra.mxu0 0.0
    %2646 = vmatpush.msra.mxu0 0.0
    %2647 = vmatpush.msra.mxu0 0.0
    %2648 = vmatpush.msra.mxu0 0.0
    %2649 = vmatpush.msra.mxu0 0.0
    %2650 = vmatpush.msra.mxu0 0.0
    %2651 = vmatpush.msra.mxu0 0.0
    %2652 = vmatpush.msra.mxu0 %v2612
    %2653 = vmatpush.msra.mxu0 %v2611
    %2654 = vmatpush.msra.mxu0 %v2610
    %2655 = vmatpush.msra.mxu0 %v2609
    %2656 = vmatmul.f32.gmra.mxu0 %v2618
    %v2657 = vpop.f32.mrf.mxu0
    %v2658 = vadd.f32 %v2638, %v2657
    %2659 = vdwg.mxu0
    %v2660 = vmax.f32 %v2658, 0.0
    %v2661 = vld [vmem:[%s13] sm:$0xff]
    %v2662 = vld [vmem:[%s13 + $0x8] sm:$0xff]
    %v2663 = vld [vmem:[%s13 + $0x10] sm:$0xff]
    %v2664 = vld [vmem:[%s13 + $0x18] sm:$0xff]
    %v2665 = vld [vmem:[%s13 + $0x20] sm:$0xff]
    %v2666 = vld [vmem:[%s13 + $0x28] sm:$0xff]
    %v2667 = vld [vmem:[%s13 + $0x30] sm:$0xff]
    %v2668 = vld [vmem:[%s13 + $0x38] sm:$0xff]
    %v2669 = vld [vmem:[%s13 + $0x40] sm:$0xff]
    %v2670 = vld [vmem:[%s13 + $0x48] sm:$0xff]
    %v2671 = vld [vmem:[%s14] sm:$0x1]
    %v2673 = vperm.slane %v2671, 0
    %v2676 = vsel %vm1401, %v2660, 0
    %2678 = vmatpush.msra.mxu0 0.0
    %2679 = vmatpush.msra.mxu0 0.0
    %2680 = vmatpush.msra.mxu0 0.0
    %2681 = vmatpush.msra.mxu0 0.0
    %2682 = vmatpush.msra.mxu0 0.0
    %2683 = vmatpush.msra.mxu0 0.0
    %2684 = vmatpush.msra.mxu0 %v2670
    %2685 = vmatpush.msra.mxu0 %v2669
    %2686 = vmatpush.msra.mxu0 %v2668
    %2687 = vmatpush.msra.mxu0 %v2667
    %2688 = vmatpush.msra.mxu0 %v2666
    %2689 = vmatpush.msra.mxu0 %v2665
    %2690 = vmatpush.msra.mxu0 %v2664
    %2691 = vmatpush.msra.mxu0 %v2663
    %2692 = vmatpush.msra.mxu0 %v2662
    %2693 = vmatpush.msra.mxu0 %v2661
    %2694 = vmatmul.f32.gmra.mxu0 %v2676
    %v2695 = vpop.f32.mrf.mxu0
    %v2696 = vadd.f32 %v2673, %v2695
    %2697 = vdwg.mxu0
    %v2698 = vmax.f32 %v2696, 0.0
    %v2699 = vld [vmem:[%s15] sm:$0xff]
    %v2700 = vld [vmem:[%s15 + $0x8] sm:$0xff]
    %v2701 = vld [vmem:[%s15 + $0x10] sm:$0xff]
    %v2702 = vld [vmem:[%s15 + $0x18] sm:$0xff]
    %v2703 = vld [vmem:[%s15 + $0x20] sm:$0xff]
    %v2704 = vld [vmem:[%s16] sm:$0x1]
    %v2706 = vperm.slane %v2704, 0
    %vm2708 = vcmask 326656
    %v2710 = vsel %vm2708, %v2698, 0
    %2712 = vmatpush.msra.mxu0 0.0
    %2713 = vmatpush.msra.mxu0 0.0
    %2714 = vmatpush.msra.mxu0 0.0
    %2715 = vmatpush.msra.mxu0 0.0
    %2716 = vmatpush.msra.mxu0 0.0
    %2717 = vmatpush.msra.mxu0 0.0
    %2718 = vmatpush.msra.mxu0 0.0
    %2719 = vmatpush.msra.mxu0 0.0
    %2720 = vmatpush.msra.mxu0 0.0
    %2721 = vmatpush.msra.mxu0 0.0
    %2722 = vmatpush.msra.mxu0 0.0
    %2723 = vmatpush.msra.mxu0 %v2703
    %2724 = vmatpush.msra.mxu0 %v2702
    %2725 = vmatpush.msra.mxu0 %v2701
    %2726 = vmatpush.msra.mxu0 %v2700
    %2727 = vmatpush.msra.mxu0 %v2699
    %2728 = vmatmul.f32.gmra.mxu0 %v2710
    %v2729 = vpop.f32.mrf.mxu0
    %v2730 = vadd.f32 %v2706, %v2729
    %2731 = vdwg.mxu0
    %v2732 = vmax.f32 %v2730, 0.0
    %v2733 = vld [vmem:[%s17] sm:$0xff]
    %v2734 = vld [vmem:[%s17 + $0x8] sm:$0xff]
    %v2735 = vld [vmem:[%s17 + $0x10] sm:$0xf]
    %v2736 = vld [vmem:[%s18] sm:$0x1]
    %v2738 = vperm.slane %v2736, 0
    %vm2740 = vcmask 162816
    %v2742 = vsel %vm2740, %v2732, 0
    %v2745 = vsel %vm103, %v2735, 0
    %2747 = vmatpush.msra.mxu0 0.0
    %2748 = vmatpush.msra.mxu0 0.0
    %2749 = vmatpush.msra.mxu0 0.0
    %2750 = vmatpush.msra.mxu0 0.0
    %2751 = vmatpush.msra.mxu0 0.0
    %2752 = vmatpush.msra.mxu0 0.0
    %2753 = vmatpush.msra.mxu0 0.0
    %2754 = vmatpush.msra.mxu0 0.0
    %2755 = vmatpush.msra.mxu0 0.0
    %2756 = vmatpush.msra.mxu0 0.0
    %2757 = vmatpush.msra.mxu0 0.0
    %2758 = vmatpush.msra.mxu0 0.0
    %2759 = vmatpush.msra.mxu0 0.0
    %2760 = vmatpush.msra.mxu0 %v2745
    %2761 = vmatpush.msra.mxu0 %v2734
    %2762 = vmatpush.msra.mxu0 %v2733
    %2763 = vmatmul.f32.gmra.mxu0 %v2742
    %v2764 = vpop.f32.mrf.mxu0
    %v2765 = vadd.f32 %v2738, %v2764
    %2766 = vdwg.mxu0
    %vm2767 = vcmask 74752
    %2768 = vst.msk [vmem:[#allocation2] sm:$0x3] %vm2767, %v2765
    // Predicated region
    $region78: #{forward.1} parent=1 // pred_check
      _
    $region79: #{forward.1} parent=1 // pred_check_branch
      %2770 = sbr.rel (0) target = $region81
    $region80: #{forward.1} parent=1 // pred_region
      %2772 = vsyncadd [#allocation3], 0
      %s2774 = sshll.u32 [#allocation2], 4
      %s2775 = int_to_ptr.vmem [resolvable:$true] %s2774
      %s2776 = sshll.u32 %s19, 4
      %s2777 = int_to_ptr.hbm [resolvable:$true] %s2776
      %2779 = dma.vmem_to_hbm [thread:$0]  %s2775, 32, %s2777, [#allocation3]
    $region81: #{forward.1} parent=1 // pred_fallthru
      _
    // Predicated region
    $region82: #{forward.1} parent=1 // pred_check
      _
    $region83: #{forward.1} parent=1 // pred_check_branch
      %2781 = sbr.rel (0) target = $region85
    $region84: #{forward.1} parent=1 // pred_region
      %2783 = dma.done [#allocation3], 32
    $region85: #{forward.1} parent=1 // pred_fallthru
      _
    %2784 = vsyncpa [#allocation3], 1

</llo_original>
